<compile_context>
chip_gen: v6e
topology: v6e:2x2x1
jax: 0.10.0
libtpu: 0.0.40
codegen_flags: <defaults>
</compile_context>

<pallas_src>
import jax
import jax.numpy as jnp
from jax import lax
from jax.experimental import pallas as pl
from jax.experimental.pallas import tpu as pltpu


def _sig(v):
    # sigmoid(x) == 0.5 * tanh(0.5 * x) + 0.5  -> single EUP op
    return 0.5 * jnp.tanh(0.5 * v) + 0.5


def _lstm_forward_kernel(x_ref,        # (T*B, I)      time-major flattened input
                         wih1t_ref,    # (I, 4*H1)     layer-1 input weight, pre-transposed
                         b1_ref,       # (1, 4*H1)     layer-1 combined bias (b_ih + b_hh)
                         whh1t_ref,    # (H1, 4*H1)    layer-1 recurrent weight, pre-transposed
                         wih2t_ref,    # (H1, 4*H2)    layer-2 input weight, pre-transposed
                         whh2t_ref,    # (H2, 4*H2)    layer-2 recurrent weight, pre-transposed
                         b2_ref,       # (1, 4*H2)     layer-2 combined bias
                         wlin_ref,     # (T, H2, O)    linear weight, per-timestep layout
                         blin_ref,     # (1, O)        linear bias
                         out_ref):     # (B, O)
    TB = x_ref.shape[0]
    H1 = whh1t_ref.shape[0]
    H2 = whh2t_ref.shape[0]
    T = wlin_ref.shape[0]
    B = TB // T
    O = out_ref.shape[1]

    # ---- Hoisted, time-parallel layer-1 input projection (single MXU matmul) ----
    # Layer-1 bias folded in once here (one broadcast over (T*B, 4*H1)).
    gates1_x = jnp.dot(x_ref[...], wih1t_ref[...],
                       preferred_element_type=jnp.float32) + b1_ref[...]

    # Hoisted weight loads / broadcasts (nothing re-materialized per step).
    whh1_t = whh1t_ref[...]
    wih2_t = wih2t_ref[...]
    whh2_t = whh2t_ref[...]
    b2_b = jnp.broadcast_to(b2_ref[...], (B, 4 * H2))

    h1 = jnp.zeros((B, H1), jnp.float32)
    c1 = jnp.zeros((B, H1), jnp.float32)
    h2 = jnp.zeros((B, H2), jnp.float32)
    c2 = jnp.zeros((B, H2), jnp.float32)

    # Layer-2 recurrent contribution for step 0: h2_0 = 0, so it is just the bias.
    rec2 = b2_b
    # Logits accumulator starts at the linear bias; per-step contributions added below.
    logits = jnp.broadcast_to(blin_ref[...], (B, O)).astype(jnp.float32)

    # Fully specialized (static) time loop: every slice index is a compile-time constant.
    for t in range(T):
        # ---- layer 1: only the recurrent dot is on the serial path ----
        g1 = gates1_x[t * B:(t + 1) * B, :] + jnp.dot(
            h1, whh1_t, preferred_element_type=jnp.float32)
        i1 = _sig(g1[:, 0 * H1:1 * H1])
        f1 = _sig(g1[:, 1 * H1:2 * H1])
        gg1 = jnp.tanh(g1[:, 2 * H1:3 * H1])
        o1 = _sig(g1[:, 3 * H1:4 * H1])
        c1 = f1 * c1 + i1 * gg1
        h1 = o1 * jnp.tanh(c1)

        # ---- layer 2: recurrent part (rec2) was prepared last step, so only one
        #      dot + add remain after h1_t becomes available ----
        g2 = jnp.dot(h1, wih2_t, preferred_element_type=jnp.float32) + rec2
        i2 = _sig(g2[:, 0 * H2:1 * H2])
        f2 = _sig(g2[:, 1 * H2:2 * H2])
        gg2 = jnp.tanh(g2[:, 2 * H2:3 * H2])
        o2 = _sig(g2[:, 3 * H2:4 * H2])
        c2 = f2 * c2 + i2 * gg2
        h2 = o2 * jnp.tanh(c2)

        # Precompute next step's layer-2 recurrent term (overlaps with next layer-1 dot).
        if t + 1 < T:
            rec2 = jnp.dot(h2, whh2_t, preferred_element_type=jnp.float32) + b2_b

        # ---- incremental Linear accumulation (off the recurrence critical path) ----
        logits = logits + jnp.dot(h2, wlin_ref[t],
                                  preferred_element_type=jnp.float32)

    out_ref[...] = _sig(logits)


@jax.jit
def lstm_forward(x, params):
    """x: (B, T, I) float32 (batch_first, like PyTorch). Returns (B, output_size)."""
    B, T, I = x.shape
    wih1, whh1, b1 = params["wih1"], params["whh1"], params["b1"]
    wih2, whh2, b2 = params["wih2"], params["whh2"], params["b2"]
    wlin, blin = params["wlin"], params["blin"]

    H1 = whh1.shape[1]
    H2 = whh2.shape[1]
    O = wlin.shape[0]

    # Host-side (XLA) weight / input preparation — done once, outside the kernel.
    x_flat = jnp.transpose(x, (1, 0, 2)).reshape(T * B, I).astype(jnp.float32)  # time-major
    wih1_t = wih1.T                                              # (I, 4*H1)
    whh1_t = whh1.T                                              # (H1, 4*H1)
    wih2_t = wih2.T                                              # (H1, 4*H2)
    whh2_t = whh2.T                                              # (H2, 4*H2)
    # PyTorch flatten order of lstm_out_1.reshape(B, -1) is (t, h):
    wlin_r = jnp.transpose(wlin.reshape(O, T, H2), (1, 2, 0))    # (T, H2, O)

    vmem = pl.BlockSpec(memory_space=pltpu.MemorySpace.VMEM)
    out = pl.pallas_call(
        _lstm_forward_kernel,
        out_shape=jax.ShapeDtypeStruct((B, O), jnp.float32),
        in_specs=[vmem] * 9,
        out_specs=vmem,
    )(x_flat, wih1_t, b1, whh1_t, wih2_t, whh2_t, b2, wlin_r, blin)
    return out


def init_params(key, input_size, hidden_dim, seq_len, output_size):
    """Deterministic init mimicking PyTorch's U(-1/sqrt(H), 1/sqrt(H)) scheme."""
    H1, H2 = hidden_dim, 2
    keys = jax.random.split(key, 10)
    k1 = 1.0 / jnp.sqrt(H1)
    k2 = 1.0 / jnp.sqrt(H2)
    klin = 1.0 / jnp.sqrt(seq_len * 2)

    def u(k, shape, scale):
        return jax.random.uniform(k, shape, jnp.float32, -scale, scale)

    params = {
        "wih1": u(keys[0], (4 * H1, input_size), k1),
        "whh1": u(keys[1], (4 * H1, H1), k1),
        # combined b_ih + b_hh
        "b1": (u(keys[2], (1, 4 * H1), k1) + u(keys[3], (1, 4 * H1), k1)),
        "wih2": u(keys[4], (4 * H2, H1), k2),
        "whh2": u(keys[5], (4 * H2, H2), k2),
        "b2": (u(keys[6], (1, 4 * H2), k2) + u(keys[7], (1, 4 * H2), k2)),
        "wlin": u(keys[8], (output_size, seq_len * 2), klin),
        "blin": u(keys[9], (1, output_size), klin),
    }
    return params


def reference_forward(x, params):
    """Pure-JAX reference matching PyTorch nn.LSTM semantics, for a sanity check."""
    B, T, I = x.shape
    wih1, whh1, b1 = params["wih1"], params["whh1"], params["b1"]
    wih2, whh2, b2 = params["wih2"], params["whh2"], params["b2"]
    wlin, blin = params["wlin"], params["blin"]
    H1 = whh1.shape[1]
    H2 = whh2.shape[1]

    def run_layer(seq, wih, whh, b, H):
        def cell(carry, x_t):
            h, c = carry
            g = x_t @ wih.T + h @ whh.T + b[0]
            i = jax.nn.sigmoid(g[:, 0 * H:1 * H])
            f = jax.nn.sigmoid(g[:, 1 * H:2 * H])
            gg = jnp.tanh(g[:, 2 * H:3 * H])
            o = jax.nn.sigmoid(g[:, 3 * H:4 * H])
            c = f * c + i * gg
            h = o * jnp.tanh(c)
            return (h, c), h
        init = (jnp.zeros((B, H), jnp.float32), jnp.zeros((B, H), jnp.float32))
        _, hs = lax.scan(cell, init, jnp.transpose(seq, (1, 0, 2)))
        return jnp.transpose(hs, (1, 0, 2))

    out1 = run_layer(x, wih1, whh1, b1, H1)
    out2 = run_layer(out1, wih2, whh2, b2, H2)
    flat = out2.reshape(B, -1)
    return jax.nn.sigmoid(flat @ wlin.T + blin[0])


if __name__ == "__main__":
    # Small shapes consistent with the module's forward contract
    # (linear expects seq_len*2 features, so seq_len here matches T).
    B, T, I = 2, 8, 48
    hidden_dim, output_size = 16, 2

    key = jax.random.PRNGKey(0)
    kx, kp = jax.random.split(key)
    x = jax.random.normal(kx, (B, T, I), jnp.float32)
    params = init_params(kp, I, hidden_dim, T, output_size)

    out = lstm_forward(x, params)
    out = jax.block_until_ready(out)

    ref = reference_forward(x, params)
    assert out.shape == (B, output_size)
    assert jnp.allclose(out, ref, atol=1e-4, rtol=1e-4), (out, ref)

    print("KERNEL_OK")
</pallas_src>

<mosaic_0001>
module attributes {stable_mosaic.version = 11 : i64} {
  func.func @_lstm_forward_kernel(%arg0: memref<16x48xf32, #tpu.memory_space<vmem>>, %arg1: memref<48x64xf32, #tpu.memory_space<vmem>>, %arg2: memref<1x64xf32, #tpu.memory_space<vmem>>, %arg3: memref<16x64xf32, #tpu.memory_space<vmem>>, %arg4: memref<16x8xf32, #tpu.memory_space<vmem>>, %arg5: memref<2x8xf32, #tpu.memory_space<vmem>>, %arg6: memref<1x8xf32, #tpu.memory_space<vmem>>, %arg7: memref<8x2x2xf32, #tpu.memory_space<vmem>>, %arg8: memref<1x2xf32, #tpu.memory_space<vmem>>, %arg9: memref<2x2xf32, #tpu.memory_space<vmem>>) attributes {dimension_semantics = [], scalar_prefetch = 0 : i64, scratch_operands = 0 : i64, tpu.core_type = #tpu.core_type<tc>} {
    %c0 = arith.constant 0 : index
    %c0_0 = arith.constant 0 : index
    %0 = vector.load %arg0[%c0, %c0_0] : memref<16x48xf32, #tpu.memory_space<vmem>>, vector<16x48xf32>
    %c0_1 = arith.constant 0 : index
    %c0_2 = arith.constant 0 : index
    %1 = vector.load %arg1[%c0_1, %c0_2] : memref<48x64xf32, #tpu.memory_space<vmem>>, vector<48x64xf32>
    %cst = arith.constant dense<0.000000e+00> : vector<16x64xf32>
    %2 = tpu.matmul %0, %1, %cst {dimension_numbers = #tpu.dot_dimension_numbers<[1], [0], [0], [1], [0, 0, 1, 1], [], []>} : vector<16x48xf32>, vector<48x64xf32>, vector<16x64xf32> -> vector<16x64xf32>
    %c0_3 = arith.constant 0 : index
    %c0_4 = arith.constant 0 : index
    %3 = vector.load %arg2[%c0_3, %c0_4] : memref<1x64xf32, #tpu.memory_space<vmem>>, vector<1x64xf32>
    %4 = vector.broadcast %3 : vector<1x64xf32> to vector<16x64xf32>
    %5 = arith.addf %2, %4 : vector<16x64xf32>
    %c0_5 = arith.constant 0 : index
    %c0_6 = arith.constant 0 : index
    %6 = vector.load %arg3[%c0_5, %c0_6] : memref<16x64xf32, #tpu.memory_space<vmem>>, vector<16x64xf32>
    %c0_7 = arith.constant 0 : index
    %c0_8 = arith.constant 0 : index
    %7 = vector.load %arg4[%c0_7, %c0_8] : memref<16x8xf32, #tpu.memory_space<vmem>>, vector<16x8xf32>
    %c0_9 = arith.constant 0 : index
    %c0_10 = arith.constant 0 : index
    %8 = vector.load %arg5[%c0_9, %c0_10] : memref<2x8xf32, #tpu.memory_space<vmem>>, vector<2x8xf32>
    %c0_11 = arith.constant 0 : index
    %c0_12 = arith.constant 0 : index
    %9 = vector.load %arg6[%c0_11, %c0_12] : memref<1x8xf32, #tpu.memory_space<vmem>>, vector<1x8xf32>
    %10 = vector.shape_cast %9 : vector<1x8xf32> to vector<1x8xf32>
    %11 = vector.broadcast %10 : vector<1x8xf32> to vector<2x8xf32>
    %cst_13 = arith.constant 0.000000e+00 : f32
    %12 = vector.broadcast %cst_13 : f32 to vector<2x16xf32>
    %cst_14 = arith.constant 0.000000e+00 : f32
    %13 = vector.broadcast %cst_14 : f32 to vector<2x16xf32>
    %cst_15 = arith.constant 0.000000e+00 : f32
    %14 = vector.broadcast %cst_15 : f32 to vector<2x2xf32>
    %c0_16 = arith.constant 0 : index
    %c0_17 = arith.constant 0 : index
    %15 = vector.load %arg8[%c0_16, %c0_17] : memref<1x2xf32, #tpu.memory_space<vmem>>, vector<1x2xf32>
    %16 = vector.shape_cast %15 : vector<1x2xf32> to vector<1x2xf32>
    %17 = vector.broadcast %16 : vector<1x2xf32> to vector<2x2xf32>
    %18 = vector.extract_strided_slice %5 {offsets = [0, 0], sizes = [2, 64], strides = [1, 1]} : vector<16x64xf32> to vector<2x64xf32>
    %cst_18 = arith.constant dense<0.000000e+00> : vector<2x64xf32>
    %19 = tpu.matmul %12, %6, %cst_18 {dimension_numbers = #tpu.dot_dimension_numbers<[1], [0], [0], [1], [0, 0, 1, 1], [], []>} : vector<2x16xf32>, vector<16x64xf32>, vector<2x64xf32> -> vector<2x64xf32>
    %20 = arith.addf %18, %19 : vector<2x64xf32>
    %21 = vector.extract_strided_slice %20 {offsets = [0, 0], sizes = [2, 16], strides = [1, 1]} : vector<2x64xf32> to vector<2x16xf32>
    %cst_19 = arith.constant 5.000000e-01 : f32
    %22 = vector.broadcast %cst_19 : f32 to vector<2x16xf32>
    %23 = arith.mulf %22, %21 : vector<2x16xf32>
    %24 = math.tanh %23 : vector<2x16xf32>
    %cst_20 = arith.constant 5.000000e-01 : f32
    %25 = vector.broadcast %cst_20 : f32 to vector<2x16xf32>
    %26 = arith.mulf %25, %24 : vector<2x16xf32>
    %cst_21 = arith.constant 5.000000e-01 : f32
    %27 = vector.broadcast %cst_21 : f32 to vector<2x16xf32>
    %28 = arith.addf %26, %27 : vector<2x16xf32>
    %29 = vector.extract_strided_slice %20 {offsets = [0, 16], sizes = [2, 16], strides = [1, 1]} : vector<2x64xf32> to vector<2x16xf32>
    %cst_22 = arith.constant 5.000000e-01 : f32
    %30 = vector.broadcast %cst_22 : f32 to vector<2x16xf32>
    %31 = arith.mulf %30, %29 : vector<2x16xf32>
    %32 = math.tanh %31 : vector<2x16xf32>
    %cst_23 = arith.constant 5.000000e-01 : f32
    %33 = vector.broadcast %cst_23 : f32 to vector<2x16xf32>
    %34 = arith.mulf %33, %32 : vector<2x16xf32>
    %cst_24 = arith.constant 5.000000e-01 : f32
    %35 = vector.broadcast %cst_24 : f32 to vector<2x16xf32>
    %36 = arith.addf %34, %35 : vector<2x16xf32>
    %37 = vector.extract_strided_slice %20 {offsets = [0, 32], sizes = [2, 16], strides = [1, 1]} : vector<2x64xf32> to vector<2x16xf32>
    %38 = math.tanh %37 : vector<2x16xf32>
    %39 = vector.extract_strided_slice %20 {offsets = [0, 48], sizes = [2, 16], strides = [1, 1]} : vector<2x64xf32> to vector<2x16xf32>
    %cst_25 = arith.constant 5.000000e-01 : f32
    %40 = vector.broadcast %cst_25 : f32 to vector<2x16xf32>
    %41 = arith.mulf %40, %39 : vector<2x16xf32>
    %42 = math.tanh %41 : vector<2x16xf32>
    %cst_26 = arith.constant 5.000000e-01 : f32
    %43 = vector.broadcast %cst_26 : f32 to vector<2x16xf32>
    %44 = arith.mulf %43, %42 : vector<2x16xf32>
    %cst_27 = arith.constant 5.000000e-01 : f32
    %45 = vector.broadcast %cst_27 : f32 to vector<2x16xf32>
    %46 = arith.addf %44, %45 : vector<2x16xf32>
    %47 = arith.mulf %36, %13 : vector<2x16xf32>
    %48 = arith.mulf %28, %38 : vector<2x16xf32>
    %49 = arith.addf %47, %48 : vector<2x16xf32>
    %50 = math.tanh %49 : vector<2x16xf32>
    %51 = arith.mulf %46, %50 : vector<2x16xf32>
    %cst_28 = arith.constant dense<0.000000e+00> : vector<2x8xf32>
    %52 = tpu.matmul %51, %7, %cst_28 {dimension_numbers = #tpu.dot_dimension_numbers<[1], [0], [0], [1], [0, 0, 1, 1], [], []>} : vector<2x16xf32>, vector<16x8xf32>, vector<2x8xf32> -> vector<2x8xf32>
    %53 = arith.addf %52, %11 : vector<2x8xf32>
    %54 = vector.extract_strided_slice %53 {offsets = [0, 0], sizes = [2, 2], strides = [1, 1]} : vector<2x8xf32> to vector<2x2xf32>
    %cst_29 = arith.constant 5.000000e-01 : f32
    %55 = vector.broadcast %cst_29 : f32 to vector<2x2xf32>
    %56 = arith.mulf %55, %54 : vector<2x2xf32>
    %57 = math.tanh %56 : vector<2x2xf32>
    %cst_30 = arith.constant 5.000000e-01 : f32
    %58 = vector.broadcast %cst_30 : f32 to vector<2x2xf32>
    %59 = arith.mulf %58, %57 : vector<2x2xf32>
    %cst_31 = arith.constant 5.000000e-01 : f32
    %60 = vector.broadcast %cst_31 : f32 to vector<2x2xf32>
    %61 = arith.addf %59, %60 : vector<2x2xf32>
    %62 = vector.extract_strided_slice %53 {offsets = [0, 2], sizes = [2, 2], strides = [1, 1]} : vector<2x8xf32> to vector<2x2xf32>
    %cst_32 = arith.constant 5.000000e-01 : f32
    %63 = vector.broadcast %cst_32 : f32 to vector<2x2xf32>
    %64 = arith.mulf %63, %62 : vector<2x2xf32>
    %65 = math.tanh %64 : vector<2x2xf32>
    %cst_33 = arith.constant 5.000000e-01 : f32
    %66 = vector.broadcast %cst_33 : f32 to vector<2x2xf32>
    %67 = arith.mulf %66, %65 : vector<2x2xf32>
    %cst_34 = arith.constant 5.000000e-01 : f32
    %68 = vector.broadcast %cst_34 : f32 to vector<2x2xf32>
    %69 = arith.addf %67, %68 : vector<2x2xf32>
    %70 = vector.extract_strided_slice %53 {offsets = [0, 4], sizes = [2, 2], strides = [1, 1]} : vector<2x8xf32> to vector<2x2xf32>
    %71 = math.tanh %70 : vector<2x2xf32>
    %72 = vector.extract_strided_slice %53 {offsets = [0, 6], sizes = [2, 2], strides = [1, 1]} : vector<2x8xf32> to vector<2x2xf32>
    %cst_35 = arith.constant 5.000000e-01 : f32
    %73 = vector.broadcast %cst_35 : f32 to vector<2x2xf32>
    %74 = arith.mulf %73, %72 : vector<2x2xf32>
    %75 = math.tanh %74 : vector<2x2xf32>
    %cst_36 = arith.constant 5.000000e-01 : f32
    %76 = vector.broadcast %cst_36 : f32 to vector<2x2xf32>
    %77 = arith.mulf %76, %75 : vector<2x2xf32>
    %cst_37 = arith.constant 5.000000e-01 : f32
    %78 = vector.broadcast %cst_37 : f32 to vector<2x2xf32>
    %79 = arith.addf %77, %78 : vector<2x2xf32>
    %80 = arith.mulf %69, %14 : vector<2x2xf32>
    %81 = arith.mulf %61, %71 : vector<2x2xf32>
    %82 = arith.addf %80, %81 : vector<2x2xf32>
    %83 = math.tanh %82 : vector<2x2xf32>
    %84 = arith.mulf %79, %83 : vector<2x2xf32>
    %cst_38 = arith.constant dense<0.000000e+00> : vector<2x8xf32>
    %85 = tpu.matmul %84, %8, %cst_38 {dimension_numbers = #tpu.dot_dimension_numbers<[1], [0], [0], [1], [0, 0, 1, 1], [], []>} : vector<2x2xf32>, vector<2x8xf32>, vector<2x8xf32> -> vector<2x8xf32>
    %86 = arith.addf %85, %11 : vector<2x8xf32>
    %c0_39 = arith.constant 0 : index
    %c0_40 = arith.constant 0 : index
    %c0_41 = arith.constant 0 : index
    %87 = vector.load %arg7[%c0_39, %c0_40, %c0_41] : memref<8x2x2xf32, #tpu.memory_space<vmem>>, vector<1x2x2xf32>
    %88 = vector.shape_cast %87 : vector<1x2x2xf32> to vector<2x2xf32>
    %cst_42 = arith.constant dense<0.000000e+00> : vector<2x2xf32>
    %89 = tpu.matmul %84, %88, %cst_42 {dimension_numbers = #tpu.dot_dimension_numbers<[1], [0], [0], [1], [0, 0, 1, 1], [], []>} : vector<2x2xf32>, vector<2x2xf32>, vector<2x2xf32> -> vector<2x2xf32>
    %90 = arith.addf %17, %89 : vector<2x2xf32>
    %91 = vector.extract_strided_slice %5 {offsets = [2, 0], sizes = [2, 64], strides = [1, 1]} : vector<16x64xf32> to vector<2x64xf32>
    %cst_43 = arith.constant dense<0.000000e+00> : vector<2x64xf32>
    %92 = tpu.matmul %51, %6, %cst_43 {dimension_numbers = #tpu.dot_dimension_numbers<[1], [0], [0], [1], [0, 0, 1, 1], [], []>} : vector<2x16xf32>, vector<16x64xf32>, vector<2x64xf32> -> vector<2x64xf32>
    %93 = arith.addf %91, %92 : vector<2x64xf32>
    %94 = vector.extract_strided_slice %93 {offsets = [0, 0], sizes = [2, 16], strides = [1, 1]} : vector<2x64xf32> to vector<2x16xf32>
    %cst_44 = arith.constant 5.000000e-01 : f32
    %95 = vector.broadcast %cst_44 : f32 to vector<2x16xf32>
    %96 = arith.mulf %95, %94 : vector<2x16xf32>
    %97 = math.tanh %96 : vector<2x16xf32>
    %cst_45 = arith.constant 5.000000e-01 : f32
    %98 = vector.broadcast %cst_45 : f32 to vector<2x16xf32>
    %99 = arith.mulf %98, %97 : vector<2x16xf32>
    %cst_46 = arith.constant 5.000000e-01 : f32
    %100 = vector.broadcast %cst_46 : f32 to vector<2x16xf32>
    %101 = arith.addf %99, %100 : vector<2x16xf32>
    %102 = vector.extract_strided_slice %93 {offsets = [0, 16], sizes = [2, 16], strides = [1, 1]} : vector<2x64xf32> to vector<2x16xf32>
    %cst_47 = arith.constant 5.000000e-01 : f32
    %103 = vector.broadcast %cst_47 : f32 to vector<2x16xf32>
    %104 = arith.mulf %103, %102 : vector<2x16xf32>
    %105 = math.tanh %104 : vector<2x16xf32>
    %cst_48 = arith.constant 5.000000e-01 : f32
    %106 = vector.broadcast %cst_48 : f32 to vector<2x16xf32>
    %107 = arith.mulf %106, %105 : vector<2x16xf32>
    %cst_49 = arith.constant 5.000000e-01 : f32
    %108 = vector.broadcast %cst_49 : f32 to vector<2x16xf32>
    %109 = arith.addf %107, %108 : vector<2x16xf32>
    %110 = vector.extract_strided_slice %93 {offsets = [0, 32], sizes = [2, 16], strides = [1, 1]} : vector<2x64xf32> to vector<2x16xf32>
    %111 = math.tanh %110 : vector<2x16xf32>
    %112 = vector.extract_strided_slice %93 {offsets = [0, 48], sizes = [2, 16], strides = [1, 1]} : vector<2x64xf32> to vector<2x16xf32>
    %cst_50 = arith.constant 5.000000e-01 : f32
    %113 = vector.broadcast %cst_50 : f32 to vector<2x16xf32>
    %114 = arith.mulf %113, %112 : vector<2x16xf32>
    %115 = math.tanh %114 : vector<2x16xf32>
    %cst_51 = arith.constant 5.000000e-01 : f32
    %116 = vector.broadcast %cst_51 : f32 to vector<2x16xf32>
    %117 = arith.mulf %116, %115 : vector<2x16xf32>
    %cst_52 = arith.constant 5.000000e-01 : f32
    %118 = vector.broadcast %cst_52 : f32 to vector<2x16xf32>
    %119 = arith.addf %117, %118 : vector<2x16xf32>
    %120 = arith.mulf %109, %49 : vector<2x16xf32>
    %121 = arith.mulf %101, %111 : vector<2x16xf32>
    %122 = arith.addf %120, %121 : vector<2x16xf32>
    %123 = math.tanh %122 : vector<2x16xf32>
    %124 = arith.mulf %119, %123 : vector<2x16xf32>
    %cst_53 = arith.constant dense<0.000000e+00> : vector<2x8xf32>
    %125 = tpu.matmul %124, %7, %cst_53 {dimension_numbers = #tpu.dot_dimension_numbers<[1], [0], [0], [1], [0, 0, 1, 1], [], []>} : vector<2x16xf32>, vector<16x8xf32>, vector<2x8xf32> -> vector<2x8xf32>
    %126 = arith.addf %125, %86 : vector<2x8xf32>
    %127 = vector.extract_strided_slice %126 {offsets = [0, 0], sizes = [2, 2], strides = [1, 1]} : vector<2x8xf32> to vector<2x2xf32>
    %cst_54 = arith.constant 5.000000e-01 : f32
    %128 = vector.broadcast %cst_54 : f32 to vector<2x2xf32>
    %129 = arith.mulf %128, %127 : vector<2x2xf32>
    %130 = math.tanh %129 : vector<2x2xf32>
    %cst_55 = arith.constant 5.000000e-01 : f32
    %131 = vector.broadcast %cst_55 : f32 to vector<2x2xf32>
    %132 = arith.mulf %131, %130 : vector<2x2xf32>
    %cst_56 = arith.constant 5.000000e-01 : f32
    %133 = vector.broadcast %cst_56 : f32 to vector<2x2xf32>
    %134 = arith.addf %132, %133 : vector<2x2xf32>
    %135 = vector.extract_strided_slice %126 {offsets = [0, 2], sizes = [2, 2], strides = [1, 1]} : vector<2x8xf32> to vector<2x2xf32>
    %cst_57 = arith.constant 5.000000e-01 : f32
    %136 = vector.broadcast %cst_57 : f32 to vector<2x2xf32>
    %137 = arith.mulf %136, %135 : vector<2x2xf32>
    %138 = math.tanh %137 : vector<2x2xf32>
    %cst_58 = arith.constant 5.000000e-01 : f32
    %139 = vector.broadcast %cst_58 : f32 to vector<2x2xf32>
    %140 = arith.mulf %139, %138 : vector<2x2xf32>
    %cst_59 = arith.constant 5.000000e-01 : f32
    %141 = vector.broadcast %cst_59 : f32 to vector<2x2xf32>
    %142 = arith.addf %140, %141 : vector<2x2xf32>
    %143 = vector.extract_strided_slice %126 {offsets = [0, 4], sizes = [2, 2], strides = [1, 1]} : vector<2x8xf32> to vector<2x2xf32>
    %144 = math.tanh %143 : vector<2x2xf32>
    %145 = vector.extract_strided_slice %126 {offsets = [0, 6], sizes = [2, 2], strides = [1, 1]} : vector<2x8xf32> to vector<2x2xf32>
    %cst_60 = arith.constant 5.000000e-01 : f32
    %146 = vector.broadcast %cst_60 : f32 to vector<2x2xf32>
    %147 = arith.mulf %146, %145 : vector<2x2xf32>
    %148 = math.tanh %147 : vector<2x2xf32>
    %cst_61 = arith.constant 5.000000e-01 : f32
    %149 = vector.broadcast %cst_61 : f32 to vector<2x2xf32>
    %150 = arith.mulf %149, %148 : vector<2x2xf32>
    %cst_62 = arith.constant 5.000000e-01 : f32
    %151 = vector.broadcast %cst_62 : f32 to vector<2x2xf32>
    %152 = arith.addf %150, %151 : vector<2x2xf32>
    %153 = arith.mulf %142, %82 : vector<2x2xf32>
    %154 = arith.mulf %134, %144 : vector<2x2xf32>
    %155 = arith.addf %153, %154 : vector<2x2xf32>
    %156 = math.tanh %155 : vector<2x2xf32>
    %157 = arith.mulf %152, %156 : vector<2x2xf32>
    %cst_63 = arith.constant dense<0.000000e+00> : vector<2x8xf32>
    %158 = tpu.matmul %157, %8, %cst_63 {dimension_numbers = #tpu.dot_dimension_numbers<[1], [0], [0], [1], [0, 0, 1, 1], [], []>} : vector<2x2xf32>, vector<2x8xf32>, vector<2x8xf32> -> vector<2x8xf32>
    %159 = arith.addf %158, %11 : vector<2x8xf32>
    %c1 = arith.constant 1 : index
    %c0_64 = arith.constant 0 : index
    %c0_65 = arith.constant 0 : index
    %160 = vector.load %arg7[%c1, %c0_64, %c0_65] : memref<8x2x2xf32, #tpu.memory_space<vmem>>, vector<1x2x2xf32>
    %161 = vector.shape_cast %160 : vector<1x2x2xf32> to vector<2x2xf32>
    %cst_66 = arith.constant dense<0.000000e+00> : vector<2x2xf32>
    %162 = tpu.matmul %157, %161, %cst_66 {dimension_numbers = #tpu.dot_dimension_numbers<[1], [0], [0], [1], [0, 0, 1, 1], [], []>} : vector<2x2xf32>, vector<2x2xf32>, vector<2x2xf32> -> vector<2x2xf32>
    %163 = arith.addf %90, %162 : vector<2x2xf32>
    %164 = vector.extract_strided_slice %5 {offsets = [4, 0], sizes = [2, 64], strides = [1, 1]} : vector<16x64xf32> to vector<2x64xf32>
    %cst_67 = arith.constant dense<0.000000e+00> : vector<2x64xf32>
    %165 = tpu.matmul %124, %6, %cst_67 {dimension_numbers = #tpu.dot_dimension_numbers<[1], [0], [0], [1], [0, 0, 1, 1], [], []>} : vector<2x16xf32>, vector<16x64xf32>, vector<2x64xf32> -> vector<2x64xf32>
    %166 = arith.addf %164, %165 : vector<2x64xf32>
    %167 = vector.extract_strided_slice %166 {offsets = [0, 0], sizes = [2, 16], strides = [1, 1]} : vector<2x64xf32> to vector<2x16xf32>
    %cst_68 = arith.constant 5.000000e-01 : f32
    %168 = vector.broadcast %cst_68 : f32 to vector<2x16xf32>
    %169 = arith.mulf %168, %167 : vector<2x16xf32>
    %170 = math.tanh %169 : vector<2x16xf32>
    %cst_69 = arith.constant 5.000000e-01 : f32
    %171 = vector.broadcast %cst_69 : f32 to vector<2x16xf32>
    %172 = arith.mulf %171, %170 : vector<2x16xf32>
    %cst_70 = arith.constant 5.000000e-01 : f32
    %173 = vector.broadcast %cst_70 : f32 to vector<2x16xf32>
    %174 = arith.addf %172, %173 : vector<2x16xf32>
    %175 = vector.extract_strided_slice %166 {offsets = [0, 16], sizes = [2, 16], strides = [1, 1]} : vector<2x64xf32> to vector<2x16xf32>
    %cst_71 = arith.constant 5.000000e-01 : f32
    %176 = vector.broadcast %cst_71 : f32 to vector<2x16xf32>
    %177 = arith.mulf %176, %175 : vector<2x16xf32>
    %178 = math.tanh %177 : vector<2x16xf32>
    %cst_72 = arith.constant 5.000000e-01 : f32
    %179 = vector.broadcast %cst_72 : f32 to vector<2x16xf32>
    %180 = arith.mulf %179, %178 : vector<2x16xf32>
    %cst_73 = arith.constant 5.000000e-01 : f32
    %181 = vector.broadcast %cst_73 : f32 to vector<2x16xf32>
    %182 = arith.addf %180, %181 : vector<2x16xf32>
    %183 = vector.extract_strided_slice %166 {offsets = [0, 32], sizes = [2, 16], strides = [1, 1]} : vector<2x64xf32> to vector<2x16xf32>
    %184 = math.tanh %183 : vector<2x16xf32>
    %185 = vector.extract_strided_slice %166 {offsets = [0, 48], sizes = [2, 16], strides = [1, 1]} : vector<2x64xf32> to vector<2x16xf32>
    %cst_74 = arith.constant 5.000000e-01 : f32
    %186 = vector.broadcast %cst_74 : f32 to vector<2x16xf32>
    %187 = arith.mulf %186, %185 : vector<2x16xf32>
    %188 = math.tanh %187 : vector<2x16xf32>
    %cst_75 = arith.constant 5.000000e-01 : f32
    %189 = vector.broadcast %cst_75 : f32 to vector<2x16xf32>
    %190 = arith.mulf %189, %188 : vector<2x16xf32>
    %cst_76 = arith.constant 5.000000e-01 : f32
    %191 = vector.broadcast %cst_76 : f32 to vector<2x16xf32>
    %192 = arith.addf %190, %191 : vector<2x16xf32>
    %193 = arith.mulf %182, %122 : vector<2x16xf32>
    %194 = arith.mulf %174, %184 : vector<2x16xf32>
    %195 = arith.addf %193, %194 : vector<2x16xf32>
    %196 = math.tanh %195 : vector<2x16xf32>
    %197 = arith.mulf %192, %196 : vector<2x16xf32>
    %cst_77 = arith.constant dense<0.000000e+00> : vector<2x8xf32>
    %198 = tpu.matmul %197, %7, %cst_77 {dimension_numbers = #tpu.dot_dimension_numbers<[1], [0], [0], [1], [0, 0, 1, 1], [], []>} : vector<2x16xf32>, vector<16x8xf32>, vector<2x8xf32> -> vector<2x8xf32>
    %199 = arith.addf %198, %159 : vector<2x8xf32>
    %200 = vector.extract_strided_slice %199 {offsets = [0, 0], sizes = [2, 2], strides = [1, 1]} : vector<2x8xf32> to vector<2x2xf32>
    %cst_78 = arith.constant 5.000000e-01 : f32
    %201 = vector.broadcast %cst_78 : f32 to vector<2x2xf32>
    %202 = arith.mulf %201, %200 : vector<2x2xf32>
    %203 = math.tanh %202 : vector<2x2xf32>
    %cst_79 = arith.constant 5.000000e-01 : f32
    %204 = vector.broadcast %cst_79 : f32 to vector<2x2xf32>
    %205 = arith.mulf %204, %203 : vector<2x2xf32>
    %cst_80 = arith.constant 5.000000e-01 : f32
    %206 = vector.broadcast %cst_80 : f32 to vector<2x2xf32>
    %207 = arith.addf %205, %206 : vector<2x2xf32>
    %208 = vector.extract_strided_slice %199 {offsets = [0, 2], sizes = [2, 2], strides = [1, 1]} : vector<2x8xf32> to vector<2x2xf32>
    %cst_81 = arith.constant 5.000000e-01 : f32
    %209 = vector.broadcast %cst_81 : f32 to vector<2x2xf32>
    %210 = arith.mulf %209, %208 : vector<2x2xf32>
    %211 = math.tanh %210 : vector<2x2xf32>
    %cst_82 = arith.constant 5.000000e-01 : f32
    %212 = vector.broadcast %cst_82 : f32 to vector<2x2xf32>
    %213 = arith.mulf %212, %211 : vector<2x2xf32>
    %cst_83 = arith.constant 5.000000e-01 : f32
    %214 = vector.broadcast %cst_83 : f32 to vector<2x2xf32>
    %215 = arith.addf %213, %214 : vector<2x2xf32>
    %216 = vector.extract_strided_slice %199 {offsets = [0, 4], sizes = [2, 2], strides = [1, 1]} : vector<2x8xf32> to vector<2x2xf32>
    %217 = math.tanh %216 : vector<2x2xf32>
    %218 = vector.extract_strided_slice %199 {offsets = [0, 6], sizes = [2, 2], strides = [1, 1]} : vector<2x8xf32> to vector<2x2xf32>
    %cst_84 = arith.constant 5.000000e-01 : f32
    %219 = vector.broadcast %cst_84 : f32 to vector<2x2xf32>
    %220 = arith.mulf %219, %218 : vector<2x2xf32>
    %221 = math.tanh %220 : vector<2x2xf32>
    %cst_85 = arith.constant 5.000000e-01 : f32
    %222 = vector.broadcast %cst_85 : f32 to vector<2x2xf32>
    %223 = arith.mulf %222, %221 : vector<2x2xf32>
    %cst_86 = arith.constant 5.000000e-01 : f32
    %224 = vector.broadcast %cst_86 : f32 to vector<2x2xf32>
    %225 = arith.addf %223, %224 : vector<2x2xf32>
    %226 = arith.mulf %215, %155 : vector<2x2xf32>
    %227 = arith.mulf %207, %217 : vector<2x2xf32>
    %228 = arith.addf %226, %227 : vector<2x2xf32>
    %229 = math.tanh %228 : vector<2x2xf32>
    %230 = arith.mulf %225, %229 : vector<2x2xf32>
    %cst_87 = arith.constant dense<0.000000e+00> : vector<2x8xf32>
    %231 = tpu.matmul %230, %8, %cst_87 {dimension_numbers = #tpu.dot_dimension_numbers<[1], [0], [0], [1], [0, 0, 1, 1], [], []>} : vector<2x2xf32>, vector<2x8xf32>, vector<2x8xf32> -> vector<2x8xf32>
    %232 = arith.addf %231, %11 : vector<2x8xf32>
    %c2 = arith.constant 2 : index
    %c0_88 = arith.constant 0 : index
    %c0_89 = arith.constant 0 : index
    %233 = vector.load %arg7[%c2, %c0_88, %c0_89] : memref<8x2x2xf32, #tpu.memory_space<vmem>>, vector<1x2x2xf32>
    %234 = vector.shape_cast %233 : vector<1x2x2xf32> to vector<2x2xf32>
    %cst_90 = arith.constant dense<0.000000e+00> : vector<2x2xf32>
    %235 = tpu.matmul %230, %234, %cst_90 {dimension_numbers = #tpu.dot_dimension_numbers<[1], [0], [0], [1], [0, 0, 1, 1], [], []>} : vector<2x2xf32>, vector<2x2xf32>, vector<2x2xf32> -> vector<2x2xf32>
    %236 = arith.addf %163, %235 : vector<2x2xf32>
    %237 = vector.extract_strided_slice %5 {offsets = [6, 0], sizes = [2, 64], strides = [1, 1]} : vector<16x64xf32> to vector<2x64xf32>
    %cst_91 = arith.constant dense<0.000000e+00> : vector<2x64xf32>
    %238 = tpu.matmul %197, %6, %cst_91 {dimension_numbers = #tpu.dot_dimension_numbers<[1], [0], [0], [1], [0, 0, 1, 1], [], []>} : vector<2x16xf32>, vector<16x64xf32>, vector<2x64xf32> -> vector<2x64xf32>
    %239 = arith.addf %237, %238 : vector<2x64xf32>
    %240 = vector.extract_strided_slice %239 {offsets = [0, 0], sizes = [2, 16], strides = [1, 1]} : vector<2x64xf32> to vector<2x16xf32>
    %cst_92 = arith.constant 5.000000e-01 : f32
    %241 = vector.broadcast %cst_92 : f32 to vector<2x16xf32>
    %242 = arith.mulf %241, %240 : vector<2x16xf32>
    %243 = math.tanh %242 : vector<2x16xf32>
    %cst_93 = arith.constant 5.000000e-01 : f32
    %244 = vector.broadcast %cst_93 : f32 to vector<2x16xf32>
    %245 = arith.mulf %244, %243 : vector<2x16xf32>
    %cst_94 = arith.constant 5.000000e-01 : f32
    %246 = vector.broadcast %cst_94 : f32 to vector<2x16xf32>
    %247 = arith.addf %245, %246 : vector<2x16xf32>
    %248 = vector.extract_strided_slice %239 {offsets = [0, 16], sizes = [2, 16], strides = [1, 1]} : vector<2x64xf32> to vector<2x16xf32>
    %cst_95 = arith.constant 5.000000e-01 : f32
    %249 = vector.broadcast %cst_95 : f32 to vector<2x16xf32>
    %250 = arith.mulf %249, %248 : vector<2x16xf32>
    %251 = math.tanh %250 : vector<2x16xf32>
    %cst_96 = arith.constant 5.000000e-01 : f32
    %252 = vector.broadcast %cst_96 : f32 to vector<2x16xf32>
    %253 = arith.mulf %252, %251 : vector<2x16xf32>
    %cst_97 = arith.constant 5.000000e-01 : f32
    %254 = vector.broadcast %cst_97 : f32 to vector<2x16xf32>
    %255 = arith.addf %253, %254 : vector<2x16xf32>
    %256 = vector.extract_strided_slice %239 {offsets = [0, 32], sizes = [2, 16], strides = [1, 1]} : vector<2x64xf32> to vector<2x16xf32>
    %257 = math.tanh %256 : vector<2x16xf32>
    %258 = vector.extract_strided_slice %239 {offsets = [0, 48], sizes = [2, 16], strides = [1, 1]} : vector<2x64xf32> to vector<2x16xf32>
    %cst_98 = arith.constant 5.000000e-01 : f32
    %259 = vector.broadcast %cst_98 : f32 to vector<2x16xf32>
    %260 = arith.mulf %259, %258 : vector<2x16xf32>
    %261 = math.tanh %260 : vector<2x16xf32>
    %cst_99 = arith.constant 5.000000e-01 : f32
    %262 = vector.broadcast %cst_99 : f32 to vector<2x16xf32>
    %263 = arith.mulf %262, %261 : vector<2x16xf32>
    %cst_100 = arith.constant 5.000000e-01 : f32
    %264 = vector.broadcast %cst_100 : f32 to vector<2x16xf32>
    %265 = arith.addf %263, %264 : vector<2x16xf32>
    %266 = arith.mulf %255, %195 : vector<2x16xf32>
    %267 = arith.mulf %247, %257 : vector<2x16xf32>
    %268 = arith.addf %266, %267 : vector<2x16xf32>
    %269 = math.tanh %268 : vector<2x16xf32>
    %270 = arith.mulf %265, %269 : vector<2x16xf32>
    %cst_101 = arith.constant dense<0.000000e+00> : vector<2x8xf32>
    %271 = tpu.matmul %270, %7, %cst_101 {dimension_numbers = #tpu.dot_dimension_numbers<[1], [0], [0], [1], [0, 0, 1, 1], [], []>} : vector<2x16xf32>, vector<16x8xf32>, vector<2x8xf32> -> vector<2x8xf32>
    %272 = arith.addf %271, %232 : vector<2x8xf32>
    %273 = vector.extract_strided_slice %272 {offsets = [0, 0], sizes = [2, 2], strides = [1, 1]} : vector<2x8xf32> to vector<2x2xf32>
    %cst_102 = arith.constant 5.000000e-01 : f32
    %274 = vector.broadcast %cst_102 : f32 to vector<2x2xf32>
    %275 = arith.mulf %274, %273 : vector<2x2xf32>
    %276 = math.tanh %275 : vector<2x2xf32>
    %cst_103 = arith.constant 5.000000e-01 : f32
    %277 = vector.broadcast %cst_103 : f32 to vector<2x2xf32>
    %278 = arith.mulf %277, %276 : vector<2x2xf32>
    %cst_104 = arith.constant 5.000000e-01 : f32
    %279 = vector.broadcast %cst_104 : f32 to vector<2x2xf32>
    %280 = arith.addf %278, %279 : vector<2x2xf32>
    %281 = vector.extract_strided_slice %272 {offsets = [0, 2], sizes = [2, 2], strides = [1, 1]} : vector<2x8xf32> to vector<2x2xf32>
    %cst_105 = arith.constant 5.000000e-01 : f32
    %282 = vector.broadcast %cst_105 : f32 to vector<2x2xf32>
    %283 = arith.mulf %282, %281 : vector<2x2xf32>
    %284 = math.tanh %283 : vector<2x2xf32>
    %cst_106 = arith.constant 5.000000e-01 : f32
    %285 = vector.broadcast %cst_106 : f32 to vector<2x2xf32>
    %286 = arith.mulf %285, %284 : vector<2x2xf32>
    %cst_107 = arith.constant 5.000000e-01 : f32
    %287 = vector.broadcast %cst_107 : f32 to vector<2x2xf32>
    %288 = arith.addf %286, %287 : vector<2x2xf32>
    %289 = vector.extract_strided_slice %272 {offsets = [0, 4], sizes = [2, 2], strides = [1, 1]} : vector<2x8xf32> to vector<2x2xf32>
    %290 = math.tanh %289 : vector<2x2xf32>
    %291 = vector.extract_strided_slice %272 {offsets = [0, 6], sizes = [2, 2], strides = [1, 1]} : vector<2x8xf32> to vector<2x2xf32>
    %cst_108 = arith.constant 5.000000e-01 : f32
    %292 = vector.broadcast %cst_108 : f32 to vector<2x2xf32>
    %293 = arith.mulf %292, %291 : vector<2x2xf32>
    %294 = math.tanh %293 : vector<2x2xf32>
    %cst_109 = arith.constant 5.000000e-01 : f32
    %295 = vector.broadcast %cst_109 : f32 to vector<2x2xf32>
    %296 = arith.mulf %295, %294 : vector<2x2xf32>
    %cst_110 = arith.constant 5.000000e-01 : f32
    %297 = vector.broadcast %cst_110 : f32 to vector<2x2xf32>
    %298 = arith.addf %296, %297 : vector<2x2xf32>
    %299 = arith.mulf %288, %228 : vector<2x2xf32>
    %300 = arith.mulf %280, %290 : vector<2x2xf32>
    %301 = arith.addf %299, %300 : vector<2x2xf32>
    %302 = math.tanh %301 : vector<2x2xf32>
    %303 = arith.mulf %298, %302 : vector<2x2xf32>
    %cst_111 = arith.constant dense<0.000000e+00> : vector<2x8xf32>
    %304 = tpu.matmul %303, %8, %cst_111 {dimension_numbers = #tpu.dot_dimension_numbers<[1], [0], [0], [1], [0, 0, 1, 1], [], []>} : vector<2x2xf32>, vector<2x8xf32>, vector<2x8xf32> -> vector<2x8xf32>
    %305 = arith.addf %304, %11 : vector<2x8xf32>
    %c3 = arith.constant 3 : index
    %c0_112 = arith.constant 0 : index
    %c0_113 = arith.constant 0 : index
    %306 = vector.load %arg7[%c3, %c0_112, %c0_113] : memref<8x2x2xf32, #tpu.memory_space<vmem>>, vector<1x2x2xf32>
    %307 = vector.shape_cast %306 : vector<1x2x2xf32> to vector<2x2xf32>
    %cst_114 = arith.constant dense<0.000000e+00> : vector<2x2xf32>
    %308 = tpu.matmul %303, %307, %cst_114 {dimension_numbers = #tpu.dot_dimension_numbers<[1], [0], [0], [1], [0, 0, 1, 1], [], []>} : vector<2x2xf32>, vector<2x2xf32>, vector<2x2xf32> -> vector<2x2xf32>
    %309 = arith.addf %236, %308 : vector<2x2xf32>
    %310 = vector.extract_strided_slice %5 {offsets = [8, 0], sizes = [2, 64], strides = [1, 1]} : vector<16x64xf32> to vector<2x64xf32>
    %cst_115 = arith.constant dense<0.000000e+00> : vector<2x64xf32>
    %311 = tpu.matmul %270, %6, %cst_115 {dimension_numbers = #tpu.dot_dimension_numbers<[1], [0], [0], [1], [0, 0, 1, 1], [], []>} : vector<2x16xf32>, vector<16x64xf32>, vector<2x64xf32> -> vector<2x64xf32>
    %312 = arith.addf %310, %311 : vector<2x64xf32>
    %313 = vector.extract_strided_slice %312 {offsets = [0, 0], sizes = [2, 16], strides = [1, 1]} : vector<2x64xf32> to vector<2x16xf32>
    %cst_116 = arith.constant 5.000000e-01 : f32
    %314 = vector.broadcast %cst_116 : f32 to vector<2x16xf32>
    %315 = arith.mulf %314, %313 : vector<2x16xf32>
    %316 = math.tanh %315 : vector<2x16xf32>
    %cst_117 = arith.constant 5.000000e-01 : f32
    %317 = vector.broadcast %cst_117 : f32 to vector<2x16xf32>
    %318 = arith.mulf %317, %316 : vector<2x16xf32>
    %cst_118 = arith.constant 5.000000e-01 : f32
    %319 = vector.broadcast %cst_118 : f32 to vector<2x16xf32>
    %320 = arith.addf %318, %319 : vector<2x16xf32>
    %321 = vector.extract_strided_slice %312 {offsets = [0, 16], sizes = [2, 16], strides = [1, 1]} : vector<2x64xf32> to vector<2x16xf32>
    %cst_119 = arith.constant 5.000000e-01 : f32
    %322 = vector.broadcast %cst_119 : f32 to vector<2x16xf32>
    %323 = arith.mulf %322, %321 : vector<2x16xf32>
    %324 = math.tanh %323 : vector<2x16xf32>
    %cst_120 = arith.constant 5.000000e-01 : f32
    %325 = vector.broadcast %cst_120 : f32 to vector<2x16xf32>
    %326 = arith.mulf %325, %324 : vector<2x16xf32>
    %cst_121 = arith.constant 5.000000e-01 : f32
    %327 = vector.broadcast %cst_121 : f32 to vector<2x16xf32>
    %328 = arith.addf %326, %327 : vector<2x16xf32>
    %329 = vector.extract_strided_slice %312 {offsets = [0, 32], sizes = [2, 16], strides = [1, 1]} : vector<2x64xf32> to vector<2x16xf32>
    %330 = math.tanh %329 : vector<2x16xf32>
    %331 = vector.extract_strided_slice %312 {offsets = [0, 48], sizes = [2, 16], strides = [1, 1]} : vector<2x64xf32> to vector<2x16xf32>
    %cst_122 = arith.constant 5.000000e-01 : f32
    %332 = vector.broadcast %cst_122 : f32 to vector<2x16xf32>
    %333 = arith.mulf %332, %331 : vector<2x16xf32>
    %334 = math.tanh %333 : vector<2x16xf32>
    %cst_123 = arith.constant 5.000000e-01 : f32
    %335 = vector.broadcast %cst_123 : f32 to vector<2x16xf32>
    %336 = arith.mulf %335, %334 : vector<2x16xf32>
    %cst_124 = arith.constant 5.000000e-01 : f32
    %337 = vector.broadcast %cst_124 : f32 to vector<2x16xf32>
    %338 = arith.addf %336, %337 : vector<2x16xf32>
    %339 = arith.mulf %328, %268 : vector<2x16xf32>
    %340 = arith.mulf %320, %330 : vector<2x16xf32>
    %341 = arith.addf %339, %340 : vector<2x16xf32>
    %342 = math.tanh %341 : vector<2x16xf32>
    %343 = arith.mulf %338, %342 : vector<2x16xf32>
    %cst_125 = arith.constant dense<0.000000e+00> : vector<2x8xf32>
    %344 = tpu.matmul %343, %7, %cst_125 {dimension_numbers = #tpu.dot_dimension_numbers<[1], [0], [0], [1], [0, 0, 1, 1], [], []>} : vector<2x16xf32>, vector<16x8xf32>, vector<2x8xf32> -> vector<2x8xf32>
    %345 = arith.addf %344, %305 : vector<2x8xf32>
    %346 = vector.extract_strided_slice %345 {offsets = [0, 0], sizes = [2, 2], strides = [1, 1]} : vector<2x8xf32> to vector<2x2xf32>
    %cst_126 = arith.constant 5.000000e-01 : f32
    %347 = vector.broadcast %cst_126 : f32 to vector<2x2xf32>
    %348 = arith.mulf %347, %346 : vector<2x2xf32>
    %349 = math.tanh %348 : vector<2x2xf32>
    %cst_127 = arith.constant 5.000000e-01 : f32
    %350 = vector.broadcast %cst_127 : f32 to vector<2x2xf32>
    %351 = arith.mulf %350, %349 : vector<2x2xf32>
    %cst_128 = arith.constant 5.000000e-01 : f32
    %352 = vector.broadcast %cst_128 : f32 to vector<2x2xf32>
    %353 = arith.addf %351, %352 : vector<2x2xf32>
    %354 = vector.extract_strided_slice %345 {offsets = [0, 2], sizes = [2, 2], strides = [1, 1]} : vector<2x8xf32> to vector<2x2xf32>
    %cst_129 = arith.constant 5.000000e-01 : f32
    %355 = vector.broadcast %cst_129 : f32 to vector<2x2xf32>
    %356 = arith.mulf %355, %354 : vector<2x2xf32>
    %357 = math.tanh %356 : vector<2x2xf32>
    %cst_130 = arith.constant 5.000000e-01 : f32
    %358 = vector.broadcast %cst_130 : f32 to vector<2x2xf32>
    %359 = arith.mulf %358, %357 : vector<2x2xf32>
    %cst_131 = arith.constant 5.000000e-01 : f32
    %360 = vector.broadcast %cst_131 : f32 to vector<2x2xf32>
    %361 = arith.addf %359, %360 : vector<2x2xf32>
    %362 = vector.extract_strided_slice %345 {offsets = [0, 4], sizes = [2, 2], strides = [1, 1]} : vector<2x8xf32> to vector<2x2xf32>
    %363 = math.tanh %362 : vector<2x2xf32>
    %364 = vector.extract_strided_slice %345 {offsets = [0, 6], sizes = [2, 2], strides = [1, 1]} : vector<2x8xf32> to vector<2x2xf32>
    %cst_132 = arith.constant 5.000000e-01 : f32
    %365 = vector.broadcast %cst_132 : f32 to vector<2x2xf32>
    %366 = arith.mulf %365, %364 : vector<2x2xf32>
    %367 = math.tanh %366 : vector<2x2xf32>
    %cst_133 = arith.constant 5.000000e-01 : f32
    %368 = vector.broadcast %cst_133 : f32 to vector<2x2xf32>
    %369 = arith.mulf %368, %367 : vector<2x2xf32>
    %cst_134 = arith.constant 5.000000e-01 : f32
    %370 = vector.broadcast %cst_134 : f32 to vector<2x2xf32>
    %371 = arith.addf %369, %370 : vector<2x2xf32>
    %372 = arith.mulf %361, %301 : vector<2x2xf32>
    %373 = arith.mulf %353, %363 : vector<2x2xf32>
    %374 = arith.addf %372, %373 : vector<2x2xf32>
    %375 = math.tanh %374 : vector<2x2xf32>
    %376 = arith.mulf %371, %375 : vector<2x2xf32>
    %cst_135 = arith.constant dense<0.000000e+00> : vector<2x8xf32>
    %377 = tpu.matmul %376, %8, %cst_135 {dimension_numbers = #tpu.dot_dimension_numbers<[1], [0], [0], [1], [0, 0, 1, 1], [], []>} : vector<2x2xf32>, vector<2x8xf32>, vector<2x8xf32> -> vector<2x8xf32>
    %378 = arith.addf %377, %11 : vector<2x8xf32>
    %c4 = arith.constant 4 : index
    %c0_136 = arith.constant 0 : index
    %c0_137 = arith.constant 0 : index
    %379 = vector.load %arg7[%c4, %c0_136, %c0_137] : memref<8x2x2xf32, #tpu.memory_space<vmem>>, vector<1x2x2xf32>
    %380 = vector.shape_cast %379 : vector<1x2x2xf32> to vector<2x2xf32>
    %cst_138 = arith.constant dense<0.000000e+00> : vector<2x2xf32>
    %381 = tpu.matmul %376, %380, %cst_138 {dimension_numbers = #tpu.dot_dimension_numbers<[1], [0], [0], [1], [0, 0, 1, 1], [], []>} : vector<2x2xf32>, vector<2x2xf32>, vector<2x2xf32> -> vector<2x2xf32>
    %382 = arith.addf %309, %381 : vector<2x2xf32>
    %383 = vector.extract_strided_slice %5 {offsets = [10, 0], sizes = [2, 64], strides = [1, 1]} : vector<16x64xf32> to vector<2x64xf32>
    %cst_139 = arith.constant dense<0.000000e+00> : vector<2x64xf32>
    %384 = tpu.matmul %343, %6, %cst_139 {dimension_numbers = #tpu.dot_dimension_numbers<[1], [0], [0], [1], [0, 0, 1, 1], [], []>} : vector<2x16xf32>, vector<16x64xf32>, vector<2x64xf32> -> vector<2x64xf32>
    %385 = arith.addf %383, %384 : vector<2x64xf32>
    %386 = vector.extract_strided_slice %385 {offsets = [0, 0], sizes = [2, 16], strides = [1, 1]} : vector<2x64xf32> to vector<2x16xf32>
    %cst_140 = arith.constant 5.000000e-01 : f32
    %387 = vector.broadcast %cst_140 : f32 to vector<2x16xf32>
    %388 = arith.mulf %387, %386 : vector<2x16xf32>
    %389 = math.tanh %388 : vector<2x16xf32>
    %cst_141 = arith.constant 5.000000e-01 : f32
    %390 = vector.broadcast %cst_141 : f32 to vector<2x16xf32>
    %391 = arith.mulf %390, %389 : vector<2x16xf32>
    %cst_142 = arith.constant 5.000000e-01 : f32
    %392 = vector.broadcast %cst_142 : f32 to vector<2x16xf32>
    %393 = arith.addf %391, %392 : vector<2x16xf32>
    %394 = vector.extract_strided_slice %385 {offsets = [0, 16], sizes = [2, 16], strides = [1, 1]} : vector<2x64xf32> to vector<2x16xf32>
    %cst_143 = arith.constant 5.000000e-01 : f32
    %395 = vector.broadcast %cst_143 : f32 to vector<2x16xf32>
    %396 = arith.mulf %395, %394 : vector<2x16xf32>
    %397 = math.tanh %396 : vector<2x16xf32>
    %cst_144 = arith.constant 5.000000e-01 : f32
    %398 = vector.broadcast %cst_144 : f32 to vector<2x16xf32>
    %399 = arith.mulf %398, %397 : vector<2x16xf32>
    %cst_145 = arith.constant 5.000000e-01 : f32
    %400 = vector.broadcast %cst_145 : f32 to vector<2x16xf32>
    %401 = arith.addf %399, %400 : vector<2x16xf32>
    %402 = vector.extract_strided_slice %385 {offsets = [0, 32], sizes = [2, 16], strides = [1, 1]} : vector<2x64xf32> to vector<2x16xf32>
    %403 = math.tanh %402 : vector<2x16xf32>
    %404 = vector.extract_strided_slice %385 {offsets = [0, 48], sizes = [2, 16], strides = [1, 1]} : vector<2x64xf32> to vector<2x16xf32>
    %cst_146 = arith.constant 5.000000e-01 : f32
    %405 = vector.broadcast %cst_146 : f32 to vector<2x16xf32>
    %406 = arith.mulf %405, %404 : vector<2x16xf32>
    %407 = math.tanh %406 : vector<2x16xf32>
    %cst_147 = arith.constant 5.000000e-01 : f32
    %408 = vector.broadcast %cst_147 : f32 to vector<2x16xf32>
    %409 = arith.mulf %408, %407 : vector<2x16xf32>
    %cst_148 = arith.constant 5.000000e-01 : f32
    %410 = vector.broadcast %cst_148 : f32 to vector<2x16xf32>
    %411 = arith.addf %409, %410 : vector<2x16xf32>
    %412 = arith.mulf %401, %341 : vector<2x16xf32>
    %413 = arith.mulf %393, %403 : vector<2x16xf32>
    %414 = arith.addf %412, %413 : vector<2x16xf32>
    %415 = math.tanh %414 : vector<2x16xf32>
    %416 = arith.mulf %411, %415 : vector<2x16xf32>
    %cst_149 = arith.constant dense<0.000000e+00> : vector<2x8xf32>
    %417 = tpu.matmul %416, %7, %cst_149 {dimension_numbers = #tpu.dot_dimension_numbers<[1], [0], [0], [1], [0, 0, 1, 1], [], []>} : vector<2x16xf32>, vector<16x8xf32>, vector<2x8xf32> -> vector<2x8xf32>
    %418 = arith.addf %417, %378 : vector<2x8xf32>
    %419 = vector.extract_strided_slice %418 {offsets = [0, 0], sizes = [2, 2], strides = [1, 1]} : vector<2x8xf32> to vector<2x2xf32>
    %cst_150 = arith.constant 5.000000e-01 : f32
    %420 = vector.broadcast %cst_150 : f32 to vector<2x2xf32>
    %421 = arith.mulf %420, %419 : vector<2x2xf32>
    %422 = math.tanh %421 : vector<2x2xf32>
    %cst_151 = arith.constant 5.000000e-01 : f32
    %423 = vector.broadcast %cst_151 : f32 to vector<2x2xf32>
    %424 = arith.mulf %423, %422 : vector<2x2xf32>
    %cst_152 = arith.constant 5.000000e-01 : f32
    %425 = vector.broadcast %cst_152 : f32 to vector<2x2xf32>
    %426 = arith.addf %424, %425 : vector<2x2xf32>
    %427 = vector.extract_strided_slice %418 {offsets = [0, 2], sizes = [2, 2], strides = [1, 1]} : vector<2x8xf32> to vector<2x2xf32>
    %cst_153 = arith.constant 5.000000e-01 : f32
    %428 = vector.broadcast %cst_153 : f32 to vector<2x2xf32>
    %429 = arith.mulf %428, %427 : vector<2x2xf32>
    %430 = math.tanh %429 : vector<2x2xf32>
    %cst_154 = arith.constant 5.000000e-01 : f32
    %431 = vector.broadcast %cst_154 : f32 to vector<2x2xf32>
    %432 = arith.mulf %431, %430 : vector<2x2xf32>
    %cst_155 = arith.constant 5.000000e-01 : f32
    %433 = vector.broadcast %cst_155 : f32 to vector<2x2xf32>
    %434 = arith.addf %432, %433 : vector<2x2xf32>
    %435 = vector.extract_strided_slice %418 {offsets = [0, 4], sizes = [2, 2], strides = [1, 1]} : vector<2x8xf32> to vector<2x2xf32>
    %436 = math.tanh %435 : vector<2x2xf32>
    %437 = vector.extract_strided_slice %418 {offsets = [0, 6], sizes = [2, 2], strides = [1, 1]} : vector<2x8xf32> to vector<2x2xf32>
    %cst_156 = arith.constant 5.000000e-01 : f32
    %438 = vector.broadcast %cst_156 : f32 to vector<2x2xf32>
    %439 = arith.mulf %438, %437 : vector<2x2xf32>
    %440 = math.tanh %439 : vector<2x2xf32>
    %cst_157 = arith.constant 5.000000e-01 : f32
    %441 = vector.broadcast %cst_157 : f32 to vector<2x2xf32>
    %442 = arith.mulf %441, %440 : vector<2x2xf32>
    %cst_158 = arith.constant 5.000000e-01 : f32
    %443 = vector.broadcast %cst_158 : f32 to vector<2x2xf32>
    %444 = arith.addf %442, %443 : vector<2x2xf32>
    %445 = arith.mulf %434, %374 : vector<2x2xf32>
    %446 = arith.mulf %426, %436 : vector<2x2xf32>
    %447 = arith.addf %445, %446 : vector<2x2xf32>
    %448 = math.tanh %447 : vector<2x2xf32>
    %449 = arith.mulf %444, %448 : vector<2x2xf32>
    %cst_159 = arith.constant dense<0.000000e+00> : vector<2x8xf32>
    %450 = tpu.matmul %449, %8, %cst_159 {dimension_numbers = #tpu.dot_dimension_numbers<[1], [0], [0], [1], [0, 0, 1, 1], [], []>} : vector<2x2xf32>, vector<2x8xf32>, vector<2x8xf32> -> vector<2x8xf32>
    %451 = arith.addf %450, %11 : vector<2x8xf32>
    %c5 = arith.constant 5 : index
    %c0_160 = arith.constant 0 : index
    %c0_161 = arith.constant 0 : index
    %452 = vector.load %arg7[%c5, %c0_160, %c0_161] : memref<8x2x2xf32, #tpu.memory_space<vmem>>, vector<1x2x2xf32>
    %453 = vector.shape_cast %452 : vector<1x2x2xf32> to vector<2x2xf32>
    %cst_162 = arith.constant dense<0.000000e+00> : vector<2x2xf32>
    %454 = tpu.matmul %449, %453, %cst_162 {dimension_numbers = #tpu.dot_dimension_numbers<[1], [0], [0], [1], [0, 0, 1, 1], [], []>} : vector<2x2xf32>, vector<2x2xf32>, vector<2x2xf32> -> vector<2x2xf32>
    %455 = arith.addf %382, %454 : vector<2x2xf32>
    %456 = vector.extract_strided_slice %5 {offsets = [12, 0], sizes = [2, 64], strides = [1, 1]} : vector<16x64xf32> to vector<2x64xf32>
    %cst_163 = arith.constant dense<0.000000e+00> : vector<2x64xf32>
    %457 = tpu.matmul %416, %6, %cst_163 {dimension_numbers = #tpu.dot_dimension_numbers<[1], [0], [0], [1], [0, 0, 1, 1], [], []>} : vector<2x16xf32>, vector<16x64xf32>, vector<2x64xf32> -> vector<2x64xf32>
    %458 = arith.addf %456, %457 : vector<2x64xf32>
    %459 = vector.extract_strided_slice %458 {offsets = [0, 0], sizes = [2, 16], strides = [1, 1]} : vector<2x64xf32> to vector<2x16xf32>
    %cst_164 = arith.constant 5.000000e-01 : f32
    %460 = vector.broadcast %cst_164 : f32 to vector<2x16xf32>
    %461 = arith.mulf %460, %459 : vector<2x16xf32>
    %462 = math.tanh %461 : vector<2x16xf32>
    %cst_165 = arith.constant 5.000000e-01 : f32
    %463 = vector.broadcast %cst_165 : f32 to vector<2x16xf32>
    %464 = arith.mulf %463, %462 : vector<2x16xf32>
    %cst_166 = arith.constant 5.000000e-01 : f32
    %465 = vector.broadcast %cst_166 : f32 to vector<2x16xf32>
    %466 = arith.addf %464, %465 : vector<2x16xf32>
    %467 = vector.extract_strided_slice %458 {offsets = [0, 16], sizes = [2, 16], strides = [1, 1]} : vector<2x64xf32> to vector<2x16xf32>
    %cst_167 = arith.constant 5.000000e-01 : f32
    %468 = vector.broadcast %cst_167 : f32 to vector<2x16xf32>
    %469 = arith.mulf %468, %467 : vector<2x16xf32>
    %470 = math.tanh %469 : vector<2x16xf32>
    %cst_168 = arith.constant 5.000000e-01 : f32
    %471 = vector.broadcast %cst_168 : f32 to vector<2x16xf32>
    %472 = arith.mulf %471, %470 : vector<2x16xf32>
    %cst_169 = arith.constant 5.000000e-01 : f32
    %473 = vector.broadcast %cst_169 : f32 to vector<2x16xf32>
    %474 = arith.addf %472, %473 : vector<2x16xf32>
    %475 = vector.extract_strided_slice %458 {offsets = [0, 32], sizes = [2, 16], strides = [1, 1]} : vector<2x64xf32> to vector<2x16xf32>
    %476 = math.tanh %475 : vector<2x16xf32>
    %477 = vector.extract_strided_slice %458 {offsets = [0, 48], sizes = [2, 16], strides = [1, 1]} : vector<2x64xf32> to vector<2x16xf32>
    %cst_170 = arith.constant 5.000000e-01 : f32
    %478 = vector.broadcast %cst_170 : f32 to vector<2x16xf32>
    %479 = arith.mulf %478, %477 : vector<2x16xf32>
    %480 = math.tanh %479 : vector<2x16xf32>
    %cst_171 = arith.constant 5.000000e-01 : f32
    %481 = vector.broadcast %cst_171 : f32 to vector<2x16xf32>
    %482 = arith.mulf %481, %480 : vector<2x16xf32>
    %cst_172 = arith.constant 5.000000e-01 : f32
    %483 = vector.broadcast %cst_172 : f32 to vector<2x16xf32>
    %484 = arith.addf %482, %483 : vector<2x16xf32>
    %485 = arith.mulf %474, %414 : vector<2x16xf32>
    %486 = arith.mulf %466, %476 : vector<2x16xf32>
    %487 = arith.addf %485, %486 : vector<2x16xf32>
    %488 = math.tanh %487 : vector<2x16xf32>
    %489 = arith.mulf %484, %488 : vector<2x16xf32>
    %cst_173 = arith.constant dense<0.000000e+00> : vector<2x8xf32>
    %490 = tpu.matmul %489, %7, %cst_173 {dimension_numbers = #tpu.dot_dimension_numbers<[1], [0], [0], [1], [0, 0, 1, 1], [], []>} : vector<2x16xf32>, vector<16x8xf32>, vector<2x8xf32> -> vector<2x8xf32>
    %491 = arith.addf %490, %451 : vector<2x8xf32>
    %492 = vector.extract_strided_slice %491 {offsets = [0, 0], sizes = [2, 2], strides = [1, 1]} : vector<2x8xf32> to vector<2x2xf32>
    %cst_174 = arith.constant 5.000000e-01 : f32
    %493 = vector.broadcast %cst_174 : f32 to vector<2x2xf32>
    %494 = arith.mulf %493, %492 : vector<2x2xf32>
    %495 = math.tanh %494 : vector<2x2xf32>
    %cst_175 = arith.constant 5.000000e-01 : f32
    %496 = vector.broadcast %cst_175 : f32 to vector<2x2xf32>
    %497 = arith.mulf %496, %495 : vector<2x2xf32>
    %cst_176 = arith.constant 5.000000e-01 : f32
    %498 = vector.broadcast %cst_176 : f32 to vector<2x2xf32>
    %499 = arith.addf %497, %498 : vector<2x2xf32>
    %500 = vector.extract_strided_slice %491 {offsets = [0, 2], sizes = [2, 2], strides = [1, 1]} : vector<2x8xf32> to vector<2x2xf32>
    %cst_177 = arith.constant 5.000000e-01 : f32
    %501 = vector.broadcast %cst_177 : f32 to vector<2x2xf32>
    %502 = arith.mulf %501, %500 : vector<2x2xf32>
    %503 = math.tanh %502 : vector<2x2xf32>
    %cst_178 = arith.constant 5.000000e-01 : f32
    %504 = vector.broadcast %cst_178 : f32 to vector<2x2xf32>
    %505 = arith.mulf %504, %503 : vector<2x2xf32>
    %cst_179 = arith.constant 5.000000e-01 : f32
    %506 = vector.broadcast %cst_179 : f32 to vector<2x2xf32>
    %507 = arith.addf %505, %506 : vector<2x2xf32>
    %508 = vector.extract_strided_slice %491 {offsets = [0, 4], sizes = [2, 2], strides = [1, 1]} : vector<2x8xf32> to vector<2x2xf32>
    %509 = math.tanh %508 : vector<2x2xf32>
    %510 = vector.extract_strided_slice %491 {offsets = [0, 6], sizes = [2, 2], strides = [1, 1]} : vector<2x8xf32> to vector<2x2xf32>
    %cst_180 = arith.constant 5.000000e-01 : f32
    %511 = vector.broadcast %cst_180 : f32 to vector<2x2xf32>
    %512 = arith.mulf %511, %510 : vector<2x2xf32>
    %513 = math.tanh %512 : vector<2x2xf32>
    %cst_181 = arith.constant 5.000000e-01 : f32
    %514 = vector.broadcast %cst_181 : f32 to vector<2x2xf32>
    %515 = arith.mulf %514, %513 : vector<2x2xf32>
    %cst_182 = arith.constant 5.000000e-01 : f32
    %516 = vector.broadcast %cst_182 : f32 to vector<2x2xf32>
    %517 = arith.addf %515, %516 : vector<2x2xf32>
    %518 = arith.mulf %507, %447 : vector<2x2xf32>
    %519 = arith.mulf %499, %509 : vector<2x2xf32>
    %520 = arith.addf %518, %519 : vector<2x2xf32>
    %521 = math.tanh %520 : vector<2x2xf32>
    %522 = arith.mulf %517, %521 : vector<2x2xf32>
    %cst_183 = arith.constant dense<0.000000e+00> : vector<2x8xf32>
    %523 = tpu.matmul %522, %8, %cst_183 {dimension_numbers = #tpu.dot_dimension_numbers<[1], [0], [0], [1], [0, 0, 1, 1], [], []>} : vector<2x2xf32>, vector<2x8xf32>, vector<2x8xf32> -> vector<2x8xf32>
    %524 = arith.addf %523, %11 : vector<2x8xf32>
    %c6 = arith.constant 6 : index
    %c0_184 = arith.constant 0 : index
    %c0_185 = arith.constant 0 : index
    %525 = vector.load %arg7[%c6, %c0_184, %c0_185] : memref<8x2x2xf32, #tpu.memory_space<vmem>>, vector<1x2x2xf32>
    %526 = vector.shape_cast %525 : vector<1x2x2xf32> to vector<2x2xf32>
    %cst_186 = arith.constant dense<0.000000e+00> : vector<2x2xf32>
    %527 = tpu.matmul %522, %526, %cst_186 {dimension_numbers = #tpu.dot_dimension_numbers<[1], [0], [0], [1], [0, 0, 1, 1], [], []>} : vector<2x2xf32>, vector<2x2xf32>, vector<2x2xf32> -> vector<2x2xf32>
    %528 = arith.addf %455, %527 : vector<2x2xf32>
    %529 = vector.extract_strided_slice %5 {offsets = [14, 0], sizes = [2, 64], strides = [1, 1]} : vector<16x64xf32> to vector<2x64xf32>
    %cst_187 = arith.constant dense<0.000000e+00> : vector<2x64xf32>
    %530 = tpu.matmul %489, %6, %cst_187 {dimension_numbers = #tpu.dot_dimension_numbers<[1], [0], [0], [1], [0, 0, 1, 1], [], []>} : vector<2x16xf32>, vector<16x64xf32>, vector<2x64xf32> -> vector<2x64xf32>
    %531 = arith.addf %529, %530 : vector<2x64xf32>
    %532 = vector.extract_strided_slice %531 {offsets = [0, 0], sizes = [2, 16], strides = [1, 1]} : vector<2x64xf32> to vector<2x16xf32>
    %cst_188 = arith.constant 5.000000e-01 : f32
    %533 = vector.broadcast %cst_188 : f32 to vector<2x16xf32>
    %534 = arith.mulf %533, %532 : vector<2x16xf32>
    %535 = math.tanh %534 : vector<2x16xf32>
    %cst_189 = arith.constant 5.000000e-01 : f32
    %536 = vector.broadcast %cst_189 : f32 to vector<2x16xf32>
    %537 = arith.mulf %536, %535 : vector<2x16xf32>
    %cst_190 = arith.constant 5.000000e-01 : f32
    %538 = vector.broadcast %cst_190 : f32 to vector<2x16xf32>
    %539 = arith.addf %537, %538 : vector<2x16xf32>
    %540 = vector.extract_strided_slice %531 {offsets = [0, 16], sizes = [2, 16], strides = [1, 1]} : vector<2x64xf32> to vector<2x16xf32>
    %cst_191 = arith.constant 5.000000e-01 : f32
    %541 = vector.broadcast %cst_191 : f32 to vector<2x16xf32>
    %542 = arith.mulf %541, %540 : vector<2x16xf32>
    %543 = math.tanh %542 : vector<2x16xf32>
    %cst_192 = arith.constant 5.000000e-01 : f32
    %544 = vector.broadcast %cst_192 : f32 to vector<2x16xf32>
    %545 = arith.mulf %544, %543 : vector<2x16xf32>
    %cst_193 = arith.constant 5.000000e-01 : f32
    %546 = vector.broadcast %cst_193 : f32 to vector<2x16xf32>
    %547 = arith.addf %545, %546 : vector<2x16xf32>
    %548 = vector.extract_strided_slice %531 {offsets = [0, 32], sizes = [2, 16], strides = [1, 1]} : vector<2x64xf32> to vector<2x16xf32>
    %549 = math.tanh %548 : vector<2x16xf32>
    %550 = vector.extract_strided_slice %531 {offsets = [0, 48], sizes = [2, 16], strides = [1, 1]} : vector<2x64xf32> to vector<2x16xf32>
    %cst_194 = arith.constant 5.000000e-01 : f32
    %551 = vector.broadcast %cst_194 : f32 to vector<2x16xf32>
    %552 = arith.mulf %551, %550 : vector<2x16xf32>
    %553 = math.tanh %552 : vector<2x16xf32>
    %cst_195 = arith.constant 5.000000e-01 : f32
    %554 = vector.broadcast %cst_195 : f32 to vector<2x16xf32>
    %555 = arith.mulf %554, %553 : vector<2x16xf32>
    %cst_196 = arith.constant 5.000000e-01 : f32
    %556 = vector.broadcast %cst_196 : f32 to vector<2x16xf32>
    %557 = arith.addf %555, %556 : vector<2x16xf32>
    %558 = arith.mulf %547, %487 : vector<2x16xf32>
    %559 = arith.mulf %539, %549 : vector<2x16xf32>
    %560 = arith.addf %558, %559 : vector<2x16xf32>
    %561 = math.tanh %560 : vector<2x16xf32>
    %562 = arith.mulf %557, %561 : vector<2x16xf32>
    %cst_197 = arith.constant dense<0.000000e+00> : vector<2x8xf32>
    %563 = tpu.matmul %562, %7, %cst_197 {dimension_numbers = #tpu.dot_dimension_numbers<[1], [0], [0], [1], [0, 0, 1, 1], [], []>} : vector<2x16xf32>, vector<16x8xf32>, vector<2x8xf32> -> vector<2x8xf32>
    %564 = arith.addf %563, %524 : vector<2x8xf32>
    %565 = vector.extract_strided_slice %564 {offsets = [0, 0], sizes = [2, 2], strides = [1, 1]} : vector<2x8xf32> to vector<2x2xf32>
    %cst_198 = arith.constant 5.000000e-01 : f32
    %566 = vector.broadcast %cst_198 : f32 to vector<2x2xf32>
    %567 = arith.mulf %566, %565 : vector<2x2xf32>
    %568 = math.tanh %567 : vector<2x2xf32>
    %cst_199 = arith.constant 5.000000e-01 : f32
    %569 = vector.broadcast %cst_199 : f32 to vector<2x2xf32>
    %570 = arith.mulf %569, %568 : vector<2x2xf32>
    %cst_200 = arith.constant 5.000000e-01 : f32
    %571 = vector.broadcast %cst_200 : f32 to vector<2x2xf32>
    %572 = arith.addf %570, %571 : vector<2x2xf32>
    %573 = vector.extract_strided_slice %564 {offsets = [0, 2], sizes = [2, 2], strides = [1, 1]} : vector<2x8xf32> to vector<2x2xf32>
    %cst_201 = arith.constant 5.000000e-01 : f32
    %574 = vector.broadcast %cst_201 : f32 to vector<2x2xf32>
    %575 = arith.mulf %574, %573 : vector<2x2xf32>
    %576 = math.tanh %575 : vector<2x2xf32>
    %cst_202 = arith.constant 5.000000e-01 : f32
    %577 = vector.broadcast %cst_202 : f32 to vector<2x2xf32>
    %578 = arith.mulf %577, %576 : vector<2x2xf32>
    %cst_203 = arith.constant 5.000000e-01 : f32
    %579 = vector.broadcast %cst_203 : f32 to vector<2x2xf32>
    %580 = arith.addf %578, %579 : vector<2x2xf32>
    %581 = vector.extract_strided_slice %564 {offsets = [0, 4], sizes = [2, 2], strides = [1, 1]} : vector<2x8xf32> to vector<2x2xf32>
    %582 = math.tanh %581 : vector<2x2xf32>
    %583 = vector.extract_strided_slice %564 {offsets = [0, 6], sizes = [2, 2], strides = [1, 1]} : vector<2x8xf32> to vector<2x2xf32>
    %cst_204 = arith.constant 5.000000e-01 : f32
    %584 = vector.broadcast %cst_204 : f32 to vector<2x2xf32>
    %585 = arith.mulf %584, %583 : vector<2x2xf32>
    %586 = math.tanh %585 : vector<2x2xf32>
    %cst_205 = arith.constant 5.000000e-01 : f32
    %587 = vector.broadcast %cst_205 : f32 to vector<2x2xf32>
    %588 = arith.mulf %587, %586 : vector<2x2xf32>
    %cst_206 = arith.constant 5.000000e-01 : f32
    %589 = vector.broadcast %cst_206 : f32 to vector<2x2xf32>
    %590 = arith.addf %588, %589 : vector<2x2xf32>
    %591 = arith.mulf %580, %520 : vector<2x2xf32>
    %592 = arith.mulf %572, %582 : vector<2x2xf32>
    %593 = arith.addf %591, %592 : vector<2x2xf32>
    %594 = math.tanh %593 : vector<2x2xf32>
    %595 = arith.mulf %590, %594 : vector<2x2xf32>
    %c7 = arith.constant 7 : index
    %c0_207 = arith.constant 0 : index
    %c0_208 = arith.constant 0 : index
    %596 = vector.load %arg7[%c7, %c0_207, %c0_208] : memref<8x2x2xf32, #tpu.memory_space<vmem>>, vector<1x2x2xf32>
    %597 = vector.shape_cast %596 : vector<1x2x2xf32> to vector<2x2xf32>
    %cst_209 = arith.constant dense<0.000000e+00> : vector<2x2xf32>
    %598 = tpu.matmul %595, %597, %cst_209 {dimension_numbers = #tpu.dot_dimension_numbers<[1], [0], [0], [1], [0, 0, 1, 1], [], []>} : vector<2x2xf32>, vector<2x2xf32>, vector<2x2xf32> -> vector<2x2xf32>
    %599 = arith.addf %528, %598 : vector<2x2xf32>
    %cst_210 = arith.constant 5.000000e-01 : f32
    %600 = vector.broadcast %cst_210 : f32 to vector<2x2xf32>
    %601 = arith.mulf %600, %599 : vector<2x2xf32>
    %602 = math.tanh %601 : vector<2x2xf32>
    %cst_211 = arith.constant 5.000000e-01 : f32
    %603 = vector.broadcast %cst_211 : f32 to vector<2x2xf32>
    %604 = arith.mulf %603, %602 : vector<2x2xf32>
    %cst_212 = arith.constant 5.000000e-01 : f32
    %605 = vector.broadcast %cst_212 : f32 to vector<2x2xf32>
    %606 = arith.addf %604, %605 : vector<2x2xf32>
    %c0_213 = arith.constant 0 : index
    %c0_214 = arith.constant 0 : index
    %607 = vector.load %arg9[%c0_213, %c0_214] : memref<2x2xf32, #tpu.memory_space<vmem>>, vector<2x2xf32>
    tpu.vector_store %arg9[%c0_213, %c0_214], %606 {strides = array<i32>} : memref<2x2xf32, #tpu.memory_space<vmem>>, vector<2x2xf32>,
    return
  }
}

</mosaic_0001>

<llo_original>
// kernel: lstm_forward.1
$region0: #{lstm_forward.1}
  #allocation0 [shape = 'u32[]', space=smem, size = 0x4, offset = 0x4, fixed_abs, tag = 'smem constant byte address 0x4 - core index']
  #allocation1 [shape = 'u32[144,128]{1,0:T(1,128)}', space=vmem, size = 0x12000, scoped, tag = 'internal scratch']
  %s0 = inlined_call_operand.vmem [shape: f32[16,48], index: 0, kind: input, shape index: {}]
  %s1 = inlined_call_operand.vmem [shape: f32[48,64], index: 1, kind: input, shape index: {}]
  %s2 = inlined_call_operand.vmem [shape: f32[1,64], index: 2, kind: input, shape index: {}]
  %s3 = inlined_call_operand.vmem [shape: f32[16,64], index: 3, kind: input, shape index: {}]
  %s4 = inlined_call_operand.vmem [shape: f32[16,8], index: 4, kind: input, shape index: {}]
  %s5 = inlined_call_operand.vmem [shape: f32[2,8], index: 5, kind: input, shape index: {}]
  %s6 = inlined_call_operand.vmem [shape: f32[1,8], index: 6, kind: input, shape index: {}]
  %s7 = inlined_call_operand.vmem [shape: f32[8,2,2], index: 7, kind: input, shape index: {}]
  %s8 = inlined_call_operand.vmem [shape: f32[1,2], index: 8, kind: input, shape index: {}]
  %s9 = inlined_call_operand.hbm [shape: f32[2,2], index: 9, kind: output, shape index: {}]
  %s10 = sld [smem:[#allocation0]]
  $region46: #{lstm_forward.1} parent=0
    _
  %s12 = ssub.s32 1, %s10
  %s13 = scalar_select 0, %s12, %s10
  $region1: #{lstm_forward.1} parent=0
    #allocation2 [shape = 'u8[1024]{0}', space=vmem, size = 0x400, scoped, tag = 'output window, operand 0, single buffered']
    #allocation3 [shape = 's32[1]{0}', space=sflag, size = 0x4, scoped, tag = 'scoped memory for lstm_forward.1']
    %14 = vsyncpa [#allocation3], 0
    // Predicated region
    $region2: #{lstm_forward.1} parent=1 // pred_check
      _
    $region3: #{lstm_forward.1} parent=1 // pred_check_branch
      %16 = sbr.rel (0) target = $region5
    $region4: #{lstm_forward.1} parent=1 // pred_region
      _
    $region5: #{lstm_forward.1} parent=1 // pred_fallthru
      _
    // Predicated region
    $region6: #{lstm_forward.1} parent=1 // pred_check
      _
    $region7: #{lstm_forward.1} parent=1 // pred_check_branch
      %18 = sbr.rel (0) target = $region9
    $region8: #{lstm_forward.1} parent=1 // pred_region
      _
    $region9: #{lstm_forward.1} parent=1 // pred_fallthru
      _
    // Predicated region
    $region10: #{lstm_forward.1} parent=1 // pred_check
      _
    $region11: #{lstm_forward.1} parent=1 // pred_check_branch
      %20 = sbr.rel (0) target = $region13
    $region12: #{lstm_forward.1} parent=1 // pred_region
      _
    $region13: #{lstm_forward.1} parent=1 // pred_fallthru
      _
    // Predicated region
    $region14: #{lstm_forward.1} parent=1 // pred_check
      _
    $region15: #{lstm_forward.1} parent=1 // pred_check_branch
      %22 = sbr.rel (0) target = $region17
    $region16: #{lstm_forward.1} parent=1 // pred_region
      _
    $region17: #{lstm_forward.1} parent=1 // pred_fallthru
      _
    // Predicated region
    $region18: #{lstm_forward.1} parent=1 // pred_check
      _
    $region19: #{lstm_forward.1} parent=1 // pred_check_branch
      %24 = sbr.rel (0) target = $region21
    $region20: #{lstm_forward.1} parent=1 // pred_region
      _
    $region21: #{lstm_forward.1} parent=1 // pred_fallthru
      _
    // Predicated region
    $region22: #{lstm_forward.1} parent=1 // pred_check
      _
    $region23: #{lstm_forward.1} parent=1 // pred_check_branch
      %26 = sbr.rel (0) target = $region25
    $region24: #{lstm_forward.1} parent=1 // pred_region
      _
    $region25: #{lstm_forward.1} parent=1 // pred_fallthru
      _
    // Predicated region
    $region26: #{lstm_forward.1} parent=1 // pred_check
      _
    $region27: #{lstm_forward.1} parent=1 // pred_check_branch
      %28 = sbr.rel (0) target = $region29
    $region28: #{lstm_forward.1} parent=1 // pred_region
      _
    $region29: #{lstm_forward.1} parent=1 // pred_fallthru
      _
    // Predicated region
    $region30: #{lstm_forward.1} parent=1 // pred_check
      _
    $region31: #{lstm_forward.1} parent=1 // pred_check_branch
      %30 = sbr.rel (0) target = $region33
    $region32: #{lstm_forward.1} parent=1 // pred_region
      _
    $region33: #{lstm_forward.1} parent=1 // pred_fallthru
      _
    // Predicated region
    $region34: #{lstm_forward.1} parent=1 // pred_check
      _
    $region35: #{lstm_forward.1} parent=1 // pred_check_branch
      %32 = sbr.rel (0) target = $region37
    $region36: #{lstm_forward.1} parent=1 // pred_region
      _
    $region37: #{lstm_forward.1} parent=1 // pred_fallthru
      _
    %v33 = vld [vmem:[%s0] sm:$0xff]
    %v34 = vld [vmem:[%s0 + $0x8] sm:$0xff]
    %v35 = vld [vmem:[%s1] sm:$0xff]
    %v36 = vld [vmem:[%s1 + $0x8] sm:$0xff]
    %v37 = vld [vmem:[%s1 + $0x10] sm:$0xff]
    %v38 = vld [vmem:[%s1 + $0x18] sm:$0xff]
    %v39 = vld [vmem:[%s1 + $0x20] sm:$0xff]
    %v40 = vld [vmem:[%s1 + $0x28] sm:$0xff]
    %v41 = vld [vmem:[%s2] sm:$0x1]
    %v43 = vlaneseq
    %v44 = vshrl.u32 %v43, 7
    %v45 = vsub.s32 0, %v44
    %v46 = vrot.slane %v41, %v45
    %vm48 = vcmask 392192
    %v50 = vsel %vm48, %v33, 0
    %v53 = vsel %vm48, %v34, 0
    %55 = vmatprep.subr.mxu0 0.0
    %56 = vmatpush1.msra.mxu0 0.0
    %57 = vmatprep.subr.mxu0 0.0
    %58 = vmatpush1.msra.mxu0 0.0
    %59 = vmatprep.subr.mxu0 0.0
    %60 = vmatpush1.msra.mxu0 0.0
    %61 = vmatprep.subr.mxu0 0.0
    %62 = vmatpush1.msra.mxu0 0.0
    %63 = vmatprep.subr.mxu0 0.0
    %64 = vmatpush1.msra.mxu0 0.0
    %65 = vmatprep.subr.mxu0 0.0
    %66 = vmatpush1.msra.mxu0 0.0
    %67 = vmatprep.subr.mxu0 0.0
    %68 = vmatpush1.msra.mxu0 0.0
    %69 = vmatprep.subr.mxu0 0.0
    %70 = vmatpush1.msra.mxu0 0.0
    %71 = vmatprep.subr.mxu0 0.0
    %72 = vmatpush1.msra.mxu0 0.0
    %73 = vmatprep.subr.mxu0 0.0
    %74 = vmatpush1.msra.mxu0 0.0
    %75 = vmatprep.subr.mxu0 0.0
    %76 = vmatpush1.msra.mxu0 %v40
    %77 = vmatprep.subr.mxu0 0.0
    %78 = vmatpush1.msra.mxu0 %v39
    %79 = vmatprep.subr.mxu0 0.0
    %80 = vmatpush1.msra.mxu0 %v38
    %81 = vmatprep.subr.mxu0 0.0
    %82 = vmatpush1.msra.mxu0 %v37
    %83 = vmatprep.subr.mxu0 0.0
    %84 = vmatpush1.msra.mxu0 %v36
    %85 = vmatprep.subr.mxu0 0.0
    %86 = vmatpush1.msra.mxu0 %v35
    %87 = vmatprep.subr.mxu0 0.0
    %88 = vmatpush2.msra.mxu0 0.0
    %89 = vmatprep.subr.mxu0 0.0
    %90 = vmatpush2.msra.mxu0 0.0
    %91 = vmatprep.subr.mxu0 0.0
    %92 = vmatpush2.msra.mxu0 0.0
    %93 = vmatprep.subr.mxu0 0.0
    %94 = vmatpush2.msra.mxu0 0.0
    %95 = vmatprep.subr.mxu0 0.0
    %96 = vmatpush2.msra.mxu0 0.0
    %97 = vmatprep.subr.mxu0 0.0
    %98 = vmatpush2.msra.mxu0 0.0
    %99 = vmatprep.subr.mxu0 0.0
    %100 = vmatpush2.msra.mxu0 0.0
    %101 = vmatprep.subr.mxu0 0.0
    %102 = vmatpush2.msra.mxu0 0.0
    %103 = vmatprep.subr.mxu0 0.0
    %104 = vmatpush2.msra.mxu0 0.0
    %105 = vmatprep.subr.mxu0 0.0
    %106 = vmatpush2.msra.mxu0 0.0
    %107 = vmatprep.subr.mxu0 0.0
    %108 = vmatpush2.msra.mxu0 0.0
    %109 = vmatprep.subr.mxu0 0.0
    %110 = vmatpush2.msra.mxu0 0.0
    %111 = vmatprep.subr.mxu0 0.0
    %112 = vmatpush2.msra.mxu0 0.0
    %113 = vmatprep.subr.mxu0 0.0
    %114 = vmatpush2.msra.mxu0 0.0
    %115 = vmatprep.subr.mxu0 0.0
    %116 = vmatpush2.msra.mxu0 0.0
    %117 = vmatprep.subr.mxu0 0.0
    %118 = vmatpush2.msra.mxu0 0.0
    %119 = vmatprep.mubr.f32.mxu0 0.0
    %120 = vmatmul.mubr.f32.gmra.mxu0 %v50
    %v121 = vpop.f32.mrf.mxu0
    %v122 = vadd.f32 %v46, %v121
    %v123 = vpop.f32.mrf.mxu0
    %124 = vmatprep.mubr.f32.mxu0 0.0
    %125 = vmatmul.mubr.f32.gmra.mxu0 %v53
    %v126 = vpop.f32.mrf.mxu0
    %v127 = vadd.f32 %v46, %v126
    %v128 = vpop.f32.mrf.mxu0
    %129 = vdwg.mxu0
    %v130 = vld [vmem:[%s3] sm:$0xff]
    %v131 = vld [vmem:[%s3 + $0x8] sm:$0xff]
    %v132 = vld [vmem:[%s4] sm:$0xff]
    %v133 = vld [vmem:[%s4 + $0x8] sm:$0xff]
    %v134 = vld [vmem:[%s5] sm:$0x3]
    %v135 = vld [vmem:[%s6] sm:$0x1]
    %v137 = vlaneseq
    %v138 = vshrl.u32 %v137, 7
    %v139 = vsub.s32 0, %v138
    %v140 = vrot.slane %v135, %v139
    %v142 = vld [vmem:[%s8] sm:$0x1]
    %v144 = vlaneseq
    %v145 = vshrl.u32 %v144, 7
    %v146 = vsub.s32 0, %v145
    %v147 = vrot.slane %v142, %v146
    %vm149 = vcmask 130048
    %v151 = vsel %vm149, 0.0, 0
    %153 = vmatprep.subr.mxu0 0.0
    %154 = vmatpush1.msra.mxu0 0.0
    %155 = vmatprep.subr.mxu0 0.0
    %156 = vmatpush1.msra.mxu0 0.0
    %157 = vmatprep.subr.mxu0 0.0
    %158 = vmatpush1.msra.mxu0 0.0
    %159 = vmatprep.subr.mxu0 0.0
    %160 = vmatpush1.msra.mxu0 0.0
    %161 = vmatprep.subr.mxu0 0.0
    %162 = vmatpush1.msra.mxu0 0.0
    %163 = vmatprep.subr.mxu0 0.0
    %164 = vmatpush1.msra.mxu0 0.0
    %165 = vmatprep.subr.mxu0 0.0
    %166 = vmatpush1.msra.mxu0 0.0
    %167 = vmatprep.subr.mxu0 0.0
    %168 = vmatpush1.msra.mxu0 0.0
    %169 = vmatprep.subr.mxu0 0.0
    %170 = vmatpush1.msra.mxu0 0.0
    %171 = vmatprep.subr.mxu0 0.0
    %172 = vmatpush1.msra.mxu0 0.0
    %173 = vmatprep.subr.mxu0 0.0
    %174 = vmatpush1.msra.mxu0 0.0
    %175 = vmatprep.subr.mxu0 0.0
    %176 = vmatpush1.msra.mxu0 0.0
    %177 = vmatprep.subr.mxu0 0.0
    %178 = vmatpush1.msra.mxu0 0.0
    %179 = vmatprep.subr.mxu0 0.0
    %180 = vmatpush1.msra.mxu0 0.0
    %181 = vmatprep.subr.mxu0 0.0
    %182 = vmatpush1.msra.mxu0 %v131
    %183 = vmatprep.subr.mxu0 0.0
    %184 = vmatpush1.msra.mxu0 %v130
    %185 = vmatprep.subr.mxu0 0.0
    %186 = vmatpush2.msra.mxu0 0.0
    %187 = vmatprep.subr.mxu0 0.0
    %188 = vmatpush2.msra.mxu0 0.0
    %189 = vmatprep.subr.mxu0 0.0
    %190 = vmatpush2.msra.mxu0 0.0
    %191 = vmatprep.subr.mxu0 0.0
    %192 = vmatpush2.msra.mxu0 0.0
    %193 = vmatprep.subr.mxu0 0.0
    %194 = vmatpush2.msra.mxu0 0.0
    %195 = vmatprep.subr.mxu0 0.0
    %196 = vmatpush2.msra.mxu0 0.0
    %197 = vmatprep.subr.mxu0 0.0
    %198 = vmatpush2.msra.mxu0 0.0
    %199 = vmatprep.subr.mxu0 0.0
    %200 = vmatpush2.msra.mxu0 0.0
    %201 = vmatprep.subr.mxu0 0.0
    %202 = vmatpush2.msra.mxu0 0.0
    %203 = vmatprep.subr.mxu0 0.0
    %204 = vmatpush2.msra.mxu0 0.0
    %205 = vmatprep.subr.mxu0 0.0
    %206 = vmatpush2.msra.mxu0 0.0
    %207 = vmatprep.subr.mxu0 0.0
    %208 = vmatpush2.msra.mxu0 0.0
    %209 = vmatprep.subr.mxu0 0.0
    %210 = vmatpush2.msra.mxu0 0.0
    %211 = vmatprep.subr.mxu0 0.0
    %212 = vmatpush2.msra.mxu0 0.0
    %213 = vmatprep.subr.mxu0 0.0
    %214 = vmatpush2.msra.mxu0 0.0
    %215 = vmatprep.subr.mxu0 0.0
    %216 = vmatpush2.msra.mxu0 0.0
    %217 = vmatprep.mubr.f32.mxu0 0.0
    %218 = vmatmul.mubr.f32.gmra.mxu0 %v151
    %v219 = vpop.f32.mrf.mxu0
    %v220 = vadd.f32 0.0, %v219
    %v221 = vpop.f32.mrf.mxu0
    %222 = vdwg.mxu0
    %v223 = vadd.f32 %v122, %v220
    %v224 = vmul.f32 %v223, 0.5
    %v225 = vtanh.pop %v224
    %v226 = vmul.f32 %v225, 0.5
    %v227 = vadd.f32 %v226, 0.5
    %v228 = vtanh.pop %v223
    %v229 = vmul.f32 %v227, 0.0
    %231 = vrot.lane.b32.xlu0 %v228, 96
    %v232 = vpop.permute.xlu0 %231
    %v234 = vmul.f32 %v227, %v232
    %236 = vrot.lane.b32.xlu0 %v234, 16
    %v237 = vpop.permute.xlu0 %236
    %v239 = vadd.f32 %v229, %v237
    %v240 = vtanh.pop %v239
    %242 = vrot.lane.b32.xlu0 %v240, 32
    %v243 = vpop.permute.xlu0 %242
    %v245 = vmul.f32 %v227, %v243
    %247 = vrot.lane.b32.xlu0 %v245, 80
    %v248 = vpop.permute.xlu0 %247
    %v249 = vsel %vm149, %v248, 0
    %251 = vmatprep.subr.mxu0 0.0
    %252 = vmatpush1.msra.mxu0 0.0
    %253 = vmatprep.subr.mxu0 0.0
    %254 = vmatpush1.msra.mxu0 0.0
    %255 = vmatprep.subr.mxu0 0.0
    %256 = vmatpush1.msra.mxu0 0.0
    %257 = vmatprep.subr.mxu0 0.0
    %258 = vmatpush1.msra.mxu0 0.0
    %259 = vmatprep.subr.mxu0 0.0
    %260 = vmatpush1.msra.mxu0 0.0
    %261 = vmatprep.subr.mxu0 0.0
    %262 = vmatpush1.msra.mxu0 0.0
    %263 = vmatprep.subr.mxu0 0.0
    %264 = vmatpush1.msra.mxu0 0.0
    %265 = vmatprep.subr.mxu0 0.0
    %266 = vmatpush1.msra.mxu0 0.0
    %267 = vmatprep.subr.mxu0 0.0
    %268 = vmatpush1.msra.mxu0 0.0
    %269 = vmatprep.subr.mxu0 0.0
    %270 = vmatpush1.msra.mxu0 0.0
    %271 = vmatprep.subr.mxu0 0.0
    %272 = vmatpush1.msra.mxu0 0.0
    %273 = vmatprep.subr.mxu0 0.0
    %274 = vmatpush1.msra.mxu0 0.0
    %275 = vmatprep.subr.mxu0 0.0
    %276 = vmatpush1.msra.mxu0 0.0
    %277 = vmatprep.subr.mxu0 0.0
    %278 = vmatpush1.msra.mxu0 0.0
    %279 = vmatprep.subr.mxu0 0.0
    %280 = vmatpush1.msra.mxu0 %v133
    %281 = vmatprep.subr.mxu0 0.0
    %282 = vmatpush1.msra.mxu0 %v132
    %283 = vmatprep.subr.mxu0 0.0
    %284 = vmatpush2.msra.mxu0 0.0
    %285 = vmatprep.subr.mxu0 0.0
    %286 = vmatpush2.msra.mxu0 0.0
    %287 = vmatprep.subr.mxu0 0.0
    %288 = vmatpush2.msra.mxu0 0.0
    %289 = vmatprep.subr.mxu0 0.0
    %290 = vmatpush2.msra.mxu0 0.0
    %291 = vmatprep.subr.mxu0 0.0
    %292 = vmatpush2.msra.mxu0 0.0
    %293 = vmatprep.subr.mxu0 0.0
    %294 = vmatpush2.msra.mxu0 0.0
    %295 = vmatprep.subr.mxu0 0.0
    %296 = vmatpush2.msra.mxu0 0.0
    %297 = vmatprep.subr.mxu0 0.0
    %298 = vmatpush2.msra.mxu0 0.0
    %299 = vmatprep.subr.mxu0 0.0
    %300 = vmatpush2.msra.mxu0 0.0
    %301 = vmatprep.subr.mxu0 0.0
    %302 = vmatpush2.msra.mxu0 0.0
    %303 = vmatprep.subr.mxu0 0.0
    %304 = vmatpush2.msra.mxu0 0.0
    %305 = vmatprep.subr.mxu0 0.0
    %306 = vmatpush2.msra.mxu0 0.0
    %307 = vmatprep.subr.mxu0 0.0
    %308 = vmatpush2.msra.mxu0 0.0
    %309 = vmatprep.subr.mxu0 0.0
    %310 = vmatpush2.msra.mxu0 0.0
    %311 = vmatprep.subr.mxu0 0.0
    %312 = vmatpush2.msra.mxu0 0.0
    %313 = vmatprep.subr.mxu0 0.0
    %314 = vmatpush2.msra.mxu0 0.0
    %315 = vmatprep.mubr.f32.mxu0 0.0
    %316 = vmatmul.mubr.f32.gmra.mxu0 %v249
    %v317 = vpop.f32.mrf.mxu0
    %v318 = vadd.f32 %v140, %v317
    %v319 = vpop.f32.mrf.mxu0
    %320 = vdwg.mxu0
    %v321 = vmul.f32 %v318, 0.5
    %v322 = vtanh.pop %v321
    %v323 = vmul.f32 %v322, 0.5
    %v324 = vadd.f32 %v323, 0.5
    %v325 = vtanh.pop %v318
    %v326 = vmul.f32 %v324, 0.0
    %328 = vrot.lane.b32.xlu0 %v325, 124
    %v329 = vpop.permute.xlu0 %328
    %v331 = vmul.f32 %v324, %v329
    %333 = vrot.lane.b32.xlu0 %v331, 2
    %v334 = vpop.permute.xlu0 %333
    %v336 = vadd.f32 %v326, %v334
    %v337 = vtanh.pop %v336
    %339 = vrot.lane.b32.xlu0 %v337, 4
    %v340 = vpop.permute.xlu0 %339
    %v342 = vmul.f32 %v324, %v340
    %344 = vrot.lane.b32.xlu0 %v342, 122
    %v345 = vpop.permute.xlu0 %344
    %vm346 = vcmask 15360
    %v347 = vsel %vm346, %v345, 0
    %vm349 = vcmask 1041408
    %v351 = vsel %vm349, %v134, 0
    %353 = vmatprep.subr.mxu0 0.0
    %354 = vmatpush1.msra.mxu0 0.0
    %355 = vmatprep.subr.mxu0 0.0
    %356 = vmatpush1.msra.mxu0 0.0
    %357 = vmatprep.subr.mxu0 0.0
    %358 = vmatpush1.msra.mxu0 0.0
    %359 = vmatprep.subr.mxu0 0.0
    %360 = vmatpush1.msra.mxu0 0.0
    %361 = vmatprep.subr.mxu0 0.0
    %362 = vmatpush1.msra.mxu0 0.0
    %363 = vmatprep.subr.mxu0 0.0
    %364 = vmatpush1.msra.mxu0 0.0
    %365 = vmatprep.subr.mxu0 0.0
    %366 = vmatpush1.msra.mxu0 0.0
    %367 = vmatprep.subr.mxu0 0.0
    %368 = vmatpush1.msra.mxu0 0.0
    %369 = vmatprep.subr.mxu0 0.0
    %370 = vmatpush1.msra.mxu0 0.0
    %371 = vmatprep.subr.mxu0 0.0
    %372 = vmatpush1.msra.mxu0 0.0
    %373 = vmatprep.subr.mxu0 0.0
    %374 = vmatpush1.msra.mxu0 0.0
    %375 = vmatprep.subr.mxu0 0.0
    %376 = vmatpush1.msra.mxu0 0.0
    %377 = vmatprep.subr.mxu0 0.0
    %378 = vmatpush1.msra.mxu0 0.0
    %379 = vmatprep.subr.mxu0 0.0
    %380 = vmatpush1.msra.mxu0 0.0
    %381 = vmatprep.subr.mxu0 0.0
    %382 = vmatpush1.msra.mxu0 0.0
    %383 = vmatprep.subr.mxu0 0.0
    %384 = vmatpush1.msra.mxu0 %v351
    %385 = vmatprep.subr.mxu0 0.0
    %386 = vmatpush2.msra.mxu0 0.0
    %387 = vmatprep.subr.mxu0 0.0
    %388 = vmatpush2.msra.mxu0 0.0
    %389 = vmatprep.subr.mxu0 0.0
    %390 = vmatpush2.msra.mxu0 0.0
    %391 = vmatprep.subr.mxu0 0.0
    %392 = vmatpush2.msra.mxu0 0.0
    %393 = vmatprep.subr.mxu0 0.0
    %394 = vmatpush2.msra.mxu0 0.0
    %395 = vmatprep.subr.mxu0 0.0
    %396 = vmatpush2.msra.mxu0 0.0
    %397 = vmatprep.subr.mxu0 0.0
    %398 = vmatpush2.msra.mxu0 0.0
    %399 = vmatprep.subr.mxu0 0.0
    %400 = vmatpush2.msra.mxu0 0.0
    %401 = vmatprep.subr.mxu0 0.0
    %402 = vmatpush2.msra.mxu0 0.0
    %403 = vmatprep.subr.mxu0 0.0
    %404 = vmatpush2.msra.mxu0 0.0
    %405 = vmatprep.subr.mxu0 0.0
    %406 = vmatpush2.msra.mxu0 0.0
    %407 = vmatprep.subr.mxu0 0.0
    %408 = vmatpush2.msra.mxu0 0.0
    %409 = vmatprep.subr.mxu0 0.0
    %410 = vmatpush2.msra.mxu0 0.0
    %411 = vmatprep.subr.mxu0 0.0
    %412 = vmatpush2.msra.mxu0 0.0
    %413 = vmatprep.subr.mxu0 0.0
    %414 = vmatpush2.msra.mxu0 0.0
    %415 = vmatprep.subr.mxu0 0.0
    %416 = vmatpush2.msra.mxu0 0.0
    %417 = vmatprep.mubr.f32.mxu0 0.0
    %418 = vmatmul.mubr.f32.gmra.mxu0 %v347
    %v419 = vpop.f32.mrf.mxu0
    %v420 = vadd.f32 %v140, %v419
    %v421 = vpop.f32.mrf.mxu0
    %422 = vdwg.mxu0
    %v423 = vld [vmem:[%s7] sm:$0x3]
    %v425 = vsel %vm349, %v423, 0
    %427 = vmatprep.subr.mxu0 0.0
    %428 = vmatpush1.msra.mxu0 0.0
    %429 = vmatprep.subr.mxu0 0.0
    %430 = vmatpush1.msra.mxu0 0.0
    %431 = vmatprep.subr.mxu0 0.0
    %432 = vmatpush1.msra.mxu0 0.0
    %433 = vmatprep.subr.mxu0 0.0
    %434 = vmatpush1.msra.mxu0 0.0
    %435 = vmatprep.subr.mxu0 0.0
    %436 = vmatpush1.msra.mxu0 0.0
    %437 = vmatprep.subr.mxu0 0.0
    %438 = vmatpush1.msra.mxu0 0.0
    %439 = vmatprep.subr.mxu0 0.0
    %440 = vmatpush1.msra.mxu0 0.0
    %441 = vmatprep.subr.mxu0 0.0
    %442 = vmatpush1.msra.mxu0 0.0
    %443 = vmatprep.subr.mxu0 0.0
    %444 = vmatpush1.msra.mxu0 0.0
    %445 = vmatprep.subr.mxu0 0.0
    %446 = vmatpush1.msra.mxu0 0.0
    %447 = vmatprep.subr.mxu0 0.0
    %448 = vmatpush1.msra.mxu0 0.0
    %449 = vmatprep.subr.mxu0 0.0
    %450 = vmatpush1.msra.mxu0 0.0
    %451 = vmatprep.subr.mxu0 0.0
    %452 = vmatpush1.msra.mxu0 0.0
    %453 = vmatprep.subr.mxu0 0.0
    %454 = vmatpush1.msra.mxu0 0.0
    %455 = vmatprep.subr.mxu0 0.0
    %456 = vmatpush1.msra.mxu0 0.0
    %457 = vmatprep.subr.mxu0 0.0
    %458 = vmatpush1.msra.mxu0 %v425
    %459 = vmatprep.subr.mxu0 0.0
    %460 = vmatpush2.msra.mxu0 0.0
    %461 = vmatprep.subr.mxu0 0.0
    %462 = vmatpush2.msra.mxu0 0.0
    %463 = vmatprep.subr.mxu0 0.0
    %464 = vmatpush2.msra.mxu0 0.0
    %465 = vmatprep.subr.mxu0 0.0
    %466 = vmatpush2.msra.mxu0 0.0
    %467 = vmatprep.subr.mxu0 0.0
    %468 = vmatpush2.msra.mxu0 0.0
    %469 = vmatprep.subr.mxu0 0.0
    %470 = vmatpush2.msra.mxu0 0.0
    %471 = vmatprep.subr.mxu0 0.0
    %472 = vmatpush2.msra.mxu0 0.0
    %473 = vmatprep.subr.mxu0 0.0
    %474 = vmatpush2.msra.mxu0 0.0
    %475 = vmatprep.subr.mxu0 0.0
    %476 = vmatpush2.msra.mxu0 0.0
    %477 = vmatprep.subr.mxu0 0.0
    %478 = vmatpush2.msra.mxu0 0.0
    %479 = vmatprep.subr.mxu0 0.0
    %480 = vmatpush2.msra.mxu0 0.0
    %481 = vmatprep.subr.mxu0 0.0
    %482 = vmatpush2.msra.mxu0 0.0
    %483 = vmatprep.subr.mxu0 0.0
    %484 = vmatpush2.msra.mxu0 0.0
    %485 = vmatprep.subr.mxu0 0.0
    %486 = vmatpush2.msra.mxu0 0.0
    %487 = vmatprep.subr.mxu0 0.0
    %488 = vmatpush2.msra.mxu0 0.0
    %489 = vmatprep.subr.mxu0 0.0
    %490 = vmatpush2.msra.mxu0 0.0
    %491 = vmatprep.mubr.f32.mxu0 0.0
    %492 = vmatmul.mubr.f32.gmra.mxu0 %v347
    %v493 = vpop.f32.mrf.mxu0
    %v494 = vadd.f32 0.0, %v493
    %v495 = vpop.f32.mrf.mxu0
    %496 = vdwg.mxu0
    %v497 = vadd.f32 %v147, %v494
    %498 = vmatprep.subr.mxu0 0.0
    %499 = vmatpush1.msra.mxu0 0.0
    %500 = vmatprep.subr.mxu0 0.0
    %501 = vmatpush1.msra.mxu0 0.0
    %502 = vmatprep.subr.mxu0 0.0
    %503 = vmatpush1.msra.mxu0 0.0
    %504 = vmatprep.subr.mxu0 0.0
    %505 = vmatpush1.msra.mxu0 0.0
    %506 = vmatprep.subr.mxu0 0.0
    %507 = vmatpush1.msra.mxu0 0.0
    %508 = vmatprep.subr.mxu0 0.0
    %509 = vmatpush1.msra.mxu0 0.0
    %510 = vmatprep.subr.mxu0 0.0
    %511 = vmatpush1.msra.mxu0 0.0
    %512 = vmatprep.subr.mxu0 0.0
    %513 = vmatpush1.msra.mxu0 0.0
    %514 = vmatprep.subr.mxu0 0.0
    %515 = vmatpush1.msra.mxu0 0.0
    %516 = vmatprep.subr.mxu0 0.0
    %517 = vmatpush1.msra.mxu0 0.0
    %518 = vmatprep.subr.mxu0 0.0
    %519 = vmatpush1.msra.mxu0 0.0
    %520 = vmatprep.subr.mxu0 0.0
    %521 = vmatpush1.msra.mxu0 0.0
    %522 = vmatprep.subr.mxu0 0.0
    %523 = vmatpush1.msra.mxu0 0.0
    %524 = vmatprep.subr.mxu0 0.0
    %525 = vmatpush1.msra.mxu0 0.0
    %526 = vmatprep.subr.mxu0 0.0
    %527 = vmatpush1.msra.mxu0 %v131
    %528 = vmatprep.subr.mxu0 0.0
    %529 = vmatpush1.msra.mxu0 %v130
    %530 = vmatprep.subr.mxu0 0.0
    %531 = vmatpush2.msra.mxu0 0.0
    %532 = vmatprep.subr.mxu0 0.0
    %533 = vmatpush2.msra.mxu0 0.0
    %534 = vmatprep.subr.mxu0 0.0
    %535 = vmatpush2.msra.mxu0 0.0
    %536 = vmatprep.subr.mxu0 0.0
    %537 = vmatpush2.msra.mxu0 0.0
    %538 = vmatprep.subr.mxu0 0.0
    %539 = vmatpush2.msra.mxu0 0.0
    %540 = vmatprep.subr.mxu0 0.0
    %541 = vmatpush2.msra.mxu0 0.0
    %542 = vmatprep.subr.mxu0 0.0
    %543 = vmatpush2.msra.mxu0 0.0
    %544 = vmatprep.subr.mxu0 0.0
    %545 = vmatpush2.msra.mxu0 0.0
    %546 = vmatprep.subr.mxu0 0.0
    %547 = vmatpush2.msra.mxu0 0.0
    %548 = vmatprep.subr.mxu0 0.0
    %549 = vmatpush2.msra.mxu0 0.0
    %550 = vmatprep.subr.mxu0 0.0
    %551 = vmatpush2.msra.mxu0 0.0
    %552 = vmatprep.subr.mxu0 0.0
    %553 = vmatpush2.msra.mxu0 0.0
    %554 = vmatprep.subr.mxu0 0.0
    %555 = vmatpush2.msra.mxu0 0.0
    %556 = vmatprep.subr.mxu0 0.0
    %557 = vmatpush2.msra.mxu0 0.0
    %558 = vmatprep.subr.mxu0 0.0
    %559 = vmatpush2.msra.mxu0 0.0
    %560 = vmatprep.subr.mxu0 0.0
    %561 = vmatpush2.msra.mxu0 0.0
    %562 = vmatprep.mubr.f32.mxu0 0.0
    %563 = vmatmul.mubr.f32.gmra.mxu0 %v249
    %v564 = vpop.f32.mrf.mxu0
    %v565 = vadd.f32 0.0, %v564
    %v566 = vpop.f32.mrf.mxu0
    %567 = vdwg.mxu0
    %v569 = vrot.slane %v565, 6
    %v571 = vadd.f32 %v122, %v569
    %v572 = vmul.f32 %v571, 0.5
    %v573 = vtanh.pop %v572
    %v574 = vmul.f32 %v573, 0.5
    %v575 = vadd.f32 %v574, 0.5
    %v576 = vtanh.pop %v571
    %v578 = vrot.slane %v239, 6
    %v580 = vmul.f32 %v575, %v578
    %582 = vrot.lane.b32.xlu0 %v576, 96
    %v583 = vpop.permute.xlu0 %582
    %v585 = vmul.f32 %v575, %v583
    %587 = vrot.lane.b32.xlu0 %v585, 16
    %v588 = vpop.permute.xlu0 %587
    %v590 = vadd.f32 %v580, %v588
    %v591 = vtanh.pop %v590
    %593 = vrot.lane.b32.xlu0 %v591, 32
    %v594 = vpop.permute.xlu0 %593
    %v596 = vmul.f32 %v575, %v594
    %v598 = vrot.slane %v596, 2
    %599 = vrot.lane.b32.xlu0 %v598, 80
    %v600 = vpop.permute.xlu0 %599
    %v601 = vsel %vm149, %v600, 0
    %603 = vmatprep.subr.mxu0 0.0
    %604 = vmatpush1.msra.mxu0 0.0
    %605 = vmatprep.subr.mxu0 0.0
    %606 = vmatpush1.msra.mxu0 0.0
    %607 = vmatprep.subr.mxu0 0.0
    %608 = vmatpush1.msra.mxu0 0.0
    %609 = vmatprep.subr.mxu0 0.0
    %610 = vmatpush1.msra.mxu0 0.0
    %611 = vmatprep.subr.mxu0 0.0
    %612 = vmatpush1.msra.mxu0 0.0
    %613 = vmatprep.subr.mxu0 0.0
    %614 = vmatpush1.msra.mxu0 0.0
    %615 = vmatprep.subr.mxu0 0.0
    %616 = vmatpush1.msra.mxu0 0.0
    %617 = vmatprep.subr.mxu0 0.0
    %618 = vmatpush1.msra.mxu0 0.0
    %619 = vmatprep.subr.mxu0 0.0
    %620 = vmatpush1.msra.mxu0 0.0
    %621 = vmatprep.subr.mxu0 0.0
    %622 = vmatpush1.msra.mxu0 0.0
    %623 = vmatprep.subr.mxu0 0.0
    %624 = vmatpush1.msra.mxu0 0.0
    %625 = vmatprep.subr.mxu0 0.0
    %626 = vmatpush1.msra.mxu0 0.0
    %627 = vmatprep.subr.mxu0 0.0
    %628 = vmatpush1.msra.mxu0 0.0
    %629 = vmatprep.subr.mxu0 0.0
    %630 = vmatpush1.msra.mxu0 0.0
    %631 = vmatprep.subr.mxu0 0.0
    %632 = vmatpush1.msra.mxu0 %v133
    %633 = vmatprep.subr.mxu0 0.0
    %634 = vmatpush1.msra.mxu0 %v132
    %635 = vmatprep.subr.mxu0 0.0
    %636 = vmatpush2.msra.mxu0 0.0
    %637 = vmatprep.subr.mxu0 0.0
    %638 = vmatpush2.msra.mxu0 0.0
    %639 = vmatprep.subr.mxu0 0.0
    %640 = vmatpush2.msra.mxu0 0.0
    %641 = vmatprep.subr.mxu0 0.0
    %642 = vmatpush2.msra.mxu0 0.0
    %643 = vmatprep.subr.mxu0 0.0
    %644 = vmatpush2.msra.mxu0 0.0
    %645 = vmatprep.subr.mxu0 0.0
    %646 = vmatpush2.msra.mxu0 0.0
    %647 = vmatprep.subr.mxu0 0.0
    %648 = vmatpush2.msra.mxu0 0.0
    %649 = vmatprep.subr.mxu0 0.0
    %650 = vmatpush2.msra.mxu0 0.0
    %651 = vmatprep.subr.mxu0 0.0
    %652 = vmatpush2.msra.mxu0 0.0
    %653 = vmatprep.subr.mxu0 0.0
    %654 = vmatpush2.msra.mxu0 0.0
    %655 = vmatprep.subr.mxu0 0.0
    %656 = vmatpush2.msra.mxu0 0.0
    %657 = vmatprep.subr.mxu0 0.0
    %658 = vmatpush2.msra.mxu0 0.0
    %659 = vmatprep.subr.mxu0 0.0
    %660 = vmatpush2.msra.mxu0 0.0
    %661 = vmatprep.subr.mxu0 0.0
    %662 = vmatpush2.msra.mxu0 0.0
    %663 = vmatprep.subr.mxu0 0.0
    %664 = vmatpush2.msra.mxu0 0.0
    %665 = vmatprep.subr.mxu0 0.0
    %666 = vmatpush2.msra.mxu0 0.0
    %667 = vmatprep.mubr.f32.mxu0 0.0
    %668 = vmatmul.mubr.f32.gmra.mxu0 %v601
    %v669 = vpop.f32.mrf.mxu0
    %v670 = vadd.f32 %v420, %v669
    %v671 = vpop.f32.mrf.mxu0
    %672 = vdwg.mxu0
    %v673 = vmul.f32 %v670, 0.5
    %v674 = vtanh.pop %v673
    %v675 = vmul.f32 %v674, 0.5
    %v676 = vadd.f32 %v675, 0.5
    %v677 = vtanh.pop %v670
    %v678 = vmul.f32 %v676, %v336
    %680 = vrot.lane.b32.xlu0 %v677, 124
    %v681 = vpop.permute.xlu0 %680
    %v683 = vmul.f32 %v676, %v681
    %685 = vrot.lane.b32.xlu0 %v683, 2
    %v686 = vpop.permute.xlu0 %685
    %v688 = vadd.f32 %v678, %v686
    %v689 = vtanh.pop %v688
    %691 = vrot.lane.b32.xlu0 %v689, 4
    %v692 = vpop.permute.xlu0 %691
    %v694 = vmul.f32 %v676, %v692
    %696 = vrot.lane.b32.xlu0 %v694, 122
    %v697 = vpop.permute.xlu0 %696
    %v698 = vsel %vm346, %v697, 0
    %700 = vmatprep.subr.mxu0 0.0
    %701 = vmatpush1.msra.mxu0 0.0
    %702 = vmatprep.subr.mxu0 0.0
    %703 = vmatpush1.msra.mxu0 0.0
    %704 = vmatprep.subr.mxu0 0.0
    %705 = vmatpush1.msra.mxu0 0.0
    %706 = vmatprep.subr.mxu0 0.0
    %707 = vmatpush1.msra.mxu0 0.0
    %708 = vmatprep.subr.mxu0 0.0
    %709 = vmatpush1.msra.mxu0 0.0
    %710 = vmatprep.subr.mxu0 0.0
    %711 = vmatpush1.msra.mxu0 0.0
    %712 = vmatprep.subr.mxu0 0.0
    %713 = vmatpush1.msra.mxu0 0.0
    %714 = vmatprep.subr.mxu0 0.0
    %715 = vmatpush1.msra.mxu0 0.0
    %716 = vmatprep.subr.mxu0 0.0
    %717 = vmatpush1.msra.mxu0 0.0
    %718 = vmatprep.subr.mxu0 0.0
    %719 = vmatpush1.msra.mxu0 0.0
    %720 = vmatprep.subr.mxu0 0.0
    %721 = vmatpush1.msra.mxu0 0.0
    %722 = vmatprep.subr.mxu0 0.0
    %723 = vmatpush1.msra.mxu0 0.0
    %724 = vmatprep.subr.mxu0 0.0
    %725 = vmatpush1.msra.mxu0 0.0
    %726 = vmatprep.subr.mxu0 0.0
    %727 = vmatpush1.msra.mxu0 0.0
    %728 = vmatprep.subr.mxu0 0.0
    %729 = vmatpush1.msra.mxu0 0.0
    %730 = vmatprep.subr.mxu0 0.0
    %731 = vmatpush1.msra.mxu0 %v351
    %732 = vmatprep.subr.mxu0 0.0
    %733 = vmatpush2.msra.mxu0 0.0
    %734 = vmatprep.subr.mxu0 0.0
    %735 = vmatpush2.msra.mxu0 0.0
    %736 = vmatprep.subr.mxu0 0.0
    %737 = vmatpush2.msra.mxu0 0.0
    %738 = vmatprep.subr.mxu0 0.0
    %739 = vmatpush2.msra.mxu0 0.0
    %740 = vmatprep.subr.mxu0 0.0
    %741 = vmatpush2.msra.mxu0 0.0
    %742 = vmatprep.subr.mxu0 0.0
    %743 = vmatpush2.msra.mxu0 0.0
    %744 = vmatprep.subr.mxu0 0.0
    %745 = vmatpush2.msra.mxu0 0.0
    %746 = vmatprep.subr.mxu0 0.0
    %747 = vmatpush2.msra.mxu0 0.0
    %748 = vmatprep.subr.mxu0 0.0
    %749 = vmatpush2.msra.mxu0 0.0
    %750 = vmatprep.subr.mxu0 0.0
    %751 = vmatpush2.msra.mxu0 0.0
    %752 = vmatprep.subr.mxu0 0.0
    %753 = vmatpush2.msra.mxu0 0.0
    %754 = vmatprep.subr.mxu0 0.0
    %755 = vmatpush2.msra.mxu0 0.0
    %756 = vmatprep.subr.mxu0 0.0
    %757 = vmatpush2.msra.mxu0 0.0
    %758 = vmatprep.subr.mxu0 0.0
    %759 = vmatpush2.msra.mxu0 0.0
    %760 = vmatprep.subr.mxu0 0.0
    %761 = vmatpush2.msra.mxu0 0.0
    %762 = vmatprep.subr.mxu0 0.0
    %763 = vmatpush2.msra.mxu0 0.0
    %764 = vmatprep.mubr.f32.mxu0 0.0
    %765 = vmatmul.mubr.f32.gmra.mxu0 %v698
    %v766 = vpop.f32.mrf.mxu0
    %v767 = vadd.f32 %v140, %v766
    %v768 = vpop.f32.mrf.mxu0
    %769 = vdwg.mxu0
    %s770 = scalar_lea.vmem %s7, 2
    %v771 = vld [vmem:[%s770] sm:$0x3]
    %v773 = vsel %vm349, %v771, 0
    %775 = vmatprep.subr.mxu0 0.0
    %776 = vmatpush1.msra.mxu0 0.0
    %777 = vmatprep.subr.mxu0 0.0
    %778 = vmatpush1.msra.mxu0 0.0
    %779 = vmatprep.subr.mxu0 0.0
    %780 = vmatpush1.msra.mxu0 0.0
    %781 = vmatprep.subr.mxu0 0.0
    %782 = vmatpush1.msra.mxu0 0.0
    %783 = vmatprep.subr.mxu0 0.0
    %784 = vmatpush1.msra.mxu0 0.0
    %785 = vmatprep.subr.mxu0 0.0
    %786 = vmatpush1.msra.mxu0 0.0
    %787 = vmatprep.subr.mxu0 0.0
    %788 = vmatpush1.msra.mxu0 0.0
    %789 = vmatprep.subr.mxu0 0.0
    %790 = vmatpush1.msra.mxu0 0.0
    %791 = vmatprep.subr.mxu0 0.0
    %792 = vmatpush1.msra.mxu0 0.0
    %793 = vmatprep.subr.mxu0 0.0
    %794 = vmatpush1.msra.mxu0 0.0
    %795 = vmatprep.subr.mxu0 0.0
    %796 = vmatpush1.msra.mxu0 0.0
    %797 = vmatprep.subr.mxu0 0.0
    %798 = vmatpush1.msra.mxu0 0.0
    %799 = vmatprep.subr.mxu0 0.0
    %800 = vmatpush1.msra.mxu0 0.0
    %801 = vmatprep.subr.mxu0 0.0
    %802 = vmatpush1.msra.mxu0 0.0
    %803 = vmatprep.subr.mxu0 0.0
    %804 = vmatpush1.msra.mxu0 0.0
    %805 = vmatprep.subr.mxu0 0.0
    %806 = vmatpush1.msra.mxu0 %v773
    %807 = vmatprep.subr.mxu0 0.0
    %808 = vmatpush2.msra.mxu0 0.0
    %809 = vmatprep.subr.mxu0 0.0
    %810 = vmatpush2.msra.mxu0 0.0
    %811 = vmatprep.subr.mxu0 0.0
    %812 = vmatpush2.msra.mxu0 0.0
    %813 = vmatprep.subr.mxu0 0.0
    %814 = vmatpush2.msra.mxu0 0.0
    %815 = vmatprep.subr.mxu0 0.0
    %816 = vmatpush2.msra.mxu0 0.0
    %817 = vmatprep.subr.mxu0 0.0
    %818 = vmatpush2.msra.mxu0 0.0
    %819 = vmatprep.subr.mxu0 0.0
    %820 = vmatpush2.msra.mxu0 0.0
    %821 = vmatprep.subr.mxu0 0.0
    %822 = vmatpush2.msra.mxu0 0.0
    %823 = vmatprep.subr.mxu0 0.0
    %824 = vmatpush2.msra.mxu0 0.0
    %825 = vmatprep.subr.mxu0 0.0
    %826 = vmatpush2.msra.mxu0 0.0
    %827 = vmatprep.subr.mxu0 0.0
    %828 = vmatpush2.msra.mxu0 0.0
    %829 = vmatprep.subr.mxu0 0.0
    %830 = vmatpush2.msra.mxu0 0.0
    %831 = vmatprep.subr.mxu0 0.0
    %832 = vmatpush2.msra.mxu0 0.0
    %833 = vmatprep.subr.mxu0 0.0
    %834 = vmatpush2.msra.mxu0 0.0
    %835 = vmatprep.subr.mxu0 0.0
    %836 = vmatpush2.msra.mxu0 0.0
    %837 = vmatprep.subr.mxu0 0.0
    %838 = vmatpush2.msra.mxu0 0.0
    %839 = vmatprep.mubr.f32.mxu0 0.0
    %840 = vmatmul.mubr.f32.gmra.mxu0 %v698
    %v841 = vpop.f32.mrf.mxu0
    %v842 = vadd.f32 0.0, %v841
    %v843 = vpop.f32.mrf.mxu0
    %844 = vdwg.mxu0
    %v845 = vadd.f32 %v497, %v842
    %846 = vmatprep.subr.mxu0 0.0
    %847 = vmatpush1.msra.mxu0 0.0
    %848 = vmatprep.subr.mxu0 0.0
    %849 = vmatpush1.msra.mxu0 0.0
    %850 = vmatprep.subr.mxu0 0.0
    %851 = vmatpush1.msra.mxu0 0.0
    %852 = vmatprep.subr.mxu0 0.0
    %853 = vmatpush1.msra.mxu0 0.0
    %854 = vmatprep.subr.mxu0 0.0
    %855 = vmatpush1.msra.mxu0 0.0
    %856 = vmatprep.subr.mxu0 0.0
    %857 = vmatpush1.msra.mxu0 0.0
    %858 = vmatprep.subr.mxu0 0.0
    %859 = vmatpush1.msra.mxu0 0.0
    %860 = vmatprep.subr.mxu0 0.0
    %861 = vmatpush1.msra.mxu0 0.0
    %862 = vmatprep.subr.mxu0 0.0
    %863 = vmatpush1.msra.mxu0 0.0
    %864 = vmatprep.subr.mxu0 0.0
    %865 = vmatpush1.msra.mxu0 0.0
    %866 = vmatprep.subr.mxu0 0.0
    %867 = vmatpush1.msra.mxu0 0.0
    %868 = vmatprep.subr.mxu0 0.0
    %869 = vmatpush1.msra.mxu0 0.0
    %870 = vmatprep.subr.mxu0 0.0
    %871 = vmatpush1.msra.mxu0 0.0
    %872 = vmatprep.subr.mxu0 0.0
    %873 = vmatpush1.msra.mxu0 0.0
    %874 = vmatprep.subr.mxu0 0.0
    %875 = vmatpush1.msra.mxu0 %v131
    %876 = vmatprep.subr.mxu0 0.0
    %877 = vmatpush1.msra.mxu0 %v130
    %878 = vmatprep.subr.mxu0 0.0
    %879 = vmatpush2.msra.mxu0 0.0
    %880 = vmatprep.subr.mxu0 0.0
    %881 = vmatpush2.msra.mxu0 0.0
    %882 = vmatprep.subr.mxu0 0.0
    %883 = vmatpush2.msra.mxu0 0.0
    %884 = vmatprep.subr.mxu0 0.0
    %885 = vmatpush2.msra.mxu0 0.0
    %886 = vmatprep.subr.mxu0 0.0
    %887 = vmatpush2.msra.mxu0 0.0
    %888 = vmatprep.subr.mxu0 0.0
    %889 = vmatpush2.msra.mxu0 0.0
    %890 = vmatprep.subr.mxu0 0.0
    %891 = vmatpush2.msra.mxu0 0.0
    %892 = vmatprep.subr.mxu0 0.0
    %893 = vmatpush2.msra.mxu0 0.0
    %894 = vmatprep.subr.mxu0 0.0
    %895 = vmatpush2.msra.mxu0 0.0
    %896 = vmatprep.subr.mxu0 0.0
    %897 = vmatpush2.msra.mxu0 0.0
    %898 = vmatprep.subr.mxu0 0.0
    %899 = vmatpush2.msra.mxu0 0.0
    %900 = vmatprep.subr.mxu0 0.0
    %901 = vmatpush2.msra.mxu0 0.0
    %902 = vmatprep.subr.mxu0 0.0
    %903 = vmatpush2.msra.mxu0 0.0
    %904 = vmatprep.subr.mxu0 0.0
    %905 = vmatpush2.msra.mxu0 0.0
    %906 = vmatprep.subr.mxu0 0.0
    %907 = vmatpush2.msra.mxu0 0.0
    %908 = vmatprep.subr.mxu0 0.0
    %909 = vmatpush2.msra.mxu0 0.0
    %910 = vmatprep.mubr.f32.mxu0 0.0
    %911 = vmatmul.mubr.f32.gmra.mxu0 %v601
    %v912 = vpop.f32.mrf.mxu0
    %v913 = vadd.f32 0.0, %v912
    %v914 = vpop.f32.mrf.mxu0
    %915 = vdwg.mxu0
    %v917 = vrot.slane %v913, 4
    %v919 = vadd.f32 %v122, %v917
    %v920 = vmul.f32 %v919, 0.5
    %v921 = vtanh.pop %v920
    %v922 = vmul.f32 %v921, 0.5
    %v923 = vadd.f32 %v922, 0.5
    %v924 = vtanh.pop %v919
    %v926 = vrot.slane %v590, 6
    %v928 = vmul.f32 %v923, %v926
    %930 = vrot.lane.b32.xlu0 %v924, 96
    %v931 = vpop.permute.xlu0 %930
    %v933 = vmul.f32 %v923, %v931
    %935 = vrot.lane.b32.xlu0 %v933, 16
    %v936 = vpop.permute.xlu0 %935
    %v938 = vadd.f32 %v928, %v936
    %v939 = vtanh.pop %v938
    %941 = vrot.lane.b32.xlu0 %v939, 32
    %v942 = vpop.permute.xlu0 %941
    %v944 = vmul.f32 %v923, %v942
    %v946 = vrot.slane %v944, 4
    %947 = vrot.lane.b32.xlu0 %v946, 80
    %v948 = vpop.permute.xlu0 %947
    %v949 = vsel %vm149, %v948, 0
    %951 = vmatprep.subr.mxu0 0.0
    %952 = vmatpush1.msra.mxu0 0.0
    %953 = vmatprep.subr.mxu0 0.0
    %954 = vmatpush1.msra.mxu0 0.0
    %955 = vmatprep.subr.mxu0 0.0
    %956 = vmatpush1.msra.mxu0 0.0
    %957 = vmatprep.subr.mxu0 0.0
    %958 = vmatpush1.msra.mxu0 0.0
    %959 = vmatprep.subr.mxu0 0.0
    %960 = vmatpush1.msra.mxu0 0.0
    %961 = vmatprep.subr.mxu0 0.0
    %962 = vmatpush1.msra.mxu0 0.0
    %963 = vmatprep.subr.mxu0 0.0
    %964 = vmatpush1.msra.mxu0 0.0
    %965 = vmatprep.subr.mxu0 0.0
    %966 = vmatpush1.msra.mxu0 0.0
    %967 = vmatprep.subr.mxu0 0.0
    %968 = vmatpush1.msra.mxu0 0.0
    %969 = vmatprep.subr.mxu0 0.0
    %970 = vmatpush1.msra.mxu0 0.0
    %971 = vmatprep.subr.mxu0 0.0
    %972 = vmatpush1.msra.mxu0 0.0
    %973 = vmatprep.subr.mxu0 0.0
    %974 = vmatpush1.msra.mxu0 0.0
    %975 = vmatprep.subr.mxu0 0.0
    %976 = vmatpush1.msra.mxu0 0.0
    %977 = vmatprep.subr.mxu0 0.0
    %978 = vmatpush1.msra.mxu0 0.0
    %979 = vmatprep.subr.mxu0 0.0
    %980 = vmatpush1.msra.mxu0 %v133
    %981 = vmatprep.subr.mxu0 0.0
    %982 = vmatpush1.msra.mxu0 %v132
    %983 = vmatprep.subr.mxu0 0.0
    %984 = vmatpush2.msra.mxu0 0.0
    %985 = vmatprep.subr.mxu0 0.0
    %986 = vmatpush2.msra.mxu0 0.0
    %987 = vmatprep.subr.mxu0 0.0
    %988 = vmatpush2.msra.mxu0 0.0
    %989 = vmatprep.subr.mxu0 0.0
    %990 = vmatpush2.msra.mxu0 0.0
    %991 = vmatprep.subr.mxu0 0.0
    %992 = vmatpush2.msra.mxu0 0.0
    %993 = vmatprep.subr.mxu0 0.0
    %994 = vmatpush2.msra.mxu0 0.0
    %995 = vmatprep.subr.mxu0 0.0
    %996 = vmatpush2.msra.mxu0 0.0
    %997 = vmatprep.subr.mxu0 0.0
    %998 = vmatpush2.msra.mxu0 0.0
    %999 = vmatprep.subr.mxu0 0.0
    %1000 = vmatpush2.msra.mxu0 0.0
    %1001 = vmatprep.subr.mxu0 0.0
    %1002 = vmatpush2.msra.mxu0 0.0
    %1003 = vmatprep.subr.mxu0 0.0
    %1004 = vmatpush2.msra.mxu0 0.0
    %1005 = vmatprep.subr.mxu0 0.0
    %1006 = vmatpush2.msra.mxu0 0.0
    %1007 = vmatprep.subr.mxu0 0.0
    %1008 = vmatpush2.msra.mxu0 0.0
    %1009 = vmatprep.subr.mxu0 0.0
    %1010 = vmatpush2.msra.mxu0 0.0
    %1011 = vmatprep.subr.mxu0 0.0
    %1012 = vmatpush2.msra.mxu0 0.0
    %1013 = vmatprep.subr.mxu0 0.0
    %1014 = vmatpush2.msra.mxu0 0.0
    %1015 = vmatprep.mubr.f32.mxu0 0.0
    %1016 = vmatmul.mubr.f32.gmra.mxu0 %v949
    %v1017 = vpop.f32.mrf.mxu0
    %v1018 = vadd.f32 %v767, %v1017
    %v1019 = vpop.f32.mrf.mxu0
    %1020 = vdwg.mxu0
    %v1021 = vmul.f32 %v1018, 0.5
    %v1022 = vtanh.pop %v1021
    %v1023 = vmul.f32 %v1022, 0.5
    %v1024 = vadd.f32 %v1023, 0.5
    %v1025 = vtanh.pop %v1018
    %v1026 = vmul.f32 %v1024, %v688
    %1028 = vrot.lane.b32.xlu0 %v1025, 124
    %v1029 = vpop.permute.xlu0 %1028
    %v1031 = vmul.f32 %v1024, %v1029
    %1033 = vrot.lane.b32.xlu0 %v1031, 2
    %v1034 = vpop.permute.xlu0 %1033
    %v1036 = vadd.f32 %v1026, %v1034
    %v1037 = vtanh.pop %v1036
    %1039 = vrot.lane.b32.xlu0 %v1037, 4
    %v1040 = vpop.permute.xlu0 %1039
    %v1042 = vmul.f32 %v1024, %v1040
    %1044 = vrot.lane.b32.xlu0 %v1042, 122
    %v1045 = vpop.permute.xlu0 %1044
    %v1046 = vsel %vm346, %v1045, 0
    %1048 = vmatprep.subr.mxu0 0.0
    %1049 = vmatpush1.msra.mxu0 0.0
    %1050 = vmatprep.subr.mxu0 0.0
    %1051 = vmatpush1.msra.mxu0 0.0
    %1052 = vmatprep.subr.mxu0 0.0
    %1053 = vmatpush1.msra.mxu0 0.0
    %1054 = vmatprep.subr.mxu0 0.0
    %1055 = vmatpush1.msra.mxu0 0.0
    %1056 = vmatprep.subr.mxu0 0.0
    %1057 = vmatpush1.msra.mxu0 0.0
    %1058 = vmatprep.subr.mxu0 0.0
    %1059 = vmatpush1.msra.mxu0 0.0
    %1060 = vmatprep.subr.mxu0 0.0
    %1061 = vmatpush1.msra.mxu0 0.0
    %1062 = vmatprep.subr.mxu0 0.0
    %1063 = vmatpush1.msra.mxu0 0.0
    %1064 = vmatprep.subr.mxu0 0.0
    %1065 = vmatpush1.msra.mxu0 0.0
    %1066 = vmatprep.subr.mxu0 0.0
    %1067 = vmatpush1.msra.mxu0 0.0
    %1068 = vmatprep.subr.mxu0 0.0
    %1069 = vmatpush1.msra.mxu0 0.0
    %1070 = vmatprep.subr.mxu0 0.0
    %1071 = vmatpush1.msra.mxu0 0.0
    %1072 = vmatprep.subr.mxu0 0.0
    %1073 = vmatpush1.msra.mxu0 0.0
    %1074 = vmatprep.subr.mxu0 0.0
    %1075 = vmatpush1.msra.mxu0 0.0
    %1076 = vmatprep.subr.mxu0 0.0
    %1077 = vmatpush1.msra.mxu0 0.0
    %1078 = vmatprep.subr.mxu0 0.0
    %1079 = vmatpush1.msra.mxu0 %v351
    %1080 = vmatprep.subr.mxu0 0.0
    %1081 = vmatpush2.msra.mxu0 0.0
    %1082 = vmatprep.subr.mxu0 0.0
    %1083 = vmatpush2.msra.mxu0 0.0
    %1084 = vmatprep.subr.mxu0 0.0
    %1085 = vmatpush2.msra.mxu0 0.0
    %1086 = vmatprep.subr.mxu0 0.0
    %1087 = vmatpush2.msra.mxu0 0.0
    %1088 = vmatprep.subr.mxu0 0.0
    %1089 = vmatpush2.msra.mxu0 0.0
    %1090 = vmatprep.subr.mxu0 0.0
    %1091 = vmatpush2.msra.mxu0 0.0
    %1092 = vmatprep.subr.mxu0 0.0
    %1093 = vmatpush2.msra.mxu0 0.0
    %1094 = vmatprep.subr.mxu0 0.0
    %1095 = vmatpush2.msra.mxu0 0.0
    %1096 = vmatprep.subr.mxu0 0.0
    %1097 = vmatpush2.msra.mxu0 0.0
    %1098 = vmatprep.subr.mxu0 0.0
    %1099 = vmatpush2.msra.mxu0 0.0
    %1100 = vmatprep.subr.mxu0 0.0
    %1101 = vmatpush2.msra.mxu0 0.0
    %1102 = vmatprep.subr.mxu0 0.0
    %1103 = vmatpush2.msra.mxu0 0.0
    %1104 = vmatprep.subr.mxu0 0.0
    %1105 = vmatpush2.msra.mxu0 0.0
    %1106 = vmatprep.subr.mxu0 0.0
    %1107 = vmatpush2.msra.mxu0 0.0
    %1108 = vmatprep.subr.mxu0 0.0
    %1109 = vmatpush2.msra.mxu0 0.0
    %1110 = vmatprep.subr.mxu0 0.0
    %1111 = vmatpush2.msra.mxu0 0.0
    %1112 = vmatprep.mubr.f32.mxu0 0.0
    %1113 = vmatmul.mubr.f32.gmra.mxu0 %v1046
    %v1114 = vpop.f32.mrf.mxu0
    %v1115 = vadd.f32 %v140, %v1114
    %v1116 = vpop.f32.mrf.mxu0
    %1117 = vdwg.mxu0
    %s1118 = scalar_lea.vmem %s7, 4
    %v1119 = vld [vmem:[%s1118] sm:$0x3]
    %v1121 = vsel %vm349, %v1119, 0
    %1123 = vmatprep.subr.mxu0 0.0
    %1124 = vmatpush1.msra.mxu0 0.0
    %1125 = vmatprep.subr.mxu0 0.0
    %1126 = vmatpush1.msra.mxu0 0.0
    %1127 = vmatprep.subr.mxu0 0.0
    %1128 = vmatpush1.msra.mxu0 0.0
    %1129 = vmatprep.subr.mxu0 0.0
    %1130 = vmatpush1.msra.mxu0 0.0
    %1131 = vmatprep.subr.mxu0 0.0
    %1132 = vmatpush1.msra.mxu0 0.0
    %1133 = vmatprep.subr.mxu0 0.0
    %1134 = vmatpush1.msra.mxu0 0.0
    %1135 = vmatprep.subr.mxu0 0.0
    %1136 = vmatpush1.msra.mxu0 0.0
    %1137 = vmatprep.subr.mxu0 0.0
    %1138 = vmatpush1.msra.mxu0 0.0
    %1139 = vmatprep.subr.mxu0 0.0
    %1140 = vmatpush1.msra.mxu0 0.0
    %1141 = vmatprep.subr.mxu0 0.0
    %1142 = vmatpush1.msra.mxu0 0.0
    %1143 = vmatprep.subr.mxu0 0.0
    %1144 = vmatpush1.msra.mxu0 0.0
    %1145 = vmatprep.subr.mxu0 0.0
    %1146 = vmatpush1.msra.mxu0 0.0
    %1147 = vmatprep.subr.mxu0 0.0
    %1148 = vmatpush1.msra.mxu0 0.0
    %1149 = vmatprep.subr.mxu0 0.0
    %1150 = vmatpush1.msra.mxu0 0.0
    %1151 = vmatprep.subr.mxu0 0.0
    %1152 = vmatpush1.msra.mxu0 0.0
    %1153 = vmatprep.subr.mxu0 0.0
    %1154 = vmatpush1.msra.mxu0 %v1121
    %1155 = vmatprep.subr.mxu0 0.0
    %1156 = vmatpush2.msra.mxu0 0.0
    %1157 = vmatprep.subr.mxu0 0.0
    %1158 = vmatpush2.msra.mxu0 0.0
    %1159 = vmatprep.subr.mxu0 0.0
    %1160 = vmatpush2.msra.mxu0 0.0
    %1161 = vmatprep.subr.mxu0 0.0
    %1162 = vmatpush2.msra.mxu0 0.0
    %1163 = vmatprep.subr.mxu0 0.0
    %1164 = vmatpush2.msra.mxu0 0.0
    %1165 = vmatprep.subr.mxu0 0.0
    %1166 = vmatpush2.msra.mxu0 0.0
    %1167 = vmatprep.subr.mxu0 0.0
    %1168 = vmatpush2.msra.mxu0 0.0
    %1169 = vmatprep.subr.mxu0 0.0
    %1170 = vmatpush2.msra.mxu0 0.0
    %1171 = vmatprep.subr.mxu0 0.0
    %1172 = vmatpush2.msra.mxu0 0.0
    %1173 = vmatprep.subr.mxu0 0.0
    %1174 = vmatpush2.msra.mxu0 0.0
    %1175 = vmatprep.subr.mxu0 0.0
    %1176 = vmatpush2.msra.mxu0 0.0
    %1177 = vmatprep.subr.mxu0 0.0
    %1178 = vmatpush2.msra.mxu0 0.0
    %1179 = vmatprep.subr.mxu0 0.0
    %1180 = vmatpush2.msra.mxu0 0.0
    %1181 = vmatprep.subr.mxu0 0.0
    %1182 = vmatpush2.msra.mxu0 0.0
    %1183 = vmatprep.subr.mxu0 0.0
    %1184 = vmatpush2.msra.mxu0 0.0
    %1185 = vmatprep.subr.mxu0 0.0
    %1186 = vmatpush2.msra.mxu0 0.0
    %1187 = vmatprep.mubr.f32.mxu0 0.0
    %1188 = vmatmul.mubr.f32.gmra.mxu0 %v1046
    %v1189 = vpop.f32.mrf.mxu0
    %v1190 = vadd.f32 0.0, %v1189
    %v1191 = vpop.f32.mrf.mxu0
    %1192 = vdwg.mxu0
    %v1193 = vadd.f32 %v845, %v1190
    %1194 = vmatprep.subr.mxu0 0.0
    %1195 = vmatpush1.msra.mxu0 0.0
    %1196 = vmatprep.subr.mxu0 0.0
    %1197 = vmatpush1.msra.mxu0 0.0
    %1198 = vmatprep.subr.mxu0 0.0
    %1199 = vmatpush1.msra.mxu0 0.0
    %1200 = vmatprep.subr.mxu0 0.0
    %1201 = vmatpush1.msra.mxu0 0.0
    %1202 = vmatprep.subr.mxu0 0.0
    %1203 = vmatpush1.msra.mxu0 0.0
    %1204 = vmatprep.subr.mxu0 0.0
    %1205 = vmatpush1.msra.mxu0 0.0
    %1206 = vmatprep.subr.mxu0 0.0
    %1207 = vmatpush1.msra.mxu0 0.0
    %1208 = vmatprep.subr.mxu0 0.0
    %1209 = vmatpush1.msra.mxu0 0.0
    %1210 = vmatprep.subr.mxu0 0.0
    %1211 = vmatpush1.msra.mxu0 0.0
    %1212 = vmatprep.subr.mxu0 0.0
    %1213 = vmatpush1.msra.mxu0 0.0
    %1214 = vmatprep.subr.mxu0 0.0
    %1215 = vmatpush1.msra.mxu0 0.0
    %1216 = vmatprep.subr.mxu0 0.0
    %1217 = vmatpush1.msra.mxu0 0.0
    %1218 = vmatprep.subr.mxu0 0.0
    %1219 = vmatpush1.msra.mxu0 0.0
    %1220 = vmatprep.subr.mxu0 0.0
    %1221 = vmatpush1.msra.mxu0 0.0
    %1222 = vmatprep.subr.mxu0 0.0
    %1223 = vmatpush1.msra.mxu0 %v131
    %1224 = vmatprep.subr.mxu0 0.0
    %1225 = vmatpush1.msra.mxu0 %v130
    %1226 = vmatprep.subr.mxu0 0.0
    %1227 = vmatpush2.msra.mxu0 0.0
    %1228 = vmatprep.subr.mxu0 0.0
    %1229 = vmatpush2.msra.mxu0 0.0
    %1230 = vmatprep.subr.mxu0 0.0
    %1231 = vmatpush2.msra.mxu0 0.0
    %1232 = vmatprep.subr.mxu0 0.0
    %1233 = vmatpush2.msra.mxu0 0.0
    %1234 = vmatprep.subr.mxu0 0.0
    %1235 = vmatpush2.msra.mxu0 0.0
    %1236 = vmatprep.subr.mxu0 0.0
    %1237 = vmatpush2.msra.mxu0 0.0
    %1238 = vmatprep.subr.mxu0 0.0
    %1239 = vmatpush2.msra.mxu0 0.0
    %1240 = vmatprep.subr.mxu0 0.0
    %1241 = vmatpush2.msra.mxu0 0.0
    %1242 = vmatprep.subr.mxu0 0.0
    %1243 = vmatpush2.msra.mxu0 0.0
    %1244 = vmatprep.subr.mxu0 0.0
    %1245 = vmatpush2.msra.mxu0 0.0
    %1246 = vmatprep.subr.mxu0 0.0
    %1247 = vmatpush2.msra.mxu0 0.0
    %1248 = vmatprep.subr.mxu0 0.0
    %1249 = vmatpush2.msra.mxu0 0.0
    %1250 = vmatprep.subr.mxu0 0.0
    %1251 = vmatpush2.msra.mxu0 0.0
    %1252 = vmatprep.subr.mxu0 0.0
    %1253 = vmatpush2.msra.mxu0 0.0
    %1254 = vmatprep.subr.mxu0 0.0
    %1255 = vmatpush2.msra.mxu0 0.0
    %1256 = vmatprep.subr.mxu0 0.0
    %1257 = vmatpush2.msra.mxu0 0.0
    %1258 = vmatprep.mubr.f32.mxu0 0.0
    %1259 = vmatmul.mubr.f32.gmra.mxu0 %v949
    %v1260 = vpop.f32.mrf.mxu0
    %v1261 = vadd.f32 0.0, %v1260
    %v1262 = vpop.f32.mrf.mxu0
    %1263 = vdwg.mxu0
    %v1265 = vrot.slane %v1261, 2
    %v1267 = vadd.f32 %v122, %v1265
    %v1268 = vmul.f32 %v1267, 0.5
    %v1269 = vtanh.pop %v1268
    %v1270 = vmul.f32 %v1269, 0.5
    %v1271 = vadd.f32 %v1270, 0.5
    %v1272 = vtanh.pop %v1267
    %v1274 = vrot.slane %v938, 6
    %v1276 = vmul.f32 %v1271, %v1274
    %1278 = vrot.lane.b32.xlu0 %v1272, 96
    %v1279 = vpop.permute.xlu0 %1278
    %v1281 = vmul.f32 %v1271, %v1279
    %1283 = vrot.lane.b32.xlu0 %v1281, 16
    %v1284 = vpop.permute.xlu0 %1283
    %v1286 = vadd.f32 %v1276, %v1284
    %v1287 = vtanh.pop %v1286
    %1289 = vrot.lane.b32.xlu0 %v1287, 32
    %v1290 = vpop.permute.xlu0 %1289
    %v1292 = vmul.f32 %v1271, %v1290
    %v1294 = vrot.slane %v1292, 6
    %1295 = vrot.lane.b32.xlu0 %v1294, 80
    %v1296 = vpop.permute.xlu0 %1295
    %v1297 = vsel %vm149, %v1296, 0
    %1299 = vmatprep.subr.mxu0 0.0
    %1300 = vmatpush1.msra.mxu0 0.0
    %1301 = vmatprep.subr.mxu0 0.0
    %1302 = vmatpush1.msra.mxu0 0.0
    %1303 = vmatprep.subr.mxu0 0.0
    %1304 = vmatpush1.msra.mxu0 0.0
    %1305 = vmatprep.subr.mxu0 0.0
    %1306 = vmatpush1.msra.mxu0 0.0
    %1307 = vmatprep.subr.mxu0 0.0
    %1308 = vmatpush1.msra.mxu0 0.0
    %1309 = vmatprep.subr.mxu0 0.0
    %1310 = vmatpush1.msra.mxu0 0.0
    %1311 = vmatprep.subr.mxu0 0.0
    %1312 = vmatpush1.msra.mxu0 0.0
    %1313 = vmatprep.subr.mxu0 0.0
    %1314 = vmatpush1.msra.mxu0 0.0
    %1315 = vmatprep.subr.mxu0 0.0
    %1316 = vmatpush1.msra.mxu0 0.0
    %1317 = vmatprep.subr.mxu0 0.0
    %1318 = vmatpush1.msra.mxu0 0.0
    %1319 = vmatprep.subr.mxu0 0.0
    %1320 = vmatpush1.msra.mxu0 0.0
    %1321 = vmatprep.subr.mxu0 0.0
    %1322 = vmatpush1.msra.mxu0 0.0
    %1323 = vmatprep.subr.mxu0 0.0
    %1324 = vmatpush1.msra.mxu0 0.0
    %1325 = vmatprep.subr.mxu0 0.0
    %1326 = vmatpush1.msra.mxu0 0.0
    %1327 = vmatprep.subr.mxu0 0.0
    %1328 = vmatpush1.msra.mxu0 %v133
    %1329 = vmatprep.subr.mxu0 0.0
    %1330 = vmatpush1.msra.mxu0 %v132
    %1331 = vmatprep.subr.mxu0 0.0
    %1332 = vmatpush2.msra.mxu0 0.0
    %1333 = vmatprep.subr.mxu0 0.0
    %1334 = vmatpush2.msra.mxu0 0.0
    %1335 = vmatprep.subr.mxu0 0.0
    %1336 = vmatpush2.msra.mxu0 0.0
    %1337 = vmatprep.subr.mxu0 0.0
    %1338 = vmatpush2.msra.mxu0 0.0
    %1339 = vmatprep.subr.mxu0 0.0
    %1340 = vmatpush2.msra.mxu0 0.0
    %1341 = vmatprep.subr.mxu0 0.0
    %1342 = vmatpush2.msra.mxu0 0.0
    %1343 = vmatprep.subr.mxu0 0.0
    %1344 = vmatpush2.msra.mxu0 0.0
    %1345 = vmatprep.subr.mxu0 0.0
    %1346 = vmatpush2.msra.mxu0 0.0
    %1347 = vmatprep.subr.mxu0 0.0
    %1348 = vmatpush2.msra.mxu0 0.0
    %1349 = vmatprep.subr.mxu0 0.0
    %1350 = vmatpush2.msra.mxu0 0.0
    %1351 = vmatprep.subr.mxu0 0.0
    %1352 = vmatpush2.msra.mxu0 0.0
    %1353 = vmatprep.subr.mxu0 0.0
    %1354 = vmatpush2.msra.mxu0 0.0
    %1355 = vmatprep.subr.mxu0 0.0
    %1356 = vmatpush2.msra.mxu0 0.0
    %1357 = vmatprep.subr.mxu0 0.0
    %1358 = vmatpush2.msra.mxu0 0.0
    %1359 = vmatprep.subr.mxu0 0.0
    %1360 = vmatpush2.msra.mxu0 0.0
    %1361 = vmatprep.subr.mxu0 0.0
    %1362 = vmatpush2.msra.mxu0 0.0
    %1363 = vmatprep.mubr.f32.mxu0 0.0
    %1364 = vmatmul.mubr.f32.gmra.mxu0 %v1297
    %v1365 = vpop.f32.mrf.mxu0
    %v1366 = vadd.f32 %v1115, %v1365
    %v1367 = vpop.f32.mrf.mxu0
    %1368 = vdwg.mxu0
    %v1369 = vmul.f32 %v1366, 0.5
    %v1370 = vtanh.pop %v1369
    %v1371 = vmul.f32 %v1370, 0.5
    %v1372 = vadd.f32 %v1371, 0.5
    %v1373 = vtanh.pop %v1366
    %v1374 = vmul.f32 %v1372, %v1036
    %1376 = vrot.lane.b32.xlu0 %v1373, 124
    %v1377 = vpop.permute.xlu0 %1376
    %v1379 = vmul.f32 %v1372, %v1377
    %1381 = vrot.lane.b32.xlu0 %v1379, 2
    %v1382 = vpop.permute.xlu0 %1381
    %v1384 = vadd.f32 %v1374, %v1382
    %v1385 = vtanh.pop %v1384
    %1387 = vrot.lane.b32.xlu0 %v1385, 4
    %v1388 = vpop.permute.xlu0 %1387
    %v1390 = vmul.f32 %v1372, %v1388
    %1392 = vrot.lane.b32.xlu0 %v1390, 122
    %v1393 = vpop.permute.xlu0 %1392
    %v1394 = vsel %vm346, %v1393, 0
    %1396 = vmatprep.subr.mxu0 0.0
    %1397 = vmatpush1.msra.mxu0 0.0
    %1398 = vmatprep.subr.mxu0 0.0
    %1399 = vmatpush1.msra.mxu0 0.0
    %1400 = vmatprep.subr.mxu0 0.0
    %1401 = vmatpush1.msra.mxu0 0.0
    %1402 = vmatprep.subr.mxu0 0.0
    %1403 = vmatpush1.msra.mxu0 0.0
    %1404 = vmatprep.subr.mxu0 0.0
    %1405 = vmatpush1.msra.mxu0 0.0
    %1406 = vmatprep.subr.mxu0 0.0
    %1407 = vmatpush1.msra.mxu0 0.0
    %1408 = vmatprep.subr.mxu0 0.0
    %1409 = vmatpush1.msra.mxu0 0.0
    %1410 = vmatprep.subr.mxu0 0.0
    %1411 = vmatpush1.msra.mxu0 0.0
    %1412 = vmatprep.subr.mxu0 0.0
    %1413 = vmatpush1.msra.mxu0 0.0
    %1414 = vmatprep.subr.mxu0 0.0
    %1415 = vmatpush1.msra.mxu0 0.0
    %1416 = vmatprep.subr.mxu0 0.0
    %1417 = vmatpush1.msra.mxu0 0.0
    %1418 = vmatprep.subr.mxu0 0.0
    %1419 = vmatpush1.msra.mxu0 0.0
    %1420 = vmatprep.subr.mxu0 0.0
    %1421 = vmatpush1.msra.mxu0 0.0
    %1422 = vmatprep.subr.mxu0 0.0
    %1423 = vmatpush1.msra.mxu0 0.0
    %1424 = vmatprep.subr.mxu0 0.0
    %1425 = vmatpush1.msra.mxu0 0.0
    %1426 = vmatprep.subr.mxu0 0.0
    %1427 = vmatpush1.msra.mxu0 %v351
    %1428 = vmatprep.subr.mxu0 0.0
    %1429 = vmatpush2.msra.mxu0 0.0
    %1430 = vmatprep.subr.mxu0 0.0
    %1431 = vmatpush2.msra.mxu0 0.0
    %1432 = vmatprep.subr.mxu0 0.0
    %1433 = vmatpush2.msra.mxu0 0.0
    %1434 = vmatprep.subr.mxu0 0.0
    %1435 = vmatpush2.msra.mxu0 0.0
    %1436 = vmatprep.subr.mxu0 0.0
    %1437 = vmatpush2.msra.mxu0 0.0
    %1438 = vmatprep.subr.mxu0 0.0
    %1439 = vmatpush2.msra.mxu0 0.0
    %1440 = vmatprep.subr.mxu0 0.0
    %1441 = vmatpush2.msra.mxu0 0.0
    %1442 = vmatprep.subr.mxu0 0.0
    %1443 = vmatpush2.msra.mxu0 0.0
    %1444 = vmatprep.subr.mxu0 0.0
    %1445 = vmatpush2.msra.mxu0 0.0
    %1446 = vmatprep.subr.mxu0 0.0
    %1447 = vmatpush2.msra.mxu0 0.0
    %1448 = vmatprep.subr.mxu0 0.0
    %1449 = vmatpush2.msra.mxu0 0.0
    %1450 = vmatprep.subr.mxu0 0.0
    %1451 = vmatpush2.msra.mxu0 0.0
    %1452 = vmatprep.subr.mxu0 0.0
    %1453 = vmatpush2.msra.mxu0 0.0
    %1454 = vmatprep.subr.mxu0 0.0
    %1455 = vmatpush2.msra.mxu0 0.0
    %1456 = vmatprep.subr.mxu0 0.0
    %1457 = vmatpush2.msra.mxu0 0.0
    %1458 = vmatprep.subr.mxu0 0.0
    %1459 = vmatpush2.msra.mxu0 0.0
    %1460 = vmatprep.mubr.f32.mxu0 0.0
    %1461 = vmatmul.mubr.f32.gmra.mxu0 %v1394
    %v1462 = vpop.f32.mrf.mxu0
    %v1463 = vadd.f32 %v140, %v1462
    %v1464 = vpop.f32.mrf.mxu0
    %1465 = vdwg.mxu0
    %s1466 = scalar_lea.vmem %s7, 6
    %v1467 = vld [vmem:[%s1466] sm:$0x3]
    %v1469 = vsel %vm349, %v1467, 0
    %1471 = vmatprep.subr.mxu0 0.0
    %1472 = vmatpush1.msra.mxu0 0.0
    %1473 = vmatprep.subr.mxu0 0.0
    %1474 = vmatpush1.msra.mxu0 0.0
    %1475 = vmatprep.subr.mxu0 0.0
    %1476 = vmatpush1.msra.mxu0 0.0
    %1477 = vmatprep.subr.mxu0 0.0
    %1478 = vmatpush1.msra.mxu0 0.0
    %1479 = vmatprep.subr.mxu0 0.0
    %1480 = vmatpush1.msra.mxu0 0.0
    %1481 = vmatprep.subr.mxu0 0.0
    %1482 = vmatpush1.msra.mxu0 0.0
    %1483 = vmatprep.subr.mxu0 0.0
    %1484 = vmatpush1.msra.mxu0 0.0
    %1485 = vmatprep.subr.mxu0 0.0
    %1486 = vmatpush1.msra.mxu0 0.0
    %1487 = vmatprep.subr.mxu0 0.0
    %1488 = vmatpush1.msra.mxu0 0.0
    %1489 = vmatprep.subr.mxu0 0.0
    %1490 = vmatpush1.msra.mxu0 0.0
    %1491 = vmatprep.subr.mxu0 0.0
    %1492 = vmatpush1.msra.mxu0 0.0
    %1493 = vmatprep.subr.mxu0 0.0
    %1494 = vmatpush1.msra.mxu0 0.0
    %1495 = vmatprep.subr.mxu0 0.0
    %1496 = vmatpush1.msra.mxu0 0.0
    %1497 = vmatprep.subr.mxu0 0.0
    %1498 = vmatpush1.msra.mxu0 0.0
    %1499 = vmatprep.subr.mxu0 0.0
    %1500 = vmatpush1.msra.mxu0 0.0
    %1501 = vmatprep.subr.mxu0 0.0
    %1502 = vmatpush1.msra.mxu0 %v1469
    %1503 = vmatprep.subr.mxu0 0.0
    %1504 = vmatpush2.msra.mxu0 0.0
    %1505 = vmatprep.subr.mxu0 0.0
    %1506 = vmatpush2.msra.mxu0 0.0
    %1507 = vmatprep.subr.mxu0 0.0
    %1508 = vmatpush2.msra.mxu0 0.0
    %1509 = vmatprep.subr.mxu0 0.0
    %1510 = vmatpush2.msra.mxu0 0.0
    %1511 = vmatprep.subr.mxu0 0.0
    %1512 = vmatpush2.msra.mxu0 0.0
    %1513 = vmatprep.subr.mxu0 0.0
    %1514 = vmatpush2.msra.mxu0 0.0
    %1515 = vmatprep.subr.mxu0 0.0
    %1516 = vmatpush2.msra.mxu0 0.0
    %1517 = vmatprep.subr.mxu0 0.0
    %1518 = vmatpush2.msra.mxu0 0.0
    %1519 = vmatprep.subr.mxu0 0.0
    %1520 = vmatpush2.msra.mxu0 0.0
    %1521 = vmatprep.subr.mxu0 0.0
    %1522 = vmatpush2.msra.mxu0 0.0
    %1523 = vmatprep.subr.mxu0 0.0
    %1524 = vmatpush2.msra.mxu0 0.0
    %1525 = vmatprep.subr.mxu0 0.0
    %1526 = vmatpush2.msra.mxu0 0.0
    %1527 = vmatprep.subr.mxu0 0.0
    %1528 = vmatpush2.msra.mxu0 0.0
    %1529 = vmatprep.subr.mxu0 0.0
    %1530 = vmatpush2.msra.mxu0 0.0
    %1531 = vmatprep.subr.mxu0 0.0
    %1532 = vmatpush2.msra.mxu0 0.0
    %1533 = vmatprep.subr.mxu0 0.0
    %1534 = vmatpush2.msra.mxu0 0.0
    %1535 = vmatprep.mubr.f32.mxu0 0.0
    %1536 = vmatmul.mubr.f32.gmra.mxu0 %v1394
    %v1537 = vpop.f32.mrf.mxu0
    %v1538 = vadd.f32 0.0, %v1537
    %v1539 = vpop.f32.mrf.mxu0
    %1540 = vdwg.mxu0
    %v1541 = vadd.f32 %v1193, %v1538
    %1542 = vmatprep.subr.mxu0 0.0
    %1543 = vmatpush1.msra.mxu0 0.0
    %1544 = vmatprep.subr.mxu0 0.0
    %1545 = vmatpush1.msra.mxu0 0.0
    %1546 = vmatprep.subr.mxu0 0.0
    %1547 = vmatpush1.msra.mxu0 0.0
    %1548 = vmatprep.subr.mxu0 0.0
    %1549 = vmatpush1.msra.mxu0 0.0
    %1550 = vmatprep.subr.mxu0 0.0
    %1551 = vmatpush1.msra.mxu0 0.0
    %1552 = vmatprep.subr.mxu0 0.0
    %1553 = vmatpush1.msra.mxu0 0.0
    %1554 = vmatprep.subr.mxu0 0.0
    %1555 = vmatpush1.msra.mxu0 0.0
    %1556 = vmatprep.subr.mxu0 0.0
    %1557 = vmatpush1.msra.mxu0 0.0
    %1558 = vmatprep.subr.mxu0 0.0
    %1559 = vmatpush1.msra.mxu0 0.0
    %1560 = vmatprep.subr.mxu0 0.0
    %1561 = vmatpush1.msra.mxu0 0.0
    %1562 = vmatprep.subr.mxu0 0.0
    %1563 = vmatpush1.msra.mxu0 0.0
    %1564 = vmatprep.subr.mxu0 0.0
    %1565 = vmatpush1.msra.mxu0 0.0
    %1566 = vmatprep.subr.mxu0 0.0
    %1567 = vmatpush1.msra.mxu0 0.0
    %1568 = vmatprep.subr.mxu0 0.0
    %1569 = vmatpush1.msra.mxu0 0.0
    %1570 = vmatprep.subr.mxu0 0.0
    %1571 = vmatpush1.msra.mxu0 %v131
    %1572 = vmatprep.subr.mxu0 0.0
    %1573 = vmatpush1.msra.mxu0 %v130
    %1574 = vmatprep.subr.mxu0 0.0
    %1575 = vmatpush2.msra.mxu0 0.0
    %1576 = vmatprep.subr.mxu0 0.0
    %1577 = vmatpush2.msra.mxu0 0.0
    %1578 = vmatprep.subr.mxu0 0.0
    %1579 = vmatpush2.msra.mxu0 0.0
    %1580 = vmatprep.subr.mxu0 0.0
    %1581 = vmatpush2.msra.mxu0 0.0
    %1582 = vmatprep.subr.mxu0 0.0
    %1583 = vmatpush2.msra.mxu0 0.0
    %1584 = vmatprep.subr.mxu0 0.0
    %1585 = vmatpush2.msra.mxu0 0.0
    %1586 = vmatprep.subr.mxu0 0.0
    %1587 = vmatpush2.msra.mxu0 0.0
    %1588 = vmatprep.subr.mxu0 0.0
    %1589 = vmatpush2.msra.mxu0 0.0
    %1590 = vmatprep.subr.mxu0 0.0
    %1591 = vmatpush2.msra.mxu0 0.0
    %1592 = vmatprep.subr.mxu0 0.0
    %1593 = vmatpush2.msra.mxu0 0.0
    %1594 = vmatprep.subr.mxu0 0.0
    %1595 = vmatpush2.msra.mxu0 0.0
    %1596 = vmatprep.subr.mxu0 0.0
    %1597 = vmatpush2.msra.mxu0 0.0
    %1598 = vmatprep.subr.mxu0 0.0
    %1599 = vmatpush2.msra.mxu0 0.0
    %1600 = vmatprep.subr.mxu0 0.0
    %1601 = vmatpush2.msra.mxu0 0.0
    %1602 = vmatprep.subr.mxu0 0.0
    %1603 = vmatpush2.msra.mxu0 0.0
    %1604 = vmatprep.subr.mxu0 0.0
    %1605 = vmatpush2.msra.mxu0 0.0
    %1606 = vmatprep.mubr.f32.mxu0 0.0
    %1607 = vmatmul.mubr.f32.gmra.mxu0 %v1297
    %v1608 = vpop.f32.mrf.mxu0
    %v1609 = vadd.f32 0.0, %v1608
    %v1610 = vpop.f32.mrf.mxu0
    %1611 = vdwg.mxu0
    %v1612 = vadd.f32 %v127, %v1609
    %v1613 = vmul.f32 %v1612, 0.5
    %v1614 = vtanh.pop %v1613
    %v1615 = vmul.f32 %v1614, 0.5
    %v1616 = vadd.f32 %v1615, 0.5
    %v1617 = vtanh.pop %v1612
    %v1619 = vrot.slane %v1286, 6
    %v1621 = vmul.f32 %v1616, %v1619
    %1623 = vrot.lane.b32.xlu0 %v1617, 96
    %v1624 = vpop.permute.xlu0 %1623
    %v1626 = vmul.f32 %v1616, %v1624
    %1628 = vrot.lane.b32.xlu0 %v1626, 16
    %v1629 = vpop.permute.xlu0 %1628
    %v1631 = vadd.f32 %v1621, %v1629
    %v1632 = vtanh.pop %v1631
    %1634 = vrot.lane.b32.xlu0 %v1632, 32
    %v1635 = vpop.permute.xlu0 %1634
    %v1637 = vmul.f32 %v1616, %v1635
    %1639 = vrot.lane.b32.xlu0 %v1637, 80
    %v1640 = vpop.permute.xlu0 %1639
    %v1641 = vsel %vm149, %v1640, 0
    %1643 = vmatprep.subr.mxu0 0.0
    %1644 = vmatpush1.msra.mxu0 0.0
    %1645 = vmatprep.subr.mxu0 0.0
    %1646 = vmatpush1.msra.mxu0 0.0
    %1647 = vmatprep.subr.mxu0 0.0
    %1648 = vmatpush1.msra.mxu0 0.0
    %1649 = vmatprep.subr.mxu0 0.0
    %1650 = vmatpush1.msra.mxu0 0.0
    %1651 = vmatprep.subr.mxu0 0.0
    %1652 = vmatpush1.msra.mxu0 0.0
    %1653 = vmatprep.subr.mxu0 0.0
    %1654 = vmatpush1.msra.mxu0 0.0
    %1655 = vmatprep.subr.mxu0 0.0
    %1656 = vmatpush1.msra.mxu0 0.0
    %1657 = vmatprep.subr.mxu0 0.0
    %1658 = vmatpush1.msra.mxu0 0.0
    %1659 = vmatprep.subr.mxu0 0.0
    %1660 = vmatpush1.msra.mxu0 0.0
    %1661 = vmatprep.subr.mxu0 0.0
    %1662 = vmatpush1.msra.mxu0 0.0
    %1663 = vmatprep.subr.mxu0 0.0
    %1664 = vmatpush1.msra.mxu0 0.0
    %1665 = vmatprep.subr.mxu0 0.0
    %1666 = vmatpush1.msra.mxu0 0.0
    %1667 = vmatprep.subr.mxu0 0.0
    %1668 = vmatpush1.msra.mxu0 0.0
    %1669 = vmatprep.subr.mxu0 0.0
    %1670 = vmatpush1.msra.mxu0 0.0
    %1671 = vmatprep.subr.mxu0 0.0
    %1672 = vmatpush1.msra.mxu0 %v133
    %1673 = vmatprep.subr.mxu0 0.0
    %1674 = vmatpush1.msra.mxu0 %v132
    %1675 = vmatprep.subr.mxu0 0.0
    %1676 = vmatpush2.msra.mxu0 0.0
    %1677 = vmatprep.subr.mxu0 0.0
    %1678 = vmatpush2.msra.mxu0 0.0
    %1679 = vmatprep.subr.mxu0 0.0
    %1680 = vmatpush2.msra.mxu0 0.0
    %1681 = vmatprep.subr.mxu0 0.0
    %1682 = vmatpush2.msra.mxu0 0.0
    %1683 = vmatprep.subr.mxu0 0.0
    %1684 = vmatpush2.msra.mxu0 0.0
    %1685 = vmatprep.subr.mxu0 0.0
    %1686 = vmatpush2.msra.mxu0 0.0
    %1687 = vmatprep.subr.mxu0 0.0
    %1688 = vmatpush2.msra.mxu0 0.0
    %1689 = vmatprep.subr.mxu0 0.0
    %1690 = vmatpush2.msra.mxu0 0.0
    %1691 = vmatprep.subr.mxu0 0.0
    %1692 = vmatpush2.msra.mxu0 0.0
    %1693 = vmatprep.subr.mxu0 0.0
    %1694 = vmatpush2.msra.mxu0 0.0
    %1695 = vmatprep.subr.mxu0 0.0
    %1696 = vmatpush2.msra.mxu0 0.0
    %1697 = vmatprep.subr.mxu0 0.0
    %1698 = vmatpush2.msra.mxu0 0.0
    %1699 = vmatprep.subr.mxu0 0.0
    %1700 = vmatpush2.msra.mxu0 0.0
    %1701 = vmatprep.subr.mxu0 0.0
    %1702 = vmatpush2.msra.mxu0 0.0
    %1703 = vmatprep.subr.mxu0 0.0
    %1704 = vmatpush2.msra.mxu0 0.0
    %1705 = vmatprep.subr.mxu0 0.0
    %1706 = vmatpush2.msra.mxu0 0.0
    %1707 = vmatprep.mubr.f32.mxu0 0.0
    %1708 = vmatmul.mubr.f32.gmra.mxu0 %v1641
    %v1709 = vpop.f32.mrf.mxu0
    %v1710 = vadd.f32 %v1463, %v1709
    %v1711 = vpop.f32.mrf.mxu0
    %1712 = vdwg.mxu0
    %v1713 = vmul.f32 %v1710, 0.5
    %v1714 = vtanh.pop %v1713
    %v1715 = vmul.f32 %v1714, 0.5
    %v1716 = vadd.f32 %v1715, 0.5
    %v1717 = vtanh.pop %v1710
    %v1718 = vmul.f32 %v1716, %v1384
    %1720 = vrot.lane.b32.xlu0 %v1717, 124
    %v1721 = vpop.permute.xlu0 %1720
    %v1723 = vmul.f32 %v1716, %v1721
    %1725 = vrot.lane.b32.xlu0 %v1723, 2
    %v1726 = vpop.permute.xlu0 %1725
    %v1728 = vadd.f32 %v1718, %v1726
    %v1729 = vtanh.pop %v1728
    %1731 = vrot.lane.b32.xlu0 %v1729, 4
    %v1732 = vpop.permute.xlu0 %1731
    %v1734 = vmul.f32 %v1716, %v1732
    %1736 = vrot.lane.b32.xlu0 %v1734, 122
    %v1737 = vpop.permute.xlu0 %1736
    %v1738 = vsel %vm346, %v1737, 0
    %1740 = vmatprep.subr.mxu0 0.0
    %1741 = vmatpush1.msra.mxu0 0.0
    %1742 = vmatprep.subr.mxu0 0.0
    %1743 = vmatpush1.msra.mxu0 0.0
    %1744 = vmatprep.subr.mxu0 0.0
    %1745 = vmatpush1.msra.mxu0 0.0
    %1746 = vmatprep.subr.mxu0 0.0
    %1747 = vmatpush1.msra.mxu0 0.0
    %1748 = vmatprep.subr.mxu0 0.0
    %1749 = vmatpush1.msra.mxu0 0.0
    %1750 = vmatprep.subr.mxu0 0.0
    %1751 = vmatpush1.msra.mxu0 0.0
    %1752 = vmatprep.subr.mxu0 0.0
    %1753 = vmatpush1.msra.mxu0 0.0
    %1754 = vmatprep.subr.mxu0 0.0
    %1755 = vmatpush1.msra.mxu0 0.0
    %1756 = vmatprep.subr.mxu0 0.0
    %1757 = vmatpush1.msra.mxu0 0.0
    %1758 = vmatprep.subr.mxu0 0.0
    %1759 = vmatpush1.msra.mxu0 0.0
    %1760 = vmatprep.subr.mxu0 0.0
    %1761 = vmatpush1.msra.mxu0 0.0
    %1762 = vmatprep.subr.mxu0 0.0
    %1763 = vmatpush1.msra.mxu0 0.0
    %1764 = vmatprep.subr.mxu0 0.0
    %1765 = vmatpush1.msra.mxu0 0.0
    %1766 = vmatprep.subr.mxu0 0.0
    %1767 = vmatpush1.msra.mxu0 0.0
    %1768 = vmatprep.subr.mxu0 0.0
    %1769 = vmatpush1.msra.mxu0 0.0
    %1770 = vmatprep.subr.mxu0 0.0
    %1771 = vmatpush1.msra.mxu0 %v351
    %1772 = vmatprep.subr.mxu0 0.0
    %1773 = vmatpush2.msra.mxu0 0.0
    %1774 = vmatprep.subr.mxu0 0.0
    %1775 = vmatpush2.msra.mxu0 0.0
    %1776 = vmatprep.subr.mxu0 0.0
    %1777 = vmatpush2.msra.mxu0 0.0
    %1778 = vmatprep.subr.mxu0 0.0
    %1779 = vmatpush2.msra.mxu0 0.0
    %1780 = vmatprep.subr.mxu0 0.0
    %1781 = vmatpush2.msra.mxu0 0.0
    %1782 = vmatprep.subr.mxu0 0.0
    %1783 = vmatpush2.msra.mxu0 0.0
    %1784 = vmatprep.subr.mxu0 0.0
    %1785 = vmatpush2.msra.mxu0 0.0
    %1786 = vmatprep.subr.mxu0 0.0
    %1787 = vmatpush2.msra.mxu0 0.0
    %1788 = vmatprep.subr.mxu0 0.0
    %1789 = vmatpush2.msra.mxu0 0.0
    %1790 = vmatprep.subr.mxu0 0.0
    %1791 = vmatpush2.msra.mxu0 0.0
    %1792 = vmatprep.subr.mxu0 0.0
    %1793 = vmatpush2.msra.mxu0 0.0
    %1794 = vmatprep.subr.mxu0 0.0
    %1795 = vmatpush2.msra.mxu0 0.0
    %1796 = vmatprep.subr.mxu0 0.0
    %1797 = vmatpush2.msra.mxu0 0.0
    %1798 = vmatprep.subr.mxu0 0.0
    %1799 = vmatpush2.msra.mxu0 0.0
    %1800 = vmatprep.subr.mxu0 0.0
    %1801 = vmatpush2.msra.mxu0 0.0
    %1802 = vmatprep.subr.mxu0 0.0
    %1803 = vmatpush2.msra.mxu0 0.0
    %1804 = vmatprep.mubr.f32.mxu0 0.0
    %1805 = vmatmul.mubr.f32.gmra.mxu0 %v1738
    %v1806 = vpop.f32.mrf.mxu0
    %v1807 = vadd.f32 %v140, %v1806
    %v1808 = vpop.f32.mrf.mxu0
    %1809 = vdwg.mxu0
    %s1810 = scalar_lea.vmem %s7, 8
    %v1811 = vld [vmem:[%s1810] sm:$0x3]
    %v1813 = vsel %vm349, %v1811, 0
    %1815 = vmatprep.subr.mxu0 0.0
    %1816 = vmatpush1.msra.mxu0 0.0
    %1817 = vmatprep.subr.mxu0 0.0
    %1818 = vmatpush1.msra.mxu0 0.0
    %1819 = vmatprep.subr.mxu0 0.0
    %1820 = vmatpush1.msra.mxu0 0.0
    %1821 = vmatprep.subr.mxu0 0.0
    %1822 = vmatpush1.msra.mxu0 0.0
    %1823 = vmatprep.subr.mxu0 0.0
    %1824 = vmatpush1.msra.mxu0 0.0
    %1825 = vmatprep.subr.mxu0 0.0
    %1826 = vmatpush1.msra.mxu0 0.0
    %1827 = vmatprep.subr.mxu0 0.0
    %1828 = vmatpush1.msra.mxu0 0.0
    %1829 = vmatprep.subr.mxu0 0.0
    %1830 = vmatpush1.msra.mxu0 0.0
    %1831 = vmatprep.subr.mxu0 0.0
    %1832 = vmatpush1.msra.mxu0 0.0
    %1833 = vmatprep.subr.mxu0 0.0
    %1834 = vmatpush1.msra.mxu0 0.0
    %1835 = vmatprep.subr.mxu0 0.0
    %1836 = vmatpush1.msra.mxu0 0.0
    %1837 = vmatprep.subr.mxu0 0.0
    %1838 = vmatpush1.msra.mxu0 0.0
    %1839 = vmatprep.subr.mxu0 0.0
    %1840 = vmatpush1.msra.mxu0 0.0
    %1841 = vmatprep.subr.mxu0 0.0
    %1842 = vmatpush1.msra.mxu0 0.0
    %1843 = vmatprep.subr.mxu0 0.0
    %1844 = vmatpush1.msra.mxu0 0.0
    %1845 = vmatprep.subr.mxu0 0.0
    %1846 = vmatpush1.msra.mxu0 %v1813
    %1847 = vmatprep.subr.mxu0 0.0
    %1848 = vmatpush2.msra.mxu0 0.0
    %1849 = vmatprep.subr.mxu0 0.0
    %1850 = vmatpush2.msra.mxu0 0.0
    %1851 = vmatprep.subr.mxu0 0.0
    %1852 = vmatpush2.msra.mxu0 0.0
    %1853 = vmatprep.subr.mxu0 0.0
    %1854 = vmatpush2.msra.mxu0 0.0
    %1855 = vmatprep.subr.mxu0 0.0
    %1856 = vmatpush2.msra.mxu0 0.0
    %1857 = vmatprep.subr.mxu0 0.0
    %1858 = vmatpush2.msra.mxu0 0.0
    %1859 = vmatprep.subr.mxu0 0.0
    %1860 = vmatpush2.msra.mxu0 0.0
    %1861 = vmatprep.subr.mxu0 0.0
    %1862 = vmatpush2.msra.mxu0 0.0
    %1863 = vmatprep.subr.mxu0 0.0
    %1864 = vmatpush2.msra.mxu0 0.0
    %1865 = vmatprep.subr.mxu0 0.0
    %1866 = vmatpush2.msra.mxu0 0.0
    %1867 = vmatprep.subr.mxu0 0.0
    %1868 = vmatpush2.msra.mxu0 0.0
    %1869 = vmatprep.subr.mxu0 0.0
    %1870 = vmatpush2.msra.mxu0 0.0
    %1871 = vmatprep.subr.mxu0 0.0
    %1872 = vmatpush2.msra.mxu0 0.0
    %1873 = vmatprep.subr.mxu0 0.0
    %1874 = vmatpush2.msra.mxu0 0.0
    %1875 = vmatprep.subr.mxu0 0.0
    %1876 = vmatpush2.msra.mxu0 0.0
    %1877 = vmatprep.subr.mxu0 0.0
    %1878 = vmatpush2.msra.mxu0 0.0
    %1879 = vmatprep.mubr.f32.mxu0 0.0
    %1880 = vmatmul.mubr.f32.gmra.mxu0 %v1738
    %v1881 = vpop.f32.mrf.mxu0
    %v1882 = vadd.f32 0.0, %v1881
    %v1883 = vpop.f32.mrf.mxu0
    %1884 = vdwg.mxu0
    %v1885 = vadd.f32 %v1541, %v1882
    %1886 = vmatprep.subr.mxu0 0.0
    %1887 = vmatpush1.msra.mxu0 0.0
    %1888 = vmatprep.subr.mxu0 0.0
    %1889 = vmatpush1.msra.mxu0 0.0
    %1890 = vmatprep.subr.mxu0 0.0
    %1891 = vmatpush1.msra.mxu0 0.0
    %1892 = vmatprep.subr.mxu0 0.0
    %1893 = vmatpush1.msra.mxu0 0.0
    %1894 = vmatprep.subr.mxu0 0.0
    %1895 = vmatpush1.msra.mxu0 0.0
    %1896 = vmatprep.subr.mxu0 0.0
    %1897 = vmatpush1.msra.mxu0 0.0
    %1898 = vmatprep.subr.mxu0 0.0
    %1899 = vmatpush1.msra.mxu0 0.0
    %1900 = vmatprep.subr.mxu0 0.0
    %1901 = vmatpush1.msra.mxu0 0.0
    %1902 = vmatprep.subr.mxu0 0.0
    %1903 = vmatpush1.msra.mxu0 0.0
    %1904 = vmatprep.subr.mxu0 0.0
    %1905 = vmatpush1.msra.mxu0 0.0
    %1906 = vmatprep.subr.mxu0 0.0
    %1907 = vmatpush1.msra.mxu0 0.0
    %1908 = vmatprep.subr.mxu0 0.0
    %1909 = vmatpush1.msra.mxu0 0.0
    %1910 = vmatprep.subr.mxu0 0.0
    %1911 = vmatpush1.msra.mxu0 0.0
    %1912 = vmatprep.subr.mxu0 0.0
    %1913 = vmatpush1.msra.mxu0 0.0
    %1914 = vmatprep.subr.mxu0 0.0
    %1915 = vmatpush1.msra.mxu0 %v131
    %1916 = vmatprep.subr.mxu0 0.0
    %1917 = vmatpush1.msra.mxu0 %v130
    %1918 = vmatprep.subr.mxu0 0.0
    %1919 = vmatpush2.msra.mxu0 0.0
    %1920 = vmatprep.subr.mxu0 0.0
    %1921 = vmatpush2.msra.mxu0 0.0
    %1922 = vmatprep.subr.mxu0 0.0
    %1923 = vmatpush2.msra.mxu0 0.0
    %1924 = vmatprep.subr.mxu0 0.0
    %1925 = vmatpush2.msra.mxu0 0.0
    %1926 = vmatprep.subr.mxu0 0.0
    %1927 = vmatpush2.msra.mxu0 0.0
    %1928 = vmatprep.subr.mxu0 0.0
    %1929 = vmatpush2.msra.mxu0 0.0
    %1930 = vmatprep.subr.mxu0 0.0
    %1931 = vmatpush2.msra.mxu0 0.0
    %1932 = vmatprep.subr.mxu0 0.0
    %1933 = vmatpush2.msra.mxu0 0.0
    %1934 = vmatprep.subr.mxu0 0.0
    %1935 = vmatpush2.msra.mxu0 0.0
    %1936 = vmatprep.subr.mxu0 0.0
    %1937 = vmatpush2.msra.mxu0 0.0
    %1938 = vmatprep.subr.mxu0 0.0
    %1939 = vmatpush2.msra.mxu0 0.0
    %1940 = vmatprep.subr.mxu0 0.0
    %1941 = vmatpush2.msra.mxu0 0.0
    %1942 = vmatprep.subr.mxu0 0.0
    %1943 = vmatpush2.msra.mxu0 0.0
    %1944 = vmatprep.subr.mxu0 0.0
    %1945 = vmatpush2.msra.mxu0 0.0
    %1946 = vmatprep.subr.mxu0 0.0
    %1947 = vmatpush2.msra.mxu0 0.0
    %1948 = vmatprep.subr.mxu0 0.0
    %1949 = vmatpush2.msra.mxu0 0.0
    %1950 = vmatprep.mubr.f32.mxu0 0.0
    %1951 = vmatmul.mubr.f32.gmra.mxu0 %v1641
    %v1952 = vpop.f32.mrf.mxu0
    %v1953 = vadd.f32 0.0, %v1952
    %v1954 = vpop.f32.mrf.mxu0
    %1955 = vdwg.mxu0
    %v1957 = vrot.slane %v1953, 6
    %v1959 = vadd.f32 %v127, %v1957
    %v1960 = vmul.f32 %v1959, 0.5
    %v1961 = vtanh.pop %v1960
    %v1962 = vmul.f32 %v1961, 0.5
    %v1963 = vadd.f32 %v1962, 0.5
    %v1964 = vtanh.pop %v1959
    %v1966 = vrot.slane %v1631, 6
    %v1968 = vmul.f32 %v1963, %v1966
    %1970 = vrot.lane.b32.xlu0 %v1964, 96
    %v1971 = vpop.permute.xlu0 %1970
    %v1973 = vmul.f32 %v1963, %v1971
    %1975 = vrot.lane.b32.xlu0 %v1973, 16
    %v1976 = vpop.permute.xlu0 %1975
    %v1978 = vadd.f32 %v1968, %v1976
    %v1979 = vtanh.pop %v1978
    %1981 = vrot.lane.b32.xlu0 %v1979, 32
    %v1982 = vpop.permute.xlu0 %1981
    %v1984 = vmul.f32 %v1963, %v1982
    %v1986 = vrot.slane %v1984, 2
    %1987 = vrot.lane.b32.xlu0 %v1986, 80
    %v1988 = vpop.permute.xlu0 %1987
    %v1989 = vsel %vm149, %v1988, 0
    %1991 = vmatprep.subr.mxu0 0.0
    %1992 = vmatpush1.msra.mxu0 0.0
    %1993 = vmatprep.subr.mxu0 0.0
    %1994 = vmatpush1.msra.mxu0 0.0
    %1995 = vmatprep.subr.mxu0 0.0
    %1996 = vmatpush1.msra.mxu0 0.0
    %1997 = vmatprep.subr.mxu0 0.0
    %1998 = vmatpush1.msra.mxu0 0.0
    %1999 = vmatprep.subr.mxu0 0.0
    %2000 = vmatpush1.msra.mxu0 0.0
    %2001 = vmatprep.subr.mxu0 0.0
    %2002 = vmatpush1.msra.mxu0 0.0
    %2003 = vmatprep.subr.mxu0 0.0
    %2004 = vmatpush1.msra.mxu0 0.0
    %2005 = vmatprep.subr.mxu0 0.0
    %2006 = vmatpush1.msra.mxu0 0.0
    %2007 = vmatprep.subr.mxu0 0.0
    %2008 = vmatpush1.msra.mxu0 0.0
    %2009 = vmatprep.subr.mxu0 0.0
    %2010 = vmatpush1.msra.mxu0 0.0
    %2011 = vmatprep.subr.mxu0 0.0
    %2012 = vmatpush1.msra.mxu0 0.0
    %2013 = vmatprep.subr.mxu0 0.0
    %2014 = vmatpush1.msra.mxu0 0.0
    %2015 = vmatprep.subr.mxu0 0.0
    %2016 = vmatpush1.msra.mxu0 0.0
    %2017 = vmatprep.subr.mxu0 0.0
    %2018 = vmatpush1.msra.mxu0 0.0
    %2019 = vmatprep.subr.mxu0 0.0
    %2020 = vmatpush1.msra.mxu0 %v133
    %2021 = vmatprep.subr.mxu0 0.0
    %2022 = vmatpush1.msra.mxu0 %v132
    %2023 = vmatprep.subr.mxu0 0.0
    %2024 = vmatpush2.msra.mxu0 0.0
    %2025 = vmatprep.subr.mxu0 0.0
    %2026 = vmatpush2.msra.mxu0 0.0
    %2027 = vmatprep.subr.mxu0 0.0
    %2028 = vmatpush2.msra.mxu0 0.0
    %2029 = vmatprep.subr.mxu0 0.0
    %2030 = vmatpush2.msra.mxu0 0.0
    %2031 = vmatprep.subr.mxu0 0.0
    %2032 = vmatpush2.msra.mxu0 0.0
    %2033 = vmatprep.subr.mxu0 0.0
    %2034 = vmatpush2.msra.mxu0 0.0
    %2035 = vmatprep.subr.mxu0 0.0
    %2036 = vmatpush2.msra.mxu0 0.0
    %2037 = vmatprep.subr.mxu0 0.0
    %2038 = vmatpush2.msra.mxu0 0.0
    %2039 = vmatprep.subr.mxu0 0.0
    %2040 = vmatpush2.msra.mxu0 0.0
    %2041 = vmatprep.subr.mxu0 0.0
    %2042 = vmatpush2.msra.mxu0 0.0
    %2043 = vmatprep.subr.mxu0 0.0
    %2044 = vmatpush2.msra.mxu0 0.0
    %2045 = vmatprep.subr.mxu0 0.0
    %2046 = vmatpush2.msra.mxu0 0.0
    %2047 = vmatprep.subr.mxu0 0.0
    %2048 = vmatpush2.msra.mxu0 0.0
    %2049 = vmatprep.subr.mxu0 0.0
    %2050 = vmatpush2.msra.mxu0 0.0
    %2051 = vmatprep.subr.mxu0 0.0
    %2052 = vmatpush2.msra.mxu0 0.0
    %2053 = vmatprep.subr.mxu0 0.0
    %2054 = vmatpush2.msra.mxu0 0.0
    %2055 = vmatprep.mubr.f32.mxu0 0.0
    %2056 = vmatmul.mubr.f32.gmra.mxu0 %v1989
    %v2057 = vpop.f32.mrf.mxu0
    %v2058 = vadd.f32 %v1807, %v2057
    %v2059 = vpop.f32.mrf.mxu0
    %2060 = vdwg.mxu0
    %v2061 = vmul.f32 %v2058, 0.5
    %v2062 = vtanh.pop %v2061
    %v2063 = vmul.f32 %v2062, 0.5
    %v2064 = vadd.f32 %v2063, 0.5
    %v2065 = vtanh.pop %v2058
    %v2066 = vmul.f32 %v2064, %v1728
    %2068 = vrot.lane.b32.xlu0 %v2065, 124
    %v2069 = vpop.permute.xlu0 %2068
    %v2071 = vmul.f32 %v2064, %v2069
    %2073 = vrot.lane.b32.xlu0 %v2071, 2
    %v2074 = vpop.permute.xlu0 %2073
    %v2076 = vadd.f32 %v2066, %v2074
    %v2077 = vtanh.pop %v2076
    %2079 = vrot.lane.b32.xlu0 %v2077, 4
    %v2080 = vpop.permute.xlu0 %2079
    %v2082 = vmul.f32 %v2064, %v2080
    %2084 = vrot.lane.b32.xlu0 %v2082, 122
    %v2085 = vpop.permute.xlu0 %2084
    %v2086 = vsel %vm346, %v2085, 0
    %2088 = vmatprep.subr.mxu0 0.0
    %2089 = vmatpush1.msra.mxu0 0.0
    %2090 = vmatprep.subr.mxu0 0.0
    %2091 = vmatpush1.msra.mxu0 0.0
    %2092 = vmatprep.subr.mxu0 0.0
    %2093 = vmatpush1.msra.mxu0 0.0
    %2094 = vmatprep.subr.mxu0 0.0
    %2095 = vmatpush1.msra.mxu0 0.0
    %2096 = vmatprep.subr.mxu0 0.0
    %2097 = vmatpush1.msra.mxu0 0.0
    %2098 = vmatprep.subr.mxu0 0.0
    %2099 = vmatpush1.msra.mxu0 0.0
    %2100 = vmatprep.subr.mxu0 0.0
    %2101 = vmatpush1.msra.mxu0 0.0
    %2102 = vmatprep.subr.mxu0 0.0
    %2103 = vmatpush1.msra.mxu0 0.0
    %2104 = vmatprep.subr.mxu0 0.0
    %2105 = vmatpush1.msra.mxu0 0.0
    %2106 = vmatprep.subr.mxu0 0.0
    %2107 = vmatpush1.msra.mxu0 0.0
    %2108 = vmatprep.subr.mxu0 0.0
    %2109 = vmatpush1.msra.mxu0 0.0
    %2110 = vmatprep.subr.mxu0 0.0
    %2111 = vmatpush1.msra.mxu0 0.0
    %2112 = vmatprep.subr.mxu0 0.0
    %2113 = vmatpush1.msra.mxu0 0.0
    %2114 = vmatprep.subr.mxu0 0.0
    %2115 = vmatpush1.msra.mxu0 0.0
    %2116 = vmatprep.subr.mxu0 0.0
    %2117 = vmatpush1.msra.mxu0 0.0
    %2118 = vmatprep.subr.mxu0 0.0
    %2119 = vmatpush1.msra.mxu0 %v351
    %2120 = vmatprep.subr.mxu0 0.0
    %2121 = vmatpush2.msra.mxu0 0.0
    %2122 = vmatprep.subr.mxu0 0.0
    %2123 = vmatpush2.msra.mxu0 0.0
    %2124 = vmatprep.subr.mxu0 0.0
    %2125 = vmatpush2.msra.mxu0 0.0
    %2126 = vmatprep.subr.mxu0 0.0
    %2127 = vmatpush2.msra.mxu0 0.0
    %2128 = vmatprep.subr.mxu0 0.0
    %2129 = vmatpush2.msra.mxu0 0.0
    %2130 = vmatprep.subr.mxu0 0.0
    %2131 = vmatpush2.msra.mxu0 0.0
    %2132 = vmatprep.subr.mxu0 0.0
    %2133 = vmatpush2.msra.mxu0 0.0
    %2134 = vmatprep.subr.mxu0 0.0
    %2135 = vmatpush2.msra.mxu0 0.0
    %2136 = vmatprep.subr.mxu0 0.0
    %2137 = vmatpush2.msra.mxu0 0.0
    %2138 = vmatprep.subr.mxu0 0.0
    %2139 = vmatpush2.msra.mxu0 0.0
    %2140 = vmatprep.subr.mxu0 0.0
    %2141 = vmatpush2.msra.mxu0 0.0
    %2142 = vmatprep.subr.mxu0 0.0
    %2143 = vmatpush2.msra.mxu0 0.0
    %2144 = vmatprep.subr.mxu0 0.0
    %2145 = vmatpush2.msra.mxu0 0.0
    %2146 = vmatprep.subr.mxu0 0.0
    %2147 = vmatpush2.msra.mxu0 0.0
    %2148 = vmatprep.subr.mxu0 0.0
    %2149 = vmatpush2.msra.mxu0 0.0
    %2150 = vmatprep.subr.mxu0 0.0
    %2151 = vmatpush2.msra.mxu0 0.0
    %2152 = vmatprep.mubr.f32.mxu0 0.0
    %2153 = vmatmul.mubr.f32.gmra.mxu0 %v2086
    %v2154 = vpop.f32.mrf.mxu0
    %v2155 = vadd.f32 %v140, %v2154
    %v2156 = vpop.f32.mrf.mxu0
    %2157 = vdwg.mxu0
    %s2158 = scalar_lea.vmem %s7, 10
    %v2159 = vld [vmem:[%s2158] sm:$0x3]
    %v2161 = vsel %vm349, %v2159, 0
    %2163 = vmatprep.subr.mxu0 0.0
    %2164 = vmatpush1.msra.mxu0 0.0
    %2165 = vmatprep.subr.mxu0 0.0
    %2166 = vmatpush1.msra.mxu0 0.0
    %2167 = vmatprep.subr.mxu0 0.0
    %2168 = vmatpush1.msra.mxu0 0.0
    %2169 = vmatprep.subr.mxu0 0.0
    %2170 = vmatpush1.msra.mxu0 0.0
    %2171 = vmatprep.subr.mxu0 0.0
    %2172 = vmatpush1.msra.mxu0 0.0
    %2173 = vmatprep.subr.mxu0 0.0
    %2174 = vmatpush1.msra.mxu0 0.0
    %2175 = vmatprep.subr.mxu0 0.0
    %2176 = vmatpush1.msra.mxu0 0.0
    %2177 = vmatprep.subr.mxu0 0.0
    %2178 = vmatpush1.msra.mxu0 0.0
    %2179 = vmatprep.subr.mxu0 0.0
    %2180 = vmatpush1.msra.mxu0 0.0
    %2181 = vmatprep.subr.mxu0 0.0
    %2182 = vmatpush1.msra.mxu0 0.0
    %2183 = vmatprep.subr.mxu0 0.0
    %2184 = vmatpush1.msra.mxu0 0.0
    %2185 = vmatprep.subr.mxu0 0.0
    %2186 = vmatpush1.msra.mxu0 0.0
    %2187 = vmatprep.subr.mxu0 0.0
    %2188 = vmatpush1.msra.mxu0 0.0
    %2189 = vmatprep.subr.mxu0 0.0
    %2190 = vmatpush1.msra.mxu0 0.0
    %2191 = vmatprep.subr.mxu0 0.0
    %2192 = vmatpush1.msra.mxu0 0.0
    %2193 = vmatprep.subr.mxu0 0.0
    %2194 = vmatpush1.msra.mxu0 %v2161
    %2195 = vmatprep.subr.mxu0 0.0
    %2196 = vmatpush2.msra.mxu0 0.0
    %2197 = vmatprep.subr.mxu0 0.0
    %2198 = vmatpush2.msra.mxu0 0.0
    %2199 = vmatprep.subr.mxu0 0.0
    %2200 = vmatpush2.msra.mxu0 0.0
    %2201 = vmatprep.subr.mxu0 0.0
    %2202 = vmatpush2.msra.mxu0 0.0
    %2203 = vmatprep.subr.mxu0 0.0
    %2204 = vmatpush2.msra.mxu0 0.0
    %2205 = vmatprep.subr.mxu0 0.0
    %2206 = vmatpush2.msra.mxu0 0.0
    %2207 = vmatprep.subr.mxu0 0.0
    %2208 = vmatpush2.msra.mxu0 0.0
    %2209 = vmatprep.subr.mxu0 0.0
    %2210 = vmatpush2.msra.mxu0 0.0
    %2211 = vmatprep.subr.mxu0 0.0
    %2212 = vmatpush2.msra.mxu0 0.0
    %2213 = vmatprep.subr.mxu0 0.0
    %2214 = vmatpush2.msra.mxu0 0.0
    %2215 = vmatprep.subr.mxu0 0.0
    %2216 = vmatpush2.msra.mxu0 0.0
    %2217 = vmatprep.subr.mxu0 0.0
    %2218 = vmatpush2.msra.mxu0 0.0
    %2219 = vmatprep.subr.mxu0 0.0
    %2220 = vmatpush2.msra.mxu0 0.0
    %2221 = vmatprep.subr.mxu0 0.0
    %2222 = vmatpush2.msra.mxu0 0.0
    %2223 = vmatprep.subr.mxu0 0.0
    %2224 = vmatpush2.msra.mxu0 0.0
    %2225 = vmatprep.subr.mxu0 0.0
    %2226 = vmatpush2.msra.mxu0 0.0
    %2227 = vmatprep.mubr.f32.mxu0 0.0
    %2228 = vmatmul.mubr.f32.gmra.mxu0 %v2086
    %v2229 = vpop.f32.mrf.mxu0
    %v2230 = vadd.f32 0.0, %v2229
    %v2231 = vpop.f32.mrf.mxu0
    %2232 = vdwg.mxu0
    %v2233 = vadd.f32 %v1885, %v2230
    %2234 = vmatprep.subr.mxu0 0.0
    %2235 = vmatpush1.msra.mxu0 0.0
    %2236 = vmatprep.subr.mxu0 0.0
    %2237 = vmatpush1.msra.mxu0 0.0
    %2238 = vmatprep.subr.mxu0 0.0
    %2239 = vmatpush1.msra.mxu0 0.0
    %2240 = vmatprep.subr.mxu0 0.0
    %2241 = vmatpush1.msra.mxu0 0.0
    %2242 = vmatprep.subr.mxu0 0.0
    %2243 = vmatpush1.msra.mxu0 0.0
    %2244 = vmatprep.subr.mxu0 0.0
    %2245 = vmatpush1.msra.mxu0 0.0
    %2246 = vmatprep.subr.mxu0 0.0
    %2247 = vmatpush1.msra.mxu0 0.0
    %2248 = vmatprep.subr.mxu0 0.0
    %2249 = vmatpush1.msra.mxu0 0.0
    %2250 = vmatprep.subr.mxu0 0.0
    %2251 = vmatpush1.msra.mxu0 0.0
    %2252 = vmatprep.subr.mxu0 0.0
    %2253 = vmatpush1.msra.mxu0 0.0
    %2254 = vmatprep.subr.mxu0 0.0
    %2255 = vmatpush1.msra.mxu0 0.0
    %2256 = vmatprep.subr.mxu0 0.0
    %2257 = vmatpush1.msra.mxu0 0.0
    %2258 = vmatprep.subr.mxu0 0.0
    %2259 = vmatpush1.msra.mxu0 0.0
    %2260 = vmatprep.subr.mxu0 0.0
    %2261 = vmatpush1.msra.mxu0 0.0
    %2262 = vmatprep.subr.mxu0 0.0
    %2263 = vmatpush1.msra.mxu0 %v131
    %2264 = vmatprep.subr.mxu0 0.0
    %2265 = vmatpush1.msra.mxu0 %v130
    %2266 = vmatprep.subr.mxu0 0.0
    %2267 = vmatpush2.msra.mxu0 0.0
    %2268 = vmatprep.subr.mxu0 0.0
    %2269 = vmatpush2.msra.mxu0 0.0
    %2270 = vmatprep.subr.mxu0 0.0
    %2271 = vmatpush2.msra.mxu0 0.0
    %2272 = vmatprep.subr.mxu0 0.0
    %2273 = vmatpush2.msra.mxu0 0.0
    %2274 = vmatprep.subr.mxu0 0.0
    %2275 = vmatpush2.msra.mxu0 0.0
    %2276 = vmatprep.subr.mxu0 0.0
    %2277 = vmatpush2.msra.mxu0 0.0
    %2278 = vmatprep.subr.mxu0 0.0
    %2279 = vmatpush2.msra.mxu0 0.0
    %2280 = vmatprep.subr.mxu0 0.0
    %2281 = vmatpush2.msra.mxu0 0.0
    %2282 = vmatprep.subr.mxu0 0.0
    %2283 = vmatpush2.msra.mxu0 0.0
    %2284 = vmatprep.subr.mxu0 0.0
    %2285 = vmatpush2.msra.mxu0 0.0
    %2286 = vmatprep.subr.mxu0 0.0
    %2287 = vmatpush2.msra.mxu0 0.0
    %2288 = vmatprep.subr.mxu0 0.0
    %2289 = vmatpush2.msra.mxu0 0.0
    %2290 = vmatprep.subr.mxu0 0.0
    %2291 = vmatpush2.msra.mxu0 0.0
    %2292 = vmatprep.subr.mxu0 0.0
    %2293 = vmatpush2.msra.mxu0 0.0
    %2294 = vmatprep.subr.mxu0 0.0
    %2295 = vmatpush2.msra.mxu0 0.0
    %2296 = vmatprep.subr.mxu0 0.0
    %2297 = vmatpush2.msra.mxu0 0.0
    %2298 = vmatprep.mubr.f32.mxu0 0.0
    %2299 = vmatmul.mubr.f32.gmra.mxu0 %v1989
    %v2300 = vpop.f32.mrf.mxu0
    %v2301 = vadd.f32 0.0, %v2300
    %v2302 = vpop.f32.mrf.mxu0
    %2303 = vdwg.mxu0
    %v2305 = vrot.slane %v2301, 4
    %v2307 = vadd.f32 %v127, %v2305
    %v2308 = vmul.f32 %v2307, 0.5
    %v2309 = vtanh.pop %v2308
    %v2310 = vmul.f32 %v2309, 0.5
    %v2311 = vadd.f32 %v2310, 0.5
    %v2312 = vtanh.pop %v2307
    %v2314 = vrot.slane %v1978, 6
    %v2316 = vmul.f32 %v2311, %v2314
    %2318 = vrot.lane.b32.xlu0 %v2312, 96
    %v2319 = vpop.permute.xlu0 %2318
    %v2321 = vmul.f32 %v2311, %v2319
    %2323 = vrot.lane.b32.xlu0 %v2321, 16
    %v2324 = vpop.permute.xlu0 %2323
    %v2326 = vadd.f32 %v2316, %v2324
    %v2327 = vtanh.pop %v2326
    %2329 = vrot.lane.b32.xlu0 %v2327, 32
    %v2330 = vpop.permute.xlu0 %2329
    %v2332 = vmul.f32 %v2311, %v2330
    %v2334 = vrot.slane %v2332, 4
    %2335 = vrot.lane.b32.xlu0 %v2334, 80
    %v2336 = vpop.permute.xlu0 %2335
    %v2337 = vsel %vm149, %v2336, 0
    %2339 = vmatprep.subr.mxu0 0.0
    %2340 = vmatpush1.msra.mxu0 0.0
    %2341 = vmatprep.subr.mxu0 0.0
    %2342 = vmatpush1.msra.mxu0 0.0
    %2343 = vmatprep.subr.mxu0 0.0
    %2344 = vmatpush1.msra.mxu0 0.0
    %2345 = vmatprep.subr.mxu0 0.0
    %2346 = vmatpush1.msra.mxu0 0.0
    %2347 = vmatprep.subr.mxu0 0.0
    %2348 = vmatpush1.msra.mxu0 0.0
    %2349 = vmatprep.subr.mxu0 0.0
    %2350 = vmatpush1.msra.mxu0 0.0
    %2351 = vmatprep.subr.mxu0 0.0
    %2352 = vmatpush1.msra.mxu0 0.0
    %2353 = vmatprep.subr.mxu0 0.0
    %2354 = vmatpush1.msra.mxu0 0.0
    %2355 = vmatprep.subr.mxu0 0.0
    %2356 = vmatpush1.msra.mxu0 0.0
    %2357 = vmatprep.subr.mxu0 0.0
    %2358 = vmatpush1.msra.mxu0 0.0
    %2359 = vmatprep.subr.mxu0 0.0
    %2360 = vmatpush1.msra.mxu0 0.0
    %2361 = vmatprep.subr.mxu0 0.0
    %2362 = vmatpush1.msra.mxu0 0.0
    %2363 = vmatprep.subr.mxu0 0.0
    %2364 = vmatpush1.msra.mxu0 0.0
    %2365 = vmatprep.subr.mxu0 0.0
    %2366 = vmatpush1.msra.mxu0 0.0
    %2367 = vmatprep.subr.mxu0 0.0
    %2368 = vmatpush1.msra.mxu0 %v133
    %2369 = vmatprep.subr.mxu0 0.0
    %2370 = vmatpush1.msra.mxu0 %v132
    %2371 = vmatprep.subr.mxu0 0.0
    %2372 = vmatpush2.msra.mxu0 0.0
    %2373 = vmatprep.subr.mxu0 0.0
    %2374 = vmatpush2.msra.mxu0 0.0
    %2375 = vmatprep.subr.mxu0 0.0
    %2376 = vmatpush2.msra.mxu0 0.0
    %2377 = vmatprep.subr.mxu0 0.0
    %2378 = vmatpush2.msra.mxu0 0.0
    %2379 = vmatprep.subr.mxu0 0.0
    %2380 = vmatpush2.msra.mxu0 0.0
    %2381 = vmatprep.subr.mxu0 0.0
    %2382 = vmatpush2.msra.mxu0 0.0
    %2383 = vmatprep.subr.mxu0 0.0
    %2384 = vmatpush2.msra.mxu0 0.0
    %2385 = vmatprep.subr.mxu0 0.0
    %2386 = vmatpush2.msra.mxu0 0.0
    %2387 = vmatprep.subr.mxu0 0.0
    %2388 = vmatpush2.msra.mxu0 0.0
    %2389 = vmatprep.subr.mxu0 0.0
    %2390 = vmatpush2.msra.mxu0 0.0
    %2391 = vmatprep.subr.mxu0 0.0
    %2392 = vmatpush2.msra.mxu0 0.0
    %2393 = vmatprep.subr.mxu0 0.0
    %2394 = vmatpush2.msra.mxu0 0.0
    %2395 = vmatprep.subr.mxu0 0.0
    %2396 = vmatpush2.msra.mxu0 0.0
    %2397 = vmatprep.subr.mxu0 0.0
    %2398 = vmatpush2.msra.mxu0 0.0
    %2399 = vmatprep.subr.mxu0 0.0
    %2400 = vmatpush2.msra.mxu0 0.0
    %2401 = vmatprep.subr.mxu0 0.0
    %2402 = vmatpush2.msra.mxu0 0.0
    %2403 = vmatprep.mubr.f32.mxu0 0.0
    %2404 = vmatmul.mubr.f32.gmra.mxu0 %v2337
    %v2405 = vpop.f32.mrf.mxu0
    %v2406 = vadd.f32 %v2155, %v2405
    %v2407 = vpop.f32.mrf.mxu0
    %2408 = vdwg.mxu0
    %v2409 = vmul.f32 %v2406, 0.5
    %v2410 = vtanh.pop %v2409
    %v2411 = vmul.f32 %v2410, 0.5
    %v2412 = vadd.f32 %v2411, 0.5
    %v2413 = vtanh.pop %v2406
    %v2414 = vmul.f32 %v2412, %v2076
    %2416 = vrot.lane.b32.xlu0 %v2413, 124
    %v2417 = vpop.permute.xlu0 %2416
    %v2419 = vmul.f32 %v2412, %v2417
    %2421 = vrot.lane.b32.xlu0 %v2419, 2
    %v2422 = vpop.permute.xlu0 %2421
    %v2424 = vadd.f32 %v2414, %v2422
    %v2425 = vtanh.pop %v2424
    %2427 = vrot.lane.b32.xlu0 %v2425, 4
    %v2428 = vpop.permute.xlu0 %2427
    %v2430 = vmul.f32 %v2412, %v2428
    %2432 = vrot.lane.b32.xlu0 %v2430, 122
    %v2433 = vpop.permute.xlu0 %2432
    %v2434 = vsel %vm346, %v2433, 0
    %2436 = vmatprep.subr.mxu0 0.0
    %2437 = vmatpush1.msra.mxu0 0.0
    %2438 = vmatprep.subr.mxu0 0.0
    %2439 = vmatpush1.msra.mxu0 0.0
    %2440 = vmatprep.subr.mxu0 0.0
    %2441 = vmatpush1.msra.mxu0 0.0
    %2442 = vmatprep.subr.mxu0 0.0
    %2443 = vmatpush1.msra.mxu0 0.0
    %2444 = vmatprep.subr.mxu0 0.0
    %2445 = vmatpush1.msra.mxu0 0.0
    %2446 = vmatprep.subr.mxu0 0.0
    %2447 = vmatpush1.msra.mxu0 0.0
    %2448 = vmatprep.subr.mxu0 0.0
    %2449 = vmatpush1.msra.mxu0 0.0
    %2450 = vmatprep.subr.mxu0 0.0
    %2451 = vmatpush1.msra.mxu0 0.0
    %2452 = vmatprep.subr.mxu0 0.0
    %2453 = vmatpush1.msra.mxu0 0.0
    %2454 = vmatprep.subr.mxu0 0.0
    %2455 = vmatpush1.msra.mxu0 0.0
    %2456 = vmatprep.subr.mxu0 0.0
    %2457 = vmatpush1.msra.mxu0 0.0
    %2458 = vmatprep.subr.mxu0 0.0
    %2459 = vmatpush1.msra.mxu0 0.0
    %2460 = vmatprep.subr.mxu0 0.0
    %2461 = vmatpush1.msra.mxu0 0.0
    %2462 = vmatprep.subr.mxu0 0.0
    %2463 = vmatpush1.msra.mxu0 0.0
    %2464 = vmatprep.subr.mxu0 0.0
    %2465 = vmatpush1.msra.mxu0 0.0
    %2466 = vmatprep.subr.mxu0 0.0
    %2467 = vmatpush1.msra.mxu0 %v351
    %2468 = vmatprep.subr.mxu0 0.0
    %2469 = vmatpush2.msra.mxu0 0.0
    %2470 = vmatprep.subr.mxu0 0.0
    %2471 = vmatpush2.msra.mxu0 0.0
    %2472 = vmatprep.subr.mxu0 0.0
    %2473 = vmatpush2.msra.mxu0 0.0
    %2474 = vmatprep.subr.mxu0 0.0
    %2475 = vmatpush2.msra.mxu0 0.0
    %2476 = vmatprep.subr.mxu0 0.0
    %2477 = vmatpush2.msra.mxu0 0.0
    %2478 = vmatprep.subr.mxu0 0.0
    %2479 = vmatpush2.msra.mxu0 0.0
    %2480 = vmatprep.subr.mxu0 0.0
    %2481 = vmatpush2.msra.mxu0 0.0
    %2482 = vmatprep.subr.mxu0 0.0
    %2483 = vmatpush2.msra.mxu0 0.0
    %2484 = vmatprep.subr.mxu0 0.0
    %2485 = vmatpush2.msra.mxu0 0.0
    %2486 = vmatprep.subr.mxu0 0.0
    %2487 = vmatpush2.msra.mxu0 0.0
    %2488 = vmatprep.subr.mxu0 0.0
    %2489 = vmatpush2.msra.mxu0 0.0
    %2490 = vmatprep.subr.mxu0 0.0
    %2491 = vmatpush2.msra.mxu0 0.0
    %2492 = vmatprep.subr.mxu0 0.0
    %2493 = vmatpush2.msra.mxu0 0.0
    %2494 = vmatprep.subr.mxu0 0.0
    %2495 = vmatpush2.msra.mxu0 0.0
    %2496 = vmatprep.subr.mxu0 0.0
    %2497 = vmatpush2.msra.mxu0 0.0
    %2498 = vmatprep.subr.mxu0 0.0
    %2499 = vmatpush2.msra.mxu0 0.0
    %2500 = vmatprep.mubr.f32.mxu0 0.0
    %2501 = vmatmul.mubr.f32.gmra.mxu0 %v2434
    %v2502 = vpop.f32.mrf.mxu0
    %v2503 = vadd.f32 %v140, %v2502
    %v2504 = vpop.f32.mrf.mxu0
    %2505 = vdwg.mxu0
    %s2506 = scalar_lea.vmem %s7, 12
    %v2507 = vld [vmem:[%s2506] sm:$0x3]
    %v2509 = vsel %vm349, %v2507, 0
    %2511 = vmatprep.subr.mxu0 0.0
    %2512 = vmatpush1.msra.mxu0 0.0
    %2513 = vmatprep.subr.mxu0 0.0
    %2514 = vmatpush1.msra.mxu0 0.0
    %2515 = vmatprep.subr.mxu0 0.0
    %2516 = vmatpush1.msra.mxu0 0.0
    %2517 = vmatprep.subr.mxu0 0.0
    %2518 = vmatpush1.msra.mxu0 0.0
    %2519 = vmatprep.subr.mxu0 0.0
    %2520 = vmatpush1.msra.mxu0 0.0
    %2521 = vmatprep.subr.mxu0 0.0
    %2522 = vmatpush1.msra.mxu0 0.0
    %2523 = vmatprep.subr.mxu0 0.0
    %2524 = vmatpush1.msra.mxu0 0.0
    %2525 = vmatprep.subr.mxu0 0.0
    %2526 = vmatpush1.msra.mxu0 0.0
    %2527 = vmatprep.subr.mxu0 0.0
    %2528 = vmatpush1.msra.mxu0 0.0
    %2529 = vmatprep.subr.mxu0 0.0
    %2530 = vmatpush1.msra.mxu0 0.0
    %2531 = vmatprep.subr.mxu0 0.0
    %2532 = vmatpush1.msra.mxu0 0.0
    %2533 = vmatprep.subr.mxu0 0.0
    %2534 = vmatpush1.msra.mxu0 0.0
    %2535 = vmatprep.subr.mxu0 0.0
    %2536 = vmatpush1.msra.mxu0 0.0
    %2537 = vmatprep.subr.mxu0 0.0
    %2538 = vmatpush1.msra.mxu0 0.0
    %2539 = vmatprep.subr.mxu0 0.0
    %2540 = vmatpush1.msra.mxu0 0.0
    %2541 = vmatprep.subr.mxu0 0.0
    %2542 = vmatpush1.msra.mxu0 %v2509
    %2543 = vmatprep.subr.mxu0 0.0
    %2544 = vmatpush2.msra.mxu0 0.0
    %2545 = vmatprep.subr.mxu0 0.0
    %2546 = vmatpush2.msra.mxu0 0.0
    %2547 = vmatprep.subr.mxu0 0.0
    %2548 = vmatpush2.msra.mxu0 0.0
    %2549 = vmatprep.subr.mxu0 0.0
    %2550 = vmatpush2.msra.mxu0 0.0
    %2551 = vmatprep.subr.mxu0 0.0
    %2552 = vmatpush2.msra.mxu0 0.0
    %2553 = vmatprep.subr.mxu0 0.0
    %2554 = vmatpush2.msra.mxu0 0.0
    %2555 = vmatprep.subr.mxu0 0.0
    %2556 = vmatpush2.msra.mxu0 0.0
    %2557 = vmatprep.subr.mxu0 0.0
    %2558 = vmatpush2.msra.mxu0 0.0
    %2559 = vmatprep.subr.mxu0 0.0
    %2560 = vmatpush2.msra.mxu0 0.0
    %2561 = vmatprep.subr.mxu0 0.0
    %2562 = vmatpush2.msra.mxu0 0.0
    %2563 = vmatprep.subr.mxu0 0.0
    %2564 = vmatpush2.msra.mxu0 0.0
    %2565 = vmatprep.subr.mxu0 0.0
    %2566 = vmatpush2.msra.mxu0 0.0
    %2567 = vmatprep.subr.mxu0 0.0
    %2568 = vmatpush2.msra.mxu0 0.0
    %2569 = vmatprep.subr.mxu0 0.0
    %2570 = vmatpush2.msra.mxu0 0.0
    %2571 = vmatprep.subr.mxu0 0.0
    %2572 = vmatpush2.msra.mxu0 0.0
    %2573 = vmatprep.subr.mxu0 0.0
    %2574 = vmatpush2.msra.mxu0 0.0
    %2575 = vmatprep.mubr.f32.mxu0 0.0
    %2576 = vmatmul.mubr.f32.gmra.mxu0 %v2434
    %v2577 = vpop.f32.mrf.mxu0
    %v2578 = vadd.f32 0.0, %v2577
    %v2579 = vpop.f32.mrf.mxu0
    %2580 = vdwg.mxu0
    %v2581 = vadd.f32 %v2233, %v2578
    %2582 = vmatprep.subr.mxu0 0.0
    %2583 = vmatpush1.msra.mxu0 0.0
    %2584 = vmatprep.subr.mxu0 0.0
    %2585 = vmatpush1.msra.mxu0 0.0
    %2586 = vmatprep.subr.mxu0 0.0
    %2587 = vmatpush1.msra.mxu0 0.0
    %2588 = vmatprep.subr.mxu0 0.0
    %2589 = vmatpush1.msra.mxu0 0.0
    %2590 = vmatprep.subr.mxu0 0.0
    %2591 = vmatpush1.msra.mxu0 0.0
    %2592 = vmatprep.subr.mxu0 0.0
    %2593 = vmatpush1.msra.mxu0 0.0
    %2594 = vmatprep.subr.mxu0 0.0
    %2595 = vmatpush1.msra.mxu0 0.0
    %2596 = vmatprep.subr.mxu0 0.0
    %2597 = vmatpush1.msra.mxu0 0.0
    %2598 = vmatprep.subr.mxu0 0.0
    %2599 = vmatpush1.msra.mxu0 0.0
    %2600 = vmatprep.subr.mxu0 0.0
    %2601 = vmatpush1.msra.mxu0 0.0
    %2602 = vmatprep.subr.mxu0 0.0
    %2603 = vmatpush1.msra.mxu0 0.0
    %2604 = vmatprep.subr.mxu0 0.0
    %2605 = vmatpush1.msra.mxu0 0.0
    %2606 = vmatprep.subr.mxu0 0.0
    %2607 = vmatpush1.msra.mxu0 0.0
    %2608 = vmatprep.subr.mxu0 0.0
    %2609 = vmatpush1.msra.mxu0 0.0
    %2610 = vmatprep.subr.mxu0 0.0
    %2611 = vmatpush1.msra.mxu0 %v131
    %2612 = vmatprep.subr.mxu0 0.0
    %2613 = vmatpush1.msra.mxu0 %v130
    %2614 = vmatprep.subr.mxu0 0.0
    %2615 = vmatpush2.msra.mxu0 0.0
    %2616 = vmatprep.subr.mxu0 0.0
    %2617 = vmatpush2.msra.mxu0 0.0
    %2618 = vmatprep.subr.mxu0 0.0
    %2619 = vmatpush2.msra.mxu0 0.0
    %2620 = vmatprep.subr.mxu0 0.0
    %2621 = vmatpush2.msra.mxu0 0.0
    %2622 = vmatprep.subr.mxu0 0.0
    %2623 = vmatpush2.msra.mxu0 0.0
    %2624 = vmatprep.subr.mxu0 0.0
    %2625 = vmatpush2.msra.mxu0 0.0
    %2626 = vmatprep.subr.mxu0 0.0
    %2627 = vmatpush2.msra.mxu0 0.0
    %2628 = vmatprep.subr.mxu0 0.0
    %2629 = vmatpush2.msra.mxu0 0.0
    %2630 = vmatprep.subr.mxu0 0.0
    %2631 = vmatpush2.msra.mxu0 0.0
    %2632 = vmatprep.subr.mxu0 0.0
    %2633 = vmatpush2.msra.mxu0 0.0
    %2634 = vmatprep.subr.mxu0 0.0
    %2635 = vmatpush2.msra.mxu0 0.0
    %2636 = vmatprep.subr.mxu0 0.0
    %2637 = vmatpush2.msra.mxu0 0.0
    %2638 = vmatprep.subr.mxu0 0.0
    %2639 = vmatpush2.msra.mxu0 0.0
    %2640 = vmatprep.subr.mxu0 0.0
    %2641 = vmatpush2.msra.mxu0 0.0
    %2642 = vmatprep.subr.mxu0 0.0
    %2643 = vmatpush2.msra.mxu0 0.0
    %2644 = vmatprep.subr.mxu0 0.0
    %2645 = vmatpush2.msra.mxu0 0.0
    %2646 = vmatprep.mubr.f32.mxu0 0.0
    %2647 = vmatmul.mubr.f32.gmra.mxu0 %v2337
    %v2648 = vpop.f32.mrf.mxu0
    %v2649 = vadd.f32 0.0, %v2648
    %v2650 = vpop.f32.mrf.mxu0
    %2651 = vdwg.mxu0
    %v2653 = vrot.slane %v2649, 2
    %v2655 = vadd.f32 %v127, %v2653
    %v2656 = vmul.f32 %v2655, 0.5
    %v2657 = vtanh.pop %v2656
    %v2658 = vmul.f32 %v2657, 0.5
    %v2659 = vadd.f32 %v2658, 0.5
    %v2660 = vtanh.pop %v2655
    %v2662 = vrot.slane %v2326, 6
    %v2664 = vmul.f32 %v2659, %v2662
    %2666 = vrot.lane.b32.xlu0 %v2660, 96
    %v2667 = vpop.permute.xlu0 %2666
    %v2669 = vmul.f32 %v2659, %v2667
    %2671 = vrot.lane.b32.xlu0 %v2669, 16
    %v2672 = vpop.permute.xlu0 %2671
    %v2674 = vadd.f32 %v2664, %v2672
    %v2675 = vtanh.pop %v2674
    %2677 = vrot.lane.b32.xlu0 %v2675, 32
    %v2678 = vpop.permute.xlu0 %2677
    %v2680 = vmul.f32 %v2659, %v2678
    %v2682 = vrot.slane %v2680, 6
    %2683 = vrot.lane.b32.xlu0 %v2682, 80
    %v2684 = vpop.permute.xlu0 %2683
    %v2685 = vsel %vm149, %v2684, 0
    %2687 = vmatprep.subr.mxu0 0.0
    %2688 = vmatpush1.msra.mxu0 0.0
    %2689 = vmatprep.subr.mxu0 0.0
    %2690 = vmatpush1.msra.mxu0 0.0
    %2691 = vmatprep.subr.mxu0 0.0
    %2692 = vmatpush1.msra.mxu0 0.0
    %2693 = vmatprep.subr.mxu0 0.0
    %2694 = vmatpush1.msra.mxu0 0.0
    %2695 = vmatprep.subr.mxu0 0.0
    %2696 = vmatpush1.msra.mxu0 0.0
    %2697 = vmatprep.subr.mxu0 0.0
    %2698 = vmatpush1.msra.mxu0 0.0
    %2699 = vmatprep.subr.mxu0 0.0
    %2700 = vmatpush1.msra.mxu0 0.0
    %2701 = vmatprep.subr.mxu0 0.0
    %2702 = vmatpush1.msra.mxu0 0.0
    %2703 = vmatprep.subr.mxu0 0.0
    %2704 = vmatpush1.msra.mxu0 0.0
    %2705 = vmatprep.subr.mxu0 0.0
    %2706 = vmatpush1.msra.mxu0 0.0
    %2707 = vmatprep.subr.mxu0 0.0
    %2708 = vmatpush1.msra.mxu0 0.0
    %2709 = vmatprep.subr.mxu0 0.0
    %2710 = vmatpush1.msra.mxu0 0.0
    %2711 = vmatprep.subr.mxu0 0.0
    %2712 = vmatpush1.msra.mxu0 0.0
    %2713 = vmatprep.subr.mxu0 0.0
    %2714 = vmatpush1.msra.mxu0 0.0
    %2715 = vmatprep.subr.mxu0 0.0
    %2716 = vmatpush1.msra.mxu0 %v133
    %2717 = vmatprep.subr.mxu0 0.0
    %2718 = vmatpush1.msra.mxu0 %v132
    %2719 = vmatprep.subr.mxu0 0.0
    %2720 = vmatpush2.msra.mxu0 0.0
    %2721 = vmatprep.subr.mxu0 0.0
    %2722 = vmatpush2.msra.mxu0 0.0
    %2723 = vmatprep.subr.mxu0 0.0
    %2724 = vmatpush2.msra.mxu0 0.0
    %2725 = vmatprep.subr.mxu0 0.0
    %2726 = vmatpush2.msra.mxu0 0.0
    %2727 = vmatprep.subr.mxu0 0.0
    %2728 = vmatpush2.msra.mxu0 0.0
    %2729 = vmatprep.subr.mxu0 0.0
    %2730 = vmatpush2.msra.mxu0 0.0
    %2731 = vmatprep.subr.mxu0 0.0
    %2732 = vmatpush2.msra.mxu0 0.0
    %2733 = vmatprep.subr.mxu0 0.0
    %2734 = vmatpush2.msra.mxu0 0.0
    %2735 = vmatprep.subr.mxu0 0.0
    %2736 = vmatpush2.msra.mxu0 0.0
    %2737 = vmatprep.subr.mxu0 0.0
    %2738 = vmatpush2.msra.mxu0 0.0
    %2739 = vmatprep.subr.mxu0 0.0
    %2740 = vmatpush2.msra.mxu0 0.0
    %2741 = vmatprep.subr.mxu0 0.0
    %2742 = vmatpush2.msra.mxu0 0.0
    %2743 = vmatprep.subr.mxu0 0.0
    %2744 = vmatpush2.msra.mxu0 0.0
    %2745 = vmatprep.subr.mxu0 0.0
    %2746 = vmatpush2.msra.mxu0 0.0
    %2747 = vmatprep.subr.mxu0 0.0
    %2748 = vmatpush2.msra.mxu0 0.0
    %2749 = vmatprep.subr.mxu0 0.0
    %2750 = vmatpush2.msra.mxu0 0.0
    %2751 = vmatprep.mubr.f32.mxu0 0.0
    %2752 = vmatmul.mubr.f32.gmra.mxu0 %v2685
    %v2753 = vpop.f32.mrf.mxu0
    %v2754 = vadd.f32 %v2503, %v2753
    %v2755 = vpop.f32.mrf.mxu0
    %2756 = vdwg.mxu0
    %v2757 = vmul.f32 %v2754, 0.5
    %v2758 = vtanh.pop %v2757
    %v2759 = vmul.f32 %v2758, 0.5
    %v2760 = vadd.f32 %v2759, 0.5
    %v2761 = vtanh.pop %v2754
    %v2762 = vmul.f32 %v2760, %v2424
    %2764 = vrot.lane.b32.xlu0 %v2761, 124
    %v2765 = vpop.permute.xlu0 %2764
    %v2767 = vmul.f32 %v2760, %v2765
    %2769 = vrot.lane.b32.xlu0 %v2767, 2
    %v2770 = vpop.permute.xlu0 %2769
    %v2772 = vadd.f32 %v2762, %v2770
    %v2773 = vtanh.pop %v2772
    %2775 = vrot.lane.b32.xlu0 %v2773, 4
    %v2776 = vpop.permute.xlu0 %2775
    %v2778 = vmul.f32 %v2760, %v2776
    %s2779 = scalar_lea.vmem %s7, 14
    %v2780 = vld [vmem:[%s2779] sm:$0x3]
    %2782 = vrot.lane.b32.xlu0 %v2778, 122
    %v2783 = vpop.permute.xlu0 %2782
    %v2784 = vsel %vm346, %v2783, 0
    %v2787 = vsel %vm349, %v2780, 0
    %2789 = vmatprep.subr.mxu0 0.0
    %2790 = vmatpush1.msra.mxu0 0.0
    %2791 = vmatprep.subr.mxu0 0.0
    %2792 = vmatpush1.msra.mxu0 0.0
    %2793 = vmatprep.subr.mxu0 0.0
    %2794 = vmatpush1.msra.mxu0 0.0
    %2795 = vmatprep.subr.mxu0 0.0
    %2796 = vmatpush1.msra.mxu0 0.0
    %2797 = vmatprep.subr.mxu0 0.0
    %2798 = vmatpush1.msra.mxu0 0.0
    %2799 = vmatprep.subr.mxu0 0.0
    %2800 = vmatpush1.msra.mxu0 0.0
    %2801 = vmatprep.subr.mxu0 0.0
    %2802 = vmatpush1.msra.mxu0 0.0
    %2803 = vmatprep.subr.mxu0 0.0
    %2804 = vmatpush1.msra.mxu0 0.0
    %2805 = vmatprep.subr.mxu0 0.0
    %2806 = vmatpush1.msra.mxu0 0.0
    %2807 = vmatprep.subr.mxu0 0.0
    %2808 = vmatpush1.msra.mxu0 0.0
    %2809 = vmatprep.subr.mxu0 0.0
    %2810 = vmatpush1.msra.mxu0 0.0
    %2811 = vmatprep.subr.mxu0 0.0
    %2812 = vmatpush1.msra.mxu0 0.0
    %2813 = vmatprep.subr.mxu0 0.0
    %2814 = vmatpush1.msra.mxu0 0.0
    %2815 = vmatprep.subr.mxu0 0.0
    %2816 = vmatpush1.msra.mxu0 0.0
    %2817 = vmatprep.subr.mxu0 0.0
    %2818 = vmatpush1.msra.mxu0 0.0
    %2819 = vmatprep.subr.mxu0 0.0
    %2820 = vmatpush1.msra.mxu0 %v2787
    %2821 = vmatprep.subr.mxu0 0.0
    %2822 = vmatpush2.msra.mxu0 0.0
    %2823 = vmatprep.subr.mxu0 0.0
    %2824 = vmatpush2.msra.mxu0 0.0
    %2825 = vmatprep.subr.mxu0 0.0
    %2826 = vmatpush2.msra.mxu0 0.0
    %2827 = vmatprep.subr.mxu0 0.0
    %2828 = vmatpush2.msra.mxu0 0.0
    %2829 = vmatprep.subr.mxu0 0.0
    %2830 = vmatpush2.msra.mxu0 0.0
    %2831 = vmatprep.subr.mxu0 0.0
    %2832 = vmatpush2.msra.mxu0 0.0
    %2833 = vmatprep.subr.mxu0 0.0
    %2834 = vmatpush2.msra.mxu0 0.0
    %2835 = vmatprep.subr.mxu0 0.0
    %2836 = vmatpush2.msra.mxu0 0.0
    %2837 = vmatprep.subr.mxu0 0.0
    %2838 = vmatpush2.msra.mxu0 0.0
    %2839 = vmatprep.subr.mxu0 0.0
    %2840 = vmatpush2.msra.mxu0 0.0
    %2841 = vmatprep.subr.mxu0 0.0
    %2842 = vmatpush2.msra.mxu0 0.0
    %2843 = vmatprep.subr.mxu0 0.0
    %2844 = vmatpush2.msra.mxu0 0.0
    %2845 = vmatprep.subr.mxu0 0.0
    %2846 = vmatpush2.msra.mxu0 0.0
    %2847 = vmatprep.subr.mxu0 0.0
    %2848 = vmatpush2.msra.mxu0 0.0
    %2849 = vmatprep.subr.mxu0 0.0
    %2850 = vmatpush2.msra.mxu0 0.0
    %2851 = vmatprep.subr.mxu0 0.0
    %2852 = vmatpush2.msra.mxu0 0.0
    %2853 = vmatprep.mubr.f32.mxu0 0.0
    %2854 = vmatmul.mubr.f32.gmra.mxu0 %v2784
    %v2855 = vpop.f32.mrf.mxu0
    %v2856 = vadd.f32 0.0, %v2855
    %v2857 = vpop.f32.mrf.mxu0
    %2858 = vdwg.mxu0
    %v2859 = vadd.f32 %v2581, %v2856
    %v2860 = vmul.f32 %v2859, 0.5
    %v2861 = vtanh.pop %v2860
    %v2862 = vmul.f32 %v2861, 0.5
    %v2863 = vadd.f32 %v2862, 0.5
    %vm2864 = vcmask 9216
    %2865 = vst.msk [vmem:[#allocation2] sm:$0x3] %vm2864, %v2863
    // Predicated region
    $region38: #{lstm_forward.1} parent=1 // pred_check
      _
    $region39: #{lstm_forward.1} parent=1 // pred_check_branch
      %2867 = sbr.rel (0) target = $region41
    $region40: #{lstm_forward.1} parent=1 // pred_region
      %s2869 = ssub.s32 32, 32
      %2870 = vsyncadd [#allocation3], %s2869
      %s2872 = sshll.u32 [#allocation2], 4
      %s2873 = int_to_ptr.vmem [resolvable:$true] %s2872
      %2875 = dma.vmem_to_hbm [thread:$0]  %s2873, 32, %s9, [#allocation3]
    $region41: #{lstm_forward.1} parent=1 // pred_fallthru
      _
    // Predicated region
    $region42: #{lstm_forward.1} parent=1 // pred_check
      _
    $region43: #{lstm_forward.1} parent=1 // pred_check_branch
      %2877 = sbr.rel (0) target = $region45
    $region44: #{lstm_forward.1} parent=1 // pred_region
      %2878 = dma.done [#allocation3], 32
    $region45: #{lstm_forward.1} parent=1 // pred_fallthru
      _
    %2879 = vsyncpa [#allocation3], 1

</llo_original>
